<compile_context>
chip_gen: v6e
topology: v6e:2x2x1
jax: 0.10.0
libtpu: 0.0.40
codegen_flags: <defaults>
</compile_context>

<pallas_src>
import functools
import math

import jax
import jax.numpy as jnp
from jax.experimental import pallas as pl
from jax.experimental.pallas import tpu as pltpu


# ---------------------------------------------------------------------------
# Constant "time-structure" matrix (constant-folded under jit).
# ---------------------------------------------------------------------------

def _moving_avg_matrix(n, kernel_size, dtype):
    """W (n, n) s.t. W @ x == AvgPool1d(kernel_size, stride=1) of x replicate-
    padded by (kernel_size-1)//2 on both ends (Autoformer SeriesDecomp trend)."""
    pad = (kernel_size - 1) // 2
    t = jnp.arange(n, dtype=jnp.float32)[:, None]
    s = jnp.arange(n, dtype=jnp.float32)[None, :]
    base = (jnp.abs(t - s) <= pad).astype(jnp.float32)
    lo = (s == 0).astype(jnp.float32) * jnp.maximum(pad - t, 0.0)
    hi = (s == n - 1).astype(jnp.float32) * jnp.maximum(t + pad - (n - 1), 0.0)
    return ((base + lo + hi) / float(kernel_size)).astype(dtype)


# ---------------------------------------------------------------------------
# Fused DecoderLayer kernel (one grid step per batch element).
# ---------------------------------------------------------------------------

def _decoder_layer_kernel(x_ref, cross_ref, prep_ref, wdec_ref,
                          w_emb_ref, w_qkv_ref, w_o_s_ref,
                          w_q_c_ref, w_kv_c_ref, w_o_c_ref,
                          w_ff1_ref, w_ff2_ref, w_proj_ref,
                          x_out_ref, trend_out_ref, *, scale):
    f32 = jnp.float32
    cdt = w_emb_ref.dtype                    # bf16 MXU operand dtype
    H = w_o_s_ref.shape[0]
    L = wdec_ref.shape[0]

    def mm(a, b):                            # weight matmul: bf16 operands, f32 acc
        return jnp.dot(a.astype(cdt), b.astype(cdt), preferred_element_type=f32)

    def mm32(a, b):                          # structure-matrix matmul kept fully f32
        return jnp.dot(a, b, preferred_element_type=f32)

    def attend(q, k, v):                     # scaled dot-product attn, f32 softmax
        s = jax.lax.dot_general(q.astype(cdt), k.astype(cdt),
                                (((1,), (1,)), ((), ())),   # contract feature axis
                                preferred_element_type=f32)
        p = jnp.exp(s - jnp.max(s, axis=-1, keepdims=True))
        inv = pl.reciprocal(jnp.sum(p, axis=-1, keepdims=True), approx=True)
        return mm(p * inv, v)

    x = x_ref[0].astype(f32)                 # (T, c_in)
    cross = cross_ref[0].astype(f32)         # (S, H)

    # decomp0 + zeros/mean extension + linear token embedding, folded into
    # constant matrices:
    #   prep[0] = [[I - W_ma(T)], [0]]  (L, T)
    #   prep[1] = [[W_ma(T)], [1/T]]    (L, T)
    emb = mm(x, w_emb_ref[...])              # (T, H)
    dec = mm32(prep_ref[0], emb)             # (L, H)  seasonal path, zero-extended
    trend_init = mm32(prep_ref[1], x[:, 0:1])  # (L, 1)  channel 0 only (as in spec)

    # ---- self attention: one wide QKV matmul, scale folded into q ----
    qkv = mm(dec, w_qkv_ref[...])            # (L, 3H)
    q = qkv[:, :H] * scale
    k = qkv[:, H:2 * H]
    v = qkv[:, 2 * H:]
    dec = dec + mm(attend(q, k, v), w_o_s_ref[...])

    wdec = wdec_ref[...]                     # (L, L) moving-average matrix
    trend1 = mm32(wdec, dec)                 # decomp1
    x1 = dec - trend1
    rt = trend1                              # residual trend, accumulated in place

    # ---- cross attention: one wide KV matmul ----
    qc = mm(x1, w_q_c_ref[...]) * scale
    kv = mm(cross, w_kv_c_ref[...])          # (S, 2H)
    x2 = x1 + mm(attend(qc, kv[:, :H], kv[:, H:]), w_o_c_ref[...])

    trend2 = mm32(wdec, x2)                  # decomp2
    x2s = x2 - trend2
    rt = rt + trend2

    # ---- feed-forward (1x1 convs) with fused ReLU + residual ----
    y = mm(jnp.maximum(mm(x2s, w_ff1_ref[...]), 0.0), w_ff2_ref[...])
    z = x2s + y

    trend3 = mm32(wdec, z)                   # decomp3
    x3 = z - trend3
    rt = rt + trend3

    # ---- circular kernel-size-3 projection of the residual trend ----
    # +/-1 circular shifts as XLU sublane rolls (slot idle while MXU is busy);
    # the 3 taps fused into one (L, 3H) @ (3H, h_pad) matmul.
    rt_m1 = pltpu.roll(rt, shift=1, axis=0)      # rt[t-1]
    rt_p1 = pltpu.roll(rt, shift=L - 1, axis=0)  # rt[t+1]
    taps = jnp.concatenate([rt_m1, rt, rt_p1], axis=-1)   # (L, 3H)
    proj = mm(taps, w_proj_ref[...])             # (L, h_pad)  lane-dense slab

    x_out_ref[0] = x3.astype(x_out_ref.dtype)
    trend_out_ref[0] = (proj + trend_init).astype(trend_out_ref.dtype)


# ---------------------------------------------------------------------------
# Wrapper
# ---------------------------------------------------------------------------

def _const_spec(shape, resident):
    """Spec for a grid-invariant operand.

    resident=True: whole array lives in VMEM for the kernel duration
    (single-buffered -> half the VMEM of default double-buffering; matters on
    v7x's 64 MiB).  resident=False: standard pipelined full-shape block."""
    if resident:
        return pl.BlockSpec(memory_space=pltpu.MemorySpace.VMEM)
    zeros = (0,) * len(shape)
    return pl.BlockSpec(shape, lambda b, _z=zeros: _z)


@functools.partial(jax.jit,
                   static_argnames=("c_out", "moving_avg", "resident_consts"))
def decoder_layer_forward(params, x, cross, edge_index, *, c_out, moving_avg=25,
                          resident_consts=True):
    """x: (B, T, c_in), cross: (B, S, hidden).
    Returns x_out: (B, T+c_out, hidden), trend_out: (B, T+c_out, h)."""
    del edge_index  # TODO(synk): graph-based decomposition/embedding undefined in source.
    B, T, c_in = x.shape
    S = cross.shape[1]
    H = params["w_emb"].shape[1]
    F = params["w_ff1"].shape[1]
    h = params["w_proj"].shape[1]
    L = T + c_out
    h_pad = ((h + 127) // 128) * 128          # lane-dense trend output slab
    f32 = jnp.float32

    # Constant time-structure matrices (kept in f32 for averaging precision).
    w0 = _moving_avg_matrix(T, moving_avg, f32)
    w_si = jnp.concatenate([jnp.eye(T, dtype=f32) - w0,
                            jnp.zeros((c_out, T), f32)], axis=0)              # (L, T)
    w_ti = jnp.concatenate([w0, jnp.full((c_out, T), 1.0 / T, f32)], axis=0)  # (L, T)
    prep = jnp.stack([w_si, w_ti], axis=0)                                    # (2, L, T)
    wdec = _moving_avg_matrix(L, moving_avg, f32)                             # (L, L)
    # TODO(synk): for production L, replace the dense (L,L) matrix with a banded
    #             25-tap contraction (shifted partial sums).

    # Lane-pad the fused circular-conv taps so the trend store is unmasked.
    w_proj = jnp.pad(params["w_proj"], ((0, 0), (0, h_pad - h)))              # (3H, h_pad)

    kernel = functools.partial(_decoder_layer_kernel, scale=1.0 / math.sqrt(H))
    batch3 = lambda b: (b, 0, 0)
    c = lambda shape: _const_spec(shape, resident_consts)

    x_out, trend_pad = pl.pallas_call(
        kernel,
        out_shape=(jax.ShapeDtypeStruct((B, L, H), x.dtype),
                   jax.ShapeDtypeStruct((B, L, h_pad), x.dtype)),
        grid=(B,),
        in_specs=[
            pl.BlockSpec((1, T, c_in), batch3),    # x
            pl.BlockSpec((1, S, H), batch3),       # cross
            c((2, L, T)),                          # prep matrices (f32)
            c((L, L)),                             # moving-average matrix (f32)
            c((c_in, H)),                          # w_emb            (bf16)
            c((H, 3 * H)),                         # fused self QKV   (bf16)
            c((H, H)),                             # w_o_s            (bf16)
            c((H, H)),                             # w_q_c            (bf16)
            c((H, 2 * H)),                         # fused cross KV   (bf16)
            c((H, H)),                             # w_o_c            (bf16)
            c((H, F)),                             # conv1 (1x1)      (bf16)
            c((F, H)),                             # conv2 (1x1)      (bf16)
            c((3 * H, h_pad)),                     # fused circular-conv taps (bf16)
        ],
        out_specs=(pl.BlockSpec((1, L, H), batch3),
                   pl.BlockSpec((1, L, h_pad), batch3)),
        compiler_params=pltpu.CompilerParams(
            dimension_semantics=("parallel",),       # shards batch on v7x's 2 TCs
            vmem_limit_bytes=32 * 1024 * 1024),
    )(x, cross, prep, wdec, params["w_emb"], params["w_qkv_s"], params["wo_s"],
      params["wq_c"], params["w_kv_c"], params["wo_c"], params["w_ff1"],
      params["w_ff2"], w_proj)
    # TODO(synk): production tiling should add grid axes over L and a K-loop for
    #             the FFN/decomp contractions ("arbitrary"), keeping batch "parallel".
    return x_out, trend_pad[:, :, :h]


# ---------------------------------------------------------------------------
# Deterministic parameter init (bf16 weights, pre-fused/stacked once) + demo
# ---------------------------------------------------------------------------

def init_params(key, c_in, hidden, conv_hidden, h):
    ks = jax.random.split(key, 12)
    f = lambda k, s: (jax.random.normal(k, s, jnp.float32) * 0.1).astype(jnp.bfloat16)
    wq_s, wk_s, wv_s = f(ks[1], (hidden, hidden)), f(ks[2], (hidden, hidden)), f(ks[3], (hidden, hidden))
    wk_c, wv_c = f(ks[6], (hidden, hidden)), f(ks[7], (hidden, hidden))
    w_proj_torch = f(ks[11], (h, hidden, 3))            # PyTorch Conv1d layout (out, in, k)
    # Fused circular-conv taps: rows [tap(rt[t-1]); tap(rt[t]); tap(rt[t+1])].
    w_proj = jnp.transpose(w_proj_torch, (2, 1, 0)).reshape(3 * hidden, h)
    return {
        "w_emb":   f(ks[0], (c_in, hidden)),
        "w_qkv_s": jnp.concatenate([wq_s, wk_s, wv_s], axis=1),   # (H, 3H)
        "wo_s":    f(ks[4], (hidden, hidden)),
        "wq_c":    f(ks[5], (hidden, hidden)),
        "w_kv_c":  jnp.concatenate([wk_c, wv_c], axis=1),         # (H, 2H)
        "wo_c":    f(ks[8], (hidden, hidden)),
        "w_ff1":   f(ks[9], (hidden, conv_hidden)),
        "w_ff2":   f(ks[10], (conv_hidden, hidden)),
        "w_proj":  w_proj,                                        # (3H, h)
    }


if __name__ == "__main__":
    B, T, c_in = 2, 12, 4          # x: (batch, time, features)
    c_out = 4                      # appended prediction steps ("self.out"); L = 16
    hidden = 128                   # lane-dense H (multiple of 128)
    conv_hidden = 4 * hidden
    h = 4                          # projection output channels
    S = 8                          # cross (encoder) sequence length
    moving_avg = 25

    key = jax.random.PRNGKey(0)
    kp, kx, kc = jax.random.split(key, 3)
    params = init_params(kp, c_in, hidden, conv_hidden, h)

    x = jax.random.normal(kx, (B, T, c_in), jnp.float32)
    cross = jax.random.normal(kc, (B, S, hidden), jnp.float32)
    edge_index = jnp.zeros((B, 2, 4), jnp.int32)   # accepted but unused (see TODO)

    try:
        out = decoder_layer_forward(params, x, cross, edge_index,
                                    c_out=c_out, moving_avg=moving_avg,
                                    resident_consts=True)
        jax.block_until_ready(out)
    except Exception:
        # Fallback: standard pipelined (double-buffered) constant blocks.
        out = decoder_layer_forward(params, x, cross, edge_index,
                                    c_out=c_out, moving_avg=moving_avg,
                                    resident_consts=False)
        jax.block_until_ready(out)
    x_out, trend_out = out

    assert x_out.shape == (B, T + c_out, hidden)
    assert trend_out.shape == (B, T + c_out, h)
    print("KERNEL_OK")
</pallas_src>

<mosaic_0001>
module attributes {stable_mosaic.version = 11 : i64} {
  func.func @_decoder_layer_kernel(%arg0: i32, %arg1: memref<1x12x4xf32, #tpu.memory_space<vmem>>, %arg2: memref<1x8x128xf32, #tpu.memory_space<vmem>>, %arg3: memref<2x16x12xf32, #tpu.memory_space<vmem>>, %arg4: memref<16x16xf32, #tpu.memory_space<vmem>>, %arg5: memref<4x128xbf16, #tpu.memory_space<vmem>>, %arg6: memref<128x384xbf16, #tpu.memory_space<vmem>>, %arg7: memref<128x128xbf16, #tpu.memory_space<vmem>>, %arg8: memref<128x128xbf16, #tpu.memory_space<vmem>>, %arg9: memref<128x256xbf16, #tpu.memory_space<vmem>>, %arg10: memref<128x128xbf16, #tpu.memory_space<vmem>>, %arg11: memref<128x512xbf16, #tpu.memory_space<vmem>>, %arg12: memref<512x128xbf16, #tpu.memory_space<vmem>>, %arg13: memref<384x128xbf16, #tpu.memory_space<vmem>>, %arg14: memref<1x16x128xf32, #tpu.memory_space<vmem>>, %arg15: memref<1x16x128xf32, #tpu.memory_space<vmem>>) attributes {dimension_semantics = [#tpu.dimension_semantics<parallel>], iteration_bounds = array<i64: 2>, scalar_prefetch = 0 : i64, scratch_operands = 0 : i64, tpu.core_type = #tpu.core_type<tc>, window_params = [{transform_indices = @transform_0, window_bounds = array<i64: 1, 12, 4>}, {transform_indices = @transform_1, window_bounds = array<i64: 1, 8, 128>}, {pipeline_mode = #tpu.pipeline_mode<synchronous>, transform_indices = @transform_2, window_bounds = array<i64: 2, 16, 12>}, {pipeline_mode = #tpu.pipeline_mode<synchronous>, transform_indices = @transform_3, window_bounds = array<i64: 16, 16>}, {pipeline_mode = #tpu.pipeline_mode<synchronous>, transform_indices = @transform_4, window_bounds = array<i64: 4, 128>}, {pipeline_mode = #tpu.pipeline_mode<synchronous>, transform_indices = @transform_5, window_bounds = array<i64: 128, 384>}, {pipeline_mode = #tpu.pipeline_mode<synchronous>, transform_indices = @transform_6, window_bounds = array<i64: 128, 128>}, {pipeline_mode = #tpu.pipeline_mode<synchronous>, transform_indices = @transform_7, window_bounds = array<i64: 128, 128>}, {pipeline_mode = #tpu.pipeline_mode<synchronous>, transform_indices = @transform_8, window_bounds = array<i64: 128, 256>}, {pipeline_mode = #tpu.pipeline_mode<synchronous>, transform_indices = @transform_9, window_bounds = array<i64: 128, 128>}, {pipeline_mode = #tpu.pipeline_mode<synchronous>, transform_indices = @transform_10, window_bounds = array<i64: 128, 512>}, {pipeline_mode = #tpu.pipeline_mode<synchronous>, transform_indices = @transform_11, window_bounds = array<i64: 512, 128>}, {pipeline_mode = #tpu.pipeline_mode<synchronous>, transform_indices = @transform_12, window_bounds = array<i64: 384, 128>}, {transform_indices = @transform_13, window_bounds = array<i64: 1, 16, 128>}, {transform_indices = @transform_14, window_bounds = array<i64: 1, 16, 128>}]} {
    %c0 = arith.constant 0 : index
    %c0_0 = arith.constant 0 : index
    %c0_1 = arith.constant 0 : index
    %0 = vector.load %arg1[%c0, %c0_0, %c0_1] : memref<1x12x4xf32, #tpu.memory_space<vmem>>, vector<1x12x4xf32>
    %1 = vector.shape_cast %0 : vector<1x12x4xf32> to vector<12x4xf32>
    %c0_2 = arith.constant 0 : index
    %c0_3 = arith.constant 0 : index
    %c0_4 = arith.constant 0 : index
    %2 = vector.load %arg2[%c0_2, %c0_3, %c0_4] : memref<1x8x128xf32, #tpu.memory_space<vmem>>, vector<1x8x128xf32>
    %3 = vector.shape_cast %2 : vector<1x8x128xf32> to vector<8x128xf32>
    %c0_5 = arith.constant 0 : index
    %c0_6 = arith.constant 0 : index
    %4 = vector.load %arg5[%c0_5, %c0_6] : memref<4x128xbf16, #tpu.memory_space<vmem>>, vector<4x128xbf16>
    %5 = arith.truncf %1 : vector<12x4xf32> to vector<12x4xbf16>
    %cst = arith.constant dense<0.000000e+00> : vector<12x128xf32>
    %6 = tpu.matmul %5, %4, %cst {dimension_numbers = #tpu.dot_dimension_numbers<[1], [0], [0], [1], [0, 0, 1, 1], [], []>} : vector<12x4xbf16>, vector<4x128xbf16>, vector<12x128xf32> -> vector<12x128xf32>
    %c0_7 = arith.constant 0 : index
    %c0_8 = arith.constant 0 : index
    %c0_9 = arith.constant 0 : index
    %7 = vector.load %arg3[%c0_7, %c0_8, %c0_9] : memref<2x16x12xf32, #tpu.memory_space<vmem>>, vector<1x16x12xf32>
    %8 = vector.shape_cast %7 : vector<1x16x12xf32> to vector<16x12xf32>
    %cst_10 = arith.constant dense<0.000000e+00> : vector<16x128xf32>
    %9 = tpu.matmul %8, %6, %cst_10 {dimension_numbers = #tpu.dot_dimension_numbers<[1], [0], [0], [1], [0, 0, 1, 1], [], []>} : vector<16x12xf32>, vector<12x128xf32>, vector<16x128xf32> -> vector<16x128xf32>
    %c1 = arith.constant 1 : index
    %c0_11 = arith.constant 0 : index
    %c0_12 = arith.constant 0 : index
    %10 = vector.load %arg3[%c1, %c0_11, %c0_12] : memref<2x16x12xf32, #tpu.memory_space<vmem>>, vector<1x16x12xf32>
    %11 = vector.shape_cast %10 : vector<1x16x12xf32> to vector<16x12xf32>
    %12 = vector.extract_strided_slice %1 {offsets = [0, 0], sizes = [12, 1], strides = [1, 1]} : vector<12x4xf32> to vector<12x1xf32>
    %cst_13 = arith.constant dense<0.000000e+00> : vector<16x1xf32>
    %13 = tpu.matmul %11, %12, %cst_13 {dimension_numbers = #tpu.dot_dimension_numbers<[1], [0], [0], [1], [0, 0, 1, 1], [], []>} : vector<16x12xf32>, vector<12x1xf32>, vector<16x1xf32> -> vector<16x1xf32>
    %c0_14 = arith.constant 0 : index
    %c0_15 = arith.constant 0 : index
    %14 = vector.load %arg6[%c0_14, %c0_15] : memref<128x384xbf16, #tpu.memory_space<vmem>>, vector<128x384xbf16>
    %15 = arith.truncf %9 : vector<16x128xf32> to vector<16x128xbf16>
    %cst_16 = arith.constant dense<0.000000e+00> : vector<16x384xf32>
    %16 = tpu.matmul %15, %14, %cst_16 {dimension_numbers = #tpu.dot_dimension_numbers<[1], [0], [0], [1], [0, 0, 1, 1], [], []>} : vector<16x128xbf16>, vector<128x384xbf16>, vector<16x384xf32> -> vector<16x384xf32>
    %17 = vector.extract_strided_slice %16 {offsets = [0, 0], sizes = [16, 128], strides = [1, 1]} : vector<16x384xf32> to vector<16x128xf32>
    %cst_17 = arith.constant 0.0883883461 : f32
    %18 = vector.broadcast %cst_17 : f32 to vector<16x128xf32>
    %19 = arith.mulf %17, %18 : vector<16x128xf32>
    %20 = vector.extract_strided_slice %16 {offsets = [0, 128], sizes = [16, 128], strides = [1, 1]} : vector<16x384xf32> to vector<16x128xf32>
    %21 = vector.extract_strided_slice %16 {offsets = [0, 256], sizes = [16, 128], strides = [1, 1]} : vector<16x384xf32> to vector<16x128xf32>
    %22 = arith.truncf %19 : vector<16x128xf32> to vector<16x128xbf16>
    %23 = arith.truncf %20 : vector<16x128xf32> to vector<16x128xbf16>
    %cst_18 = arith.constant dense<0.000000e+00> : vector<16x16xf32>
    %24 = tpu.matmul %22, %23, %cst_18 {dimension_numbers = #tpu.dot_dimension_numbers<[1], [1], [0], [0], [0, 0, 1, 0], [], []>} : vector<16x128xbf16>, vector<16x128xbf16>, vector<16x16xf32> -> vector<16x16xf32>
    %cst_19 = arith.constant dense<0xFF800000> : vector<16xf32>
    %25 = vector.multi_reduction <maximumf>, %24, %cst_19 [1] : vector<16x16xf32> to vector<16xf32>
    %26 = vector.shape_cast %25 : vector<16xf32> to vector<16x1xf32>
    %27 = vector.broadcast %26 : vector<16x1xf32> to vector<16x16xf32>
    %28 = arith.subf %24, %27 : vector<16x16xf32>
    %29 = math.exp %28 : vector<16x16xf32>
    %cst_20 = arith.constant dense<0.000000e+00> : vector<16xf32>
    %30 = vector.multi_reduction <add>, %29, %cst_20 [1] : vector<16x16xf32> to vector<16xf32>
    %31 = vector.shape_cast %30 : vector<16xf32> to vector<16x1xf32>
    %32 = tpu.reciprocal %31 {approx = true} : vector<16x1xf32> -> vector<16x1xf32>
    %33 = vector.broadcast %32 : vector<16x1xf32> to vector<16x16xf32>
    %34 = arith.mulf %29, %33 : vector<16x16xf32>
    %35 = arith.truncf %34 : vector<16x16xf32> to vector<16x16xbf16>
    %36 = arith.truncf %21 : vector<16x128xf32> to vector<16x128xbf16>
    %cst_21 = arith.constant dense<0.000000e+00> : vector<16x128xf32>
    %37 = tpu.matmul %35, %36, %cst_21 {dimension_numbers = #tpu.dot_dimension_numbers<[1], [0], [0], [1], [0, 0, 1, 1], [], []>} : vector<16x16xbf16>, vector<16x128xbf16>, vector<16x128xf32> -> vector<16x128xf32>
    %c0_22 = arith.constant 0 : index
    %c0_23 = arith.constant 0 : index
    %38 = vector.load %arg7[%c0_22, %c0_23] : memref<128x128xbf16, #tpu.memory_space<vmem>>, vector<128x128xbf16>
    %39 = arith.truncf %37 : vector<16x128xf32> to vector<16x128xbf16>
    %cst_24 = arith.constant dense<0.000000e+00> : vector<16x128xf32>
    %40 = tpu.matmul %39, %38, %cst_24 {dimension_numbers = #tpu.dot_dimension_numbers<[1], [0], [0], [1], [0, 0, 1, 1], [], []>} : vector<16x128xbf16>, vector<128x128xbf16>, vector<16x128xf32> -> vector<16x128xf32>
    %41 = arith.addf %9, %40 : vector<16x128xf32>
    %c0_25 = arith.constant 0 : index
    %c0_26 = arith.constant 0 : index
    %42 = vector.load %arg4[%c0_25, %c0_26] : memref<16x16xf32, #tpu.memory_space<vmem>>, vector<16x16xf32>
    %cst_27 = arith.constant dense<0.000000e+00> : vector<16x128xf32>
    %43 = tpu.matmul %42, %41, %cst_27 {dimension_numbers = #tpu.dot_dimension_numbers<[1], [0], [0], [1], [0, 0, 1, 1], [], []>} : vector<16x16xf32>, vector<16x128xf32>, vector<16x128xf32> -> vector<16x128xf32>
    %44 = arith.subf %41, %43 : vector<16x128xf32>
    %c0_28 = arith.constant 0 : index
    %c0_29 = arith.constant 0 : index
    %45 = vector.load %arg8[%c0_28, %c0_29] : memref<128x128xbf16, #tpu.memory_space<vmem>>, vector<128x128xbf16>
    %46 = arith.truncf %44 : vector<16x128xf32> to vector<16x128xbf16>
    %cst_30 = arith.constant dense<0.000000e+00> : vector<16x128xf32>
    %47 = tpu.matmul %46, %45, %cst_30 {dimension_numbers = #tpu.dot_dimension_numbers<[1], [0], [0], [1], [0, 0, 1, 1], [], []>} : vector<16x128xbf16>, vector<128x128xbf16>, vector<16x128xf32> -> vector<16x128xf32>
    %cst_31 = arith.constant 0.0883883461 : f32
    %48 = vector.broadcast %cst_31 : f32 to vector<16x128xf32>
    %49 = arith.mulf %47, %48 : vector<16x128xf32>
    %c0_32 = arith.constant 0 : index
    %c0_33 = arith.constant 0 : index
    %50 = vector.load %arg9[%c0_32, %c0_33] : memref<128x256xbf16, #tpu.memory_space<vmem>>, vector<128x256xbf16>
    %51 = arith.truncf %3 : vector<8x128xf32> to vector<8x128xbf16>
    %cst_34 = arith.constant dense<0.000000e+00> : vector<8x256xf32>
    %52 = tpu.matmul %51, %50, %cst_34 {dimension_numbers = #tpu.dot_dimension_numbers<[1], [0], [0], [1], [0, 0, 1, 1], [], []>} : vector<8x128xbf16>, vector<128x256xbf16>, vector<8x256xf32> -> vector<8x256xf32>
    %53 = vector.extract_strided_slice %52 {offsets = [0, 0], sizes = [8, 128], strides = [1, 1]} : vector<8x256xf32> to vector<8x128xf32>
    %54 = vector.extract_strided_slice %52 {offsets = [0, 128], sizes = [8, 128], strides = [1, 1]} : vector<8x256xf32> to vector<8x128xf32>
    %55 = arith.truncf %49 : vector<16x128xf32> to vector<16x128xbf16>
    %56 = arith.truncf %53 : vector<8x128xf32> to vector<8x128xbf16>
    %cst_35 = arith.constant dense<0.000000e+00> : vector<16x8xf32>
    %57 = tpu.matmul %55, %56, %cst_35 {dimension_numbers = #tpu.dot_dimension_numbers<[1], [1], [0], [0], [0, 0, 1, 0], [], []>} : vector<16x128xbf16>, vector<8x128xbf16>, vector<16x8xf32> -> vector<16x8xf32>
    %cst_36 = arith.constant dense<0xFF800000> : vector<16xf32>
    %58 = vector.multi_reduction <maximumf>, %57, %cst_36 [1] : vector<16x8xf32> to vector<16xf32>
    %59 = vector.shape_cast %58 : vector<16xf32> to vector<16x1xf32>
    %60 = vector.broadcast %59 : vector<16x1xf32> to vector<16x8xf32>
    %61 = arith.subf %57, %60 : vector<16x8xf32>
    %62 = math.exp %61 : vector<16x8xf32>
    %cst_37 = arith.constant dense<0.000000e+00> : vector<16xf32>
    %63 = vector.multi_reduction <add>, %62, %cst_37 [1] : vector<16x8xf32> to vector<16xf32>
    %64 = vector.shape_cast %63 : vector<16xf32> to vector<16x1xf32>
    %65 = tpu.reciprocal %64 {approx = true} : vector<16x1xf32> -> vector<16x1xf32>
    %66 = vector.broadcast %65 : vector<16x1xf32> to vector<16x8xf32>
    %67 = arith.mulf %62, %66 : vector<16x8xf32>
    %68 = arith.truncf %67 : vector<16x8xf32> to vector<16x8xbf16>
    %69 = arith.truncf %54 : vector<8x128xf32> to vector<8x128xbf16>
    %cst_38 = arith.constant dense<0.000000e+00> : vector<16x128xf32>
    %70 = tpu.matmul %68, %69, %cst_38 {dimension_numbers = #tpu.dot_dimension_numbers<[1], [0], [0], [1], [0, 0, 1, 1], [], []>} : vector<16x8xbf16>, vector<8x128xbf16>, vector<16x128xf32> -> vector<16x128xf32>
    %c0_39 = arith.constant 0 : index
    %c0_40 = arith.constant 0 : index
    %71 = vector.load %arg10[%c0_39, %c0_40] : memref<128x128xbf16, #tpu.memory_space<vmem>>, vector<128x128xbf16>
    %72 = arith.truncf %70 : vector<16x128xf32> to vector<16x128xbf16>
    %cst_41 = arith.constant dense<0.000000e+00> : vector<16x128xf32>
    %73 = tpu.matmul %72, %71, %cst_41 {dimension_numbers = #tpu.dot_dimension_numbers<[1], [0], [0], [1], [0, 0, 1, 1], [], []>} : vector<16x128xbf16>, vector<128x128xbf16>, vector<16x128xf32> -> vector<16x128xf32>
    %74 = arith.addf %44, %73 : vector<16x128xf32>
    %cst_42 = arith.constant dense<0.000000e+00> : vector<16x128xf32>
    %75 = tpu.matmul %42, %74, %cst_42 {dimension_numbers = #tpu.dot_dimension_numbers<[1], [0], [0], [1], [0, 0, 1, 1], [], []>} : vector<16x16xf32>, vector<16x128xf32>, vector<16x128xf32> -> vector<16x128xf32>
    %76 = arith.subf %74, %75 : vector<16x128xf32>
    %77 = arith.addf %43, %75 : vector<16x128xf32>
    %c0_43 = arith.constant 0 : index
    %c0_44 = arith.constant 0 : index
    %78 = vector.load %arg11[%c0_43, %c0_44] : memref<128x512xbf16, #tpu.memory_space<vmem>>, vector<128x512xbf16>
    %79 = arith.truncf %76 : vector<16x128xf32> to vector<16x128xbf16>
    %cst_45 = arith.constant dense<0.000000e+00> : vector<16x512xf32>
    %80 = tpu.matmul %79, %78, %cst_45 {dimension_numbers = #tpu.dot_dimension_numbers<[1], [0], [0], [1], [0, 0, 1, 1], [], []>} : vector<16x128xbf16>, vector<128x512xbf16>, vector<16x512xf32> -> vector<16x512xf32>
    %cst_46 = arith.constant 0.000000e+00 : f32
    %81 = vector.broadcast %cst_46 : f32 to vector<16x512xf32>
    %82 = arith.maximumf %80, %81 : vector<16x512xf32>
    %c0_47 = arith.constant 0 : index
    %c0_48 = arith.constant 0 : index
    %83 = vector.load %arg12[%c0_47, %c0_48] : memref<512x128xbf16, #tpu.memory_space<vmem>>, vector<512x128xbf16>
    %84 = arith.truncf %82 : vector<16x512xf32> to vector<16x512xbf16>
    %cst_49 = arith.constant dense<0.000000e+00> : vector<16x128xf32>
    %85 = tpu.matmul %84, %83, %cst_49 {dimension_numbers = #tpu.dot_dimension_numbers<[1], [0], [0], [1], [0, 0, 1, 1], [], []>} : vector<16x512xbf16>, vector<512x128xbf16>, vector<16x128xf32> -> vector<16x128xf32>
    %86 = arith.addf %76, %85 : vector<16x128xf32>
    %cst_50 = arith.constant dense<0.000000e+00> : vector<16x128xf32>
    %87 = tpu.matmul %42, %86, %cst_50 {dimension_numbers = #tpu.dot_dimension_numbers<[1], [0], [0], [1], [0, 0, 1, 1], [], []>} : vector<16x16xf32>, vector<16x128xf32>, vector<16x128xf32> -> vector<16x128xf32>
    %88 = arith.subf %86, %87 : vector<16x128xf32>
    %89 = arith.addf %77, %87 : vector<16x128xf32>
    %c1_i32 = arith.constant 1 : i32
    %90 = tpu.dynamic_rotate %89 by %c1_i32 dim 0 : vector<16x128xf32>, i32 -> vector<16x128xf32>
    %c15_i32 = arith.constant 15 : i32
    %91 = tpu.dynamic_rotate %89 by %c15_i32 dim 0 : vector<16x128xf32>, i32 -> vector<16x128xf32>
    %92 = tpu.concatenate %90, %89, %91 in 1 : vector<16x128xf32>, vector<16x128xf32>, vector<16x128xf32> -> vector<16x384xf32>
    %c0_51 = arith.constant 0 : index
    %c0_52 = arith.constant 0 : index
    %93 = vector.load %arg13[%c0_51, %c0_52] : memref<384x128xbf16, #tpu.memory_space<vmem>>, vector<384x128xbf16>
    %94 = arith.truncf %92 : vector<16x384xf32> to vector<16x384xbf16>
    %cst_53 = arith.constant dense<0.000000e+00> : vector<16x128xf32>
    %95 = tpu.matmul %94, %93, %cst_53 {dimension_numbers = #tpu.dot_dimension_numbers<[1], [0], [0], [1], [0, 0, 1, 1], [], []>} : vector<16x384xbf16>, vector<384x128xbf16>, vector<16x128xf32> -> vector<16x128xf32>
    %c0_54 = arith.constant 0 : index
    %c0_55 = arith.constant 0 : index
    %c0_56 = arith.constant 0 : index
    %96 = vector.load %arg14[%c0_54, %c0_55, %c0_56] : memref<1x16x128xf32, #tpu.memory_space<vmem>>, vector<1x16x128xf32>
    %97 = vector.shape_cast %96 : vector<1x16x128xf32> to vector<16x128xf32>
    %98 = vector.shape_cast %88 : vector<16x128xf32> to vector<1x16x128xf32>
    tpu.vector_store %arg14[%c0_54, %c0_55, %c0_56], %98 {strides = array<i32>} : memref<1x16x128xf32, #tpu.memory_space<vmem>>, vector<1x16x128xf32>,
    %99 = vector.broadcast %13 : vector<16x1xf32> to vector<16x128xf32>
    %100 = arith.addf %95, %99 : vector<16x128xf32>
    %c0_57 = arith.constant 0 : index
    %c0_58 = arith.constant 0 : index
    %c0_59 = arith.constant 0 : index
    %101 = vector.load %arg15[%c0_57, %c0_58, %c0_59] : memref<1x16x128xf32, #tpu.memory_space<vmem>>, vector<1x16x128xf32>
    %102 = vector.shape_cast %101 : vector<1x16x128xf32> to vector<16x128xf32>
    %103 = vector.shape_cast %100 : vector<16x128xf32> to vector<1x16x128xf32>
    tpu.vector_store %arg15[%c0_57, %c0_58, %c0_59], %103 {strides = array<i32>} : memref<1x16x128xf32, #tpu.memory_space<vmem>>, vector<1x16x128xf32>,
    return
  }
  func.func @transform_0(%arg0: i32) -> (i32, i32, i32) {
    %c0_i32 = arith.constant 0 : i32
    %c0_i32_0 = arith.constant 0 : i32
    %c0_i32_1 = arith.constant 0 : i32
    return %arg0, %c0_i32, %c0_i32_0 : i32, i32, i32
  }
  func.func @transform_1(%arg0: i32) -> (i32, i32, i32) {
    %c0_i32 = arith.constant 0 : i32
    %c0_i32_0 = arith.constant 0 : i32
    %c0_i32_1 = arith.constant 0 : i32
    return %arg0, %c0_i32, %c0_i32_0 : i32, i32, i32
  }
  func.func @transform_2(%arg0: i32) -> (i32, i32, i32) {
    %c0_i32 = arith.constant 0 : i32
    %c0_i32_0 = arith.constant 0 : i32
    %c0_i32_1 = arith.constant 0 : i32
    %c0_i32_2 = arith.constant 0 : i32
    return %c0_i32, %c0_i32_0, %c0_i32_1 : i32, i32, i32
  }
  func.func @transform_3(%arg0: i32) -> (i32, i32) {
    %c0_i32 = arith.constant 0 : i32
    %c0_i32_0 = arith.constant 0 : i32
    %c0_i32_1 = arith.constant 0 : i32
    return %c0_i32, %c0_i32_0 : i32, i32
  }
  func.func @transform_4(%arg0: i32) -> (i32, i32) {
    %c0_i32 = arith.constant 0 : i32
    %c0_i32_0 = arith.constant 0 : i32
    %c0_i32_1 = arith.constant 0 : i32
    return %c0_i32, %c0_i32_0 : i32, i32
  }
  func.func @transform_5(%arg0: i32) -> (i32, i32) {
    %c0_i32 = arith.constant 0 : i32
    %c0_i32_0 = arith.constant 0 : i32
    %c0_i32_1 = arith.constant 0 : i32
    return %c0_i32, %c0_i32_0 : i32, i32
  }
  func.func @transform_6(%arg0: i32) -> (i32, i32) {
    %c0_i32 = arith.constant 0 : i32
    %c0_i32_0 = arith.constant 0 : i32
    %c0_i32_1 = arith.constant 0 : i32
    return %c0_i32, %c0_i32_0 : i32, i32
  }
  func.func @transform_7(%arg0: i32) -> (i32, i32) {
    %c0_i32 = arith.constant 0 : i32
    %c0_i32_0 = arith.constant 0 : i32
    %c0_i32_1 = arith.constant 0 : i32
    return %c0_i32, %c0_i32_0 : i32, i32
  }
  func.func @transform_8(%arg0: i32) -> (i32, i32) {
    %c0_i32 = arith.constant 0 : i32
    %c0_i32_0 = arith.constant 0 : i32
    %c0_i32_1 = arith.constant 0 : i32
    return %c0_i32, %c0_i32_0 : i32, i32
  }
  func.func @transform_9(%arg0: i32) -> (i32, i32) {
    %c0_i32 = arith.constant 0 : i32
    %c0_i32_0 = arith.constant 0 : i32
    %c0_i32_1 = arith.constant 0 : i32
    return %c0_i32, %c0_i32_0 : i32, i32
  }
  func.func @transform_10(%arg0: i32) -> (i32, i32) {
    %c0_i32 = arith.constant 0 : i32
    %c0_i32_0 = arith.constant 0 : i32
    %c0_i32_1 = arith.constant 0 : i32
    return %c0_i32, %c0_i32_0 : i32, i32
  }
  func.func @transform_11(%arg0: i32) -> (i32, i32) {
    %c0_i32 = arith.constant 0 : i32
    %c0_i32_0 = arith.constant 0 : i32
    %c0_i32_1 = arith.constant 0 : i32
    return %c0_i32, %c0_i32_0 : i32, i32
  }
  func.func @transform_12(%arg0: i32) -> (i32, i32) {
    %c0_i32 = arith.constant 0 : i32
    %c0_i32_0 = arith.constant 0 : i32
    %c0_i32_1 = arith.constant 0 : i32
    return %c0_i32, %c0_i32_0 : i32, i32
  }
  func.func @transform_13(%arg0: i32) -> (i32, i32, i32) {
    %c0_i32 = arith.constant 0 : i32
    %c0_i32_0 = arith.constant 0 : i32
    %c0_i32_1 = arith.constant 0 : i32
    return %arg0, %c0_i32, %c0_i32_0 : i32, i32, i32
  }
  func.func @transform_14(%arg0: i32) -> (i32, i32, i32) {
    %c0_i32 = arith.constant 0 : i32
    %c0_i32_0 = arith.constant 0 : i32
    %c0_i32_1 = arith.constant 0 : i32
    return %arg0, %c0_i32, %c0_i32_0 : i32, i32, i32
  }
}

module attributes {stable_mosaic.version = 11 : i64} {
  func.func @_decoder_layer_kernel(%arg0: i32, %arg1: memref<1x12x4xf32, #tpu.memory_space<vmem>>, %arg2: memref<1x8x128xf32, #tpu.memory_space<vmem>>, %arg3: memref<2x16x12xf32, #tpu.memory_space<vmem>>, %arg4: memref<16x16xf32, #tpu.memory_space<vmem>>, %arg5: memref<4x128xbf16, #tpu.memory_space<vmem>>, %arg6: memref<128x384xbf16, #tpu.memory_space<vmem>>, %arg7: memref<128x128xbf16, #tpu.memory_space<vmem>>, %arg8: memref<128x128xbf16, #tpu.memory_space<vmem>>, %arg9: memref<128x256xbf16, #tpu.memory_space<vmem>>, %arg10: memref<128x128xbf16, #tpu.memory_space<vmem>>, %arg11: memref<128x512xbf16, #tpu.memory_space<vmem>>, %arg12: memref<512x128xbf16, #tpu.memory_space<vmem>>, %arg13: memref<384x128xbf16, #tpu.memory_space<vmem>>, %arg14: memref<1x16x128xf32, #tpu.memory_space<vmem>>, %arg15: memref<1x16x128xf32, #tpu.memory_space<vmem>>) attributes {dimension_semantics = [#tpu.dimension_semantics<parallel>], iteration_bounds = array<i64: 2>, scalar_prefetch = 0 : i64, scratch_operands = 0 : i64, tpu.core_type = #tpu.core_type<tc>, window_params = [{transform_indices = @transform_0, window_bounds = array<i64: 1, 12, 4>}, {transform_indices = @transform_1, window_bounds = array<i64: 1, 8, 128>}, {pipeline_mode = #tpu.pipeline_mode<synchronous>, transform_indices = @transform_2, window_bounds = array<i64: 2, 16, 12>}, {pipeline_mode = #tpu.pipeline_mode<synchronous>, transform_indices = @transform_3, window_bounds = array<i64: 16, 16>}, {pipeline_mode = #tpu.pipeline_mode<synchronous>, transform_indices = @transform_4, window_bounds = array<i64: 4, 128>}, {pipeline_mode = #tpu.pipeline_mode<synchronous>, transform_indices = @transform_5, window_bounds = array<i64: 128, 384>}, {pipeline_mode = #tpu.pipeline_mode<synchronous>, transform_indices = @transform_6, window_bounds = array<i64: 128, 128>}, {pipeline_mode = #tpu.pipeline_mode<synchronous>, transform_indices = @transform_7, window_bounds = array<i64: 128, 128>}, {pipeline_mode = #tpu.pipeline_mode<synchronous>, transform_indices = @transform_8, window_bounds = array<i64: 128, 256>}, {pipeline_mode = #tpu.pipeline_mode<synchronous>, transform_indices = @transform_9, window_bounds = array<i64: 128, 128>}, {pipeline_mode = #tpu.pipeline_mode<synchronous>, transform_indices = @transform_10, window_bounds = array<i64: 128, 512>}, {pipeline_mode = #tpu.pipeline_mode<synchronous>, transform_indices = @transform_11, window_bounds = array<i64: 512, 128>}, {pipeline_mode = #tpu.pipeline_mode<synchronous>, transform_indices = @transform_12, window_bounds = array<i64: 384, 128>}, {transform_indices = @transform_13, window_bounds = array<i64: 1, 16, 128>}, {transform_indices = @transform_14, window_bounds = array<i64: 1, 16, 128>}]} {
    %c0 = arith.constant 0 : index
    %c0_0 = arith.constant 0 : index
    %c0_1 = arith.constant 0 : index
    %0 = vector.load %arg1[%c0, %c0_0, %c0_1] : memref<1x12x4xf32, #tpu.memory_space<vmem>>, vector<1x12x4xf32>
    %1 = vector.shape_cast %0 : vector<1x12x4xf32> to vector<12x4xf32>
    %c0_2 = arith.constant 0 : index
    %c0_3 = arith.constant 0 : index
    %c0_4 = arith.constant 0 : index
    %2 = vector.load %arg2[%c0_2, %c0_3, %c0_4] : memref<1x8x128xf32, #tpu.memory_space<vmem>>, vector<1x8x128xf32>
    %3 = vector.shape_cast %2 : vector<1x8x128xf32> to vector<8x128xf32>
    %c0_5 = arith.constant 0 : index
    %c0_6 = arith.constant 0 : index
    %4 = vector.load %arg5[%c0_5, %c0_6] : memref<4x128xbf16, #tpu.memory_space<vmem>>, vector<4x128xbf16>
    %5 = arith.truncf %1 : vector<12x4xf32> to vector<12x4xbf16>
    %cst = arith.constant dense<0.000000e+00> : vector<12x128xf32>
    %6 = tpu.matmul %5, %4, %cst {dimension_numbers = #tpu.dot_dimension_numbers<[1], [0], [0], [1], [0, 0, 1, 1], [], []>} : vector<12x4xbf16>, vector<4x128xbf16>, vector<12x128xf32> -> vector<12x128xf32>
    %c0_7 = arith.constant 0 : index
    %c0_8 = arith.constant 0 : index
    %c0_9 = arith.constant 0 : index
    %7 = vector.load %arg3[%c0_7, %c0_8, %c0_9] : memref<2x16x12xf32, #tpu.memory_space<vmem>>, vector<1x16x12xf32>
    %8 = vector.shape_cast %7 : vector<1x16x12xf32> to vector<16x12xf32>
    %cst_10 = arith.constant dense<0.000000e+00> : vector<16x128xf32>
    %9 = tpu.matmul %8, %6, %cst_10 {dimension_numbers = #tpu.dot_dimension_numbers<[1], [0], [0], [1], [0, 0, 1, 1], [], []>} : vector<16x12xf32>, vector<12x128xf32>, vector<16x128xf32> -> vector<16x128xf32>
    %c1 = arith.constant 1 : index
    %c0_11 = arith.constant 0 : index
    %c0_12 = arith.constant 0 : index
    %10 = vector.load %arg3[%c1, %c0_11, %c0_12] : memref<2x16x12xf32, #tpu.memory_space<vmem>>, vector<1x16x12xf32>
    %11 = vector.shape_cast %10 : vector<1x16x12xf32> to vector<16x12xf32>
    %12 = vector.extract_strided_slice %1 {offsets = [0, 0], sizes = [12, 1], strides = [1, 1]} : vector<12x4xf32> to vector<12x1xf32>
    %cst_13 = arith.constant dense<0.000000e+00> : vector<16x1xf32>
    %13 = tpu.matmul %11, %12, %cst_13 {dimension_numbers = #tpu.dot_dimension_numbers<[1], [0], [0], [1], [0, 0, 1, 1], [], []>} : vector<16x12xf32>, vector<12x1xf32>, vector<16x1xf32> -> vector<16x1xf32>
    %c0_14 = arith.constant 0 : index
    %c0_15 = arith.constant 0 : index
    %14 = vector.load %arg6[%c0_14, %c0_15] : memref<128x384xbf16, #tpu.memory_space<vmem>>, vector<128x384xbf16>
    %15 = arith.truncf %9 : vector<16x128xf32> to vector<16x128xbf16>
    %cst_16 = arith.constant dense<0.000000e+00> : vector<16x384xf32>
    %16 = tpu.matmul %15, %14, %cst_16 {dimension_numbers = #tpu.dot_dimension_numbers<[1], [0], [0], [1], [0, 0, 1, 1], [], []>} : vector<16x128xbf16>, vector<128x384xbf16>, vector<16x384xf32> -> vector<16x384xf32>
    %17 = vector.extract_strided_slice %16 {offsets = [0, 0], sizes = [16, 128], strides = [1, 1]} : vector<16x384xf32> to vector<16x128xf32>
    %cst_17 = arith.constant 0.0883883461 : f32
    %18 = vector.broadcast %cst_17 : f32 to vector<16x128xf32>
    %19 = arith.mulf %17, %18 : vector<16x128xf32>
    %20 = vector.extract_strided_slice %16 {offsets = [0, 128], sizes = [16, 128], strides = [1, 1]} : vector<16x384xf32> to vector<16x128xf32>
    %21 = vector.extract_strided_slice %16 {offsets = [0, 256], sizes = [16, 128], strides = [1, 1]} : vector<16x384xf32> to vector<16x128xf32>
    %22 = arith.truncf %19 : vector<16x128xf32> to vector<16x128xbf16>
    %23 = arith.truncf %20 : vector<16x128xf32> to vector<16x128xbf16>
    %cst_18 = arith.constant dense<0.000000e+00> : vector<16x16xf32>
    %24 = tpu.matmul %22, %23, %cst_18 {dimension_numbers = #tpu.dot_dimension_numbers<[1], [1], [0], [0], [0, 0, 1, 0], [], []>} : vector<16x128xbf16>, vector<16x128xbf16>, vector<16x16xf32> -> vector<16x16xf32>
    %cst_19 = arith.constant dense<0xFF800000> : vector<16xf32>
    %25 = vector.multi_reduction <maximumf>, %24, %cst_19 [1] : vector<16x16xf32> to vector<16xf32>
    %26 = vector.shape_cast %25 : vector<16xf32> to vector<16x1xf32>
    %27 = vector.broadcast %26 : vector<16x1xf32> to vector<16x16xf32>
    %28 = arith.subf %24, %27 : vector<16x16xf32>
    %29 = math.exp %28 : vector<16x16xf32>
    %cst_20 = arith.constant dense<0.000000e+00> : vector<16xf32>
    %30 = vector.multi_reduction <add>, %29, %cst_20 [1] : vector<16x16xf32> to vector<16xf32>
    %31 = vector.shape_cast %30 : vector<16xf32> to vector<16x1xf32>
    %32 = tpu.reciprocal %31 {approx = true} : vector<16x1xf32> -> vector<16x1xf32>
    %33 = vector.broadcast %32 : vector<16x1xf32> to vector<16x16xf32>
    %34 = arith.mulf %29, %33 : vector<16x16xf32>
    %35 = arith.truncf %34 : vector<16x16xf32> to vector<16x16xbf16>
    %36 = arith.truncf %21 : vector<16x128xf32> to vector<16x128xbf16>
    %cst_21 = arith.constant dense<0.000000e+00> : vector<16x128xf32>
    %37 = tpu.matmul %35, %36, %cst_21 {dimension_numbers = #tpu.dot_dimension_numbers<[1], [0], [0], [1], [0, 0, 1, 1], [], []>} : vector<16x16xbf16>, vector<16x128xbf16>, vector<16x128xf32> -> vector<16x128xf32>
    %c0_22 = arith.constant 0 : index
    %c0_23 = arith.constant 0 : index
    %38 = vector.load %arg7[%c0_22, %c0_23] : memref<128x128xbf16, #tpu.memory_space<vmem>>, vector<128x128xbf16>
    %39 = arith.truncf %37 : vector<16x128xf32> to vector<16x128xbf16>
    %cst_24 = arith.constant dense<0.000000e+00> : vector<16x128xf32>
    %40 = tpu.matmul %39, %38, %cst_24 {dimension_numbers = #tpu.dot_dimension_numbers<[1], [0], [0], [1], [0, 0, 1, 1], [], []>} : vector<16x128xbf16>, vector<128x128xbf16>, vector<16x128xf32> -> vector<16x128xf32>
    %41 = arith.addf %9, %40 : vector<16x128xf32>
    %c0_25 = arith.constant 0 : index
    %c0_26 = arith.constant 0 : index
    %42 = vector.load %arg4[%c0_25, %c0_26] : memref<16x16xf32, #tpu.memory_space<vmem>>, vector<16x16xf32>
    %cst_27 = arith.constant dense<0.000000e+00> : vector<16x128xf32>
    %43 = tpu.matmul %42, %41, %cst_27 {dimension_numbers = #tpu.dot_dimension_numbers<[1], [0], [0], [1], [0, 0, 1, 1], [], []>} : vector<16x16xf32>, vector<16x128xf32>, vector<16x128xf32> -> vector<16x128xf32>
    %44 = arith.subf %41, %43 : vector<16x128xf32>
    %c0_28 = arith.constant 0 : index
    %c0_29 = arith.constant 0 : index
    %45 = vector.load %arg8[%c0_28, %c0_29] : memref<128x128xbf16, #tpu.memory_space<vmem>>, vector<128x128xbf16>
    %46 = arith.truncf %44 : vector<16x128xf32> to vector<16x128xbf16>
    %cst_30 = arith.constant dense<0.000000e+00> : vector<16x128xf32>
    %47 = tpu.matmul %46, %45, %cst_30 {dimension_numbers = #tpu.dot_dimension_numbers<[1], [0], [0], [1], [0, 0, 1, 1], [], []>} : vector<16x128xbf16>, vector<128x128xbf16>, vector<16x128xf32> -> vector<16x128xf32>
    %cst_31 = arith.constant 0.0883883461 : f32
    %48 = vector.broadcast %cst_31 : f32 to vector<16x128xf32>
    %49 = arith.mulf %47, %48 : vector<16x128xf32>
    %c0_32 = arith.constant 0 : index
    %c0_33 = arith.constant 0 : index
    %50 = vector.load %arg9[%c0_32, %c0_33] : memref<128x256xbf16, #tpu.memory_space<vmem>>, vector<128x256xbf16>
    %51 = arith.truncf %3 : vector<8x128xf32> to vector<8x128xbf16>
    %cst_34 = arith.constant dense<0.000000e+00> : vector<8x256xf32>
    %52 = tpu.matmul %51, %50, %cst_34 {dimension_numbers = #tpu.dot_dimension_numbers<[1], [0], [0], [1], [0, 0, 1, 1], [], []>} : vector<8x128xbf16>, vector<128x256xbf16>, vector<8x256xf32> -> vector<8x256xf32>
    %53 = vector.extract_strided_slice %52 {offsets = [0, 0], sizes = [8, 128], strides = [1, 1]} : vector<8x256xf32> to vector<8x128xf32>
    %54 = vector.extract_strided_slice %52 {offsets = [0, 128], sizes = [8, 128], strides = [1, 1]} : vector<8x256xf32> to vector<8x128xf32>
    %55 = arith.truncf %49 : vector<16x128xf32> to vector<16x128xbf16>
    %56 = arith.truncf %53 : vector<8x128xf32> to vector<8x128xbf16>
    %cst_35 = arith.constant dense<0.000000e+00> : vector<16x8xf32>
    %57 = tpu.matmul %55, %56, %cst_35 {dimension_numbers = #tpu.dot_dimension_numbers<[1], [1], [0], [0], [0, 0, 1, 0], [], []>} : vector<16x128xbf16>, vector<8x128xbf16>, vector<16x8xf32> -> vector<16x8xf32>
    %cst_36 = arith.constant dense<0xFF800000> : vector<16xf32>
    %58 = vector.multi_reduction <maximumf>, %57, %cst_36 [1] : vector<16x8xf32> to vector<16xf32>
    %59 = vector.shape_cast %58 : vector<16xf32> to vector<16x1xf32>
    %60 = vector.broadcast %59 : vector<16x1xf32> to vector<16x8xf32>
    %61 = arith.subf %57, %60 : vector<16x8xf32>
    %62 = math.exp %61 : vector<16x8xf32>
    %cst_37 = arith.constant dense<0.000000e+00> : vector<16xf32>
    %63 = vector.multi_reduction <add>, %62, %cst_37 [1] : vector<16x8xf32> to vector<16xf32>
    %64 = vector.shape_cast %63 : vector<16xf32> to vector<16x1xf32>
    %65 = tpu.reciprocal %64 {approx = true} : vector<16x1xf32> -> vector<16x1xf32>
    %66 = vector.broadcast %65 : vector<16x1xf32> to vector<16x8xf32>
    %67 = arith.mulf %62, %66 : vector<16x8xf32>
    %68 = arith.truncf %67 : vector<16x8xf32> to vector<16x8xbf16>
    %69 = arith.truncf %54 : vector<8x128xf32> to vector<8x128xbf16>
    %cst_38 = arith.constant dense<0.000000e+00> : vector<16x128xf32>
    %70 = tpu.matmul %68, %69, %cst_38 {dimension_numbers = #tpu.dot_dimension_numbers<[1], [0], [0], [1], [0, 0, 1, 1], [], []>} : vector<16x8xbf16>, vector<8x128xbf16>, vector<16x128xf32> -> vector<16x128xf32>
    %c0_39 = arith.constant 0 : index
    %c0_40 = arith.constant 0 : index
    %71 = vector.load %arg10[%c0_39, %c0_40] : memref<128x128xbf16, #tpu.memory_space<vmem>>, vector<128x128xbf16>
    %72 = arith.truncf %70 : vector<16x128xf32> to vector<16x128xbf16>
    %cst_41 = arith.constant dense<0.000000e+00> : vector<16x128xf32>
    %73 = tpu.matmul %72, %71, %cst_41 {dimension_numbers = #tpu.dot_dimension_numbers<[1], [0], [0], [1], [0, 0, 1, 1], [], []>} : vector<16x128xbf16>, vector<128x128xbf16>, vector<16x128xf32> -> vector<16x128xf32>
    %74 = arith.addf %44, %73 : vector<16x128xf32>
    %cst_42 = arith.constant dense<0.000000e+00> : vector<16x128xf32>
    %75 = tpu.matmul %42, %74, %cst_42 {dimension_numbers = #tpu.dot_dimension_numbers<[1], [0], [0], [1], [0, 0, 1, 1], [], []>} : vector<16x16xf32>, vector<16x128xf32>, vector<16x128xf32> -> vector<16x128xf32>
    %76 = arith.subf %74, %75 : vector<16x128xf32>
    %77 = arith.addf %43, %75 : vector<16x128xf32>
    %c0_43 = arith.constant 0 : index
    %c0_44 = arith.constant 0 : index
    %78 = vector.load %arg11[%c0_43, %c0_44] : memref<128x512xbf16, #tpu.memory_space<vmem>>, vector<128x512xbf16>
    %79 = arith.truncf %76 : vector<16x128xf32> to vector<16x128xbf16>
    %cst_45 = arith.constant dense<0.000000e+00> : vector<16x512xf32>
    %80 = tpu.matmul %79, %78, %cst_45 {dimension_numbers = #tpu.dot_dimension_numbers<[1], [0], [0], [1], [0, 0, 1, 1], [], []>} : vector<16x128xbf16>, vector<128x512xbf16>, vector<16x512xf32> -> vector<16x512xf32>
    %cst_46 = arith.constant 0.000000e+00 : f32
    %81 = vector.broadcast %cst_46 : f32 to vector<16x512xf32>
    %82 = arith.maximumf %80, %81 : vector<16x512xf32>
    %c0_47 = arith.constant 0 : index
    %c0_48 = arith.constant 0 : index
    %83 = vector.load %arg12[%c0_47, %c0_48] : memref<512x128xbf16, #tpu.memory_space<vmem>>, vector<512x128xbf16>
    %84 = arith.truncf %82 : vector<16x512xf32> to vector<16x512xbf16>
    %cst_49 = arith.constant dense<0.000000e+00> : vector<16x128xf32>
    %85 = tpu.matmul %84, %83, %cst_49 {dimension_numbers = #tpu.dot_dimension_numbers<[1], [0], [0], [1], [0, 0, 1, 1], [], []>} : vector<16x512xbf16>, vector<512x128xbf16>, vector<16x128xf32> -> vector<16x128xf32>
    %86 = arith.addf %76, %85 : vector<16x128xf32>
    %cst_50 = arith.constant dense<0.000000e+00> : vector<16x128xf32>
    %87 = tpu.matmul %42, %86, %cst_50 {dimension_numbers = #tpu.dot_dimension_numbers<[1], [0], [0], [1], [0, 0, 1, 1], [], []>} : vector<16x16xf32>, vector<16x128xf32>, vector<16x128xf32> -> vector<16x128xf32>
    %88 = arith.subf %86, %87 : vector<16x128xf32>
    %89 = arith.addf %77, %87 : vector<16x128xf32>
    %c1_i32 = arith.constant 1 : i32
    %90 = tpu.dynamic_rotate %89 by %c1_i32 dim 0 : vector<16x128xf32>, i32 -> vector<16x128xf32>
    %c15_i32 = arith.constant 15 : i32
    %91 = tpu.dynamic_rotate %89 by %c15_i32 dim 0 : vector<16x128xf32>, i32 -> vector<16x128xf32>
    %92 = tpu.concatenate %90, %89, %91 in 1 : vector<16x128xf32>, vector<16x128xf32>, vector<16x128xf32> -> vector<16x384xf32>
    %c0_51 = arith.constant 0 : index
    %c0_52 = arith.constant 0 : index
    %93 = vector.load %arg13[%c0_51, %c0_52] : memref<384x128xbf16, #tpu.memory_space<vmem>>, vector<384x128xbf16>
    %94 = arith.truncf %92 : vector<16x384xf32> to vector<16x384xbf16>
    %cst_53 = arith.constant dense<0.000000e+00> : vector<16x128xf32>
    %95 = tpu.matmul %94, %93, %cst_53 {dimension_numbers = #tpu.dot_dimension_numbers<[1], [0], [0], [1], [0, 0, 1, 1], [], []>} : vector<16x384xbf16>, vector<384x128xbf16>, vector<16x128xf32> -> vector<16x128xf32>
    %c0_54 = arith.constant 0 : index
    %c0_55 = arith.constant 0 : index
    %c0_56 = arith.constant 0 : index
    %96 = vector.load %arg14[%c0_54, %c0_55, %c0_56] : memref<1x16x128xf32, #tpu.memory_space<vmem>>, vector<1x16x128xf32>
    %97 = vector.shape_cast %96 : vector<1x16x128xf32> to vector<16x128xf32>
    %98 = vector.shape_cast %88 : vector<16x128xf32> to vector<1x16x128xf32>
    tpu.vector_store %arg14[%c0_54, %c0_55, %c0_56], %98 {strides = array<i32>} : memref<1x16x128xf32, #tpu.memory_space<vmem>>, vector<1x16x128xf32>,
    %99 = vector.broadcast %13 : vector<16x1xf32> to vector<16x128xf32>
    %100 = arith.addf %95, %99 : vector<16x128xf32>
    %c0_57 = arith.constant 0 : index
    %c0_58 = arith.constant 0 : index
    %c0_59 = arith.constant 0 : index
    %101 = vector.load %arg15[%c0_57, %c0_58, %c0_59] : memref<1x16x128xf32, #tpu.memory_space<vmem>>, vector<1x16x128xf32>
    %102 = vector.shape_cast %101 : vector<1x16x128xf32> to vector<16x128xf32>
    %103 = vector.shape_cast %100 : vector<16x128xf32> to vector<1x16x128xf32>
    tpu.vector_store %arg15[%c0_57, %c0_58, %c0_59], %103 {strides = array<i32>} : memref<1x16x128xf32, #tpu.memory_space<vmem>>, vector<1x16x128xf32>,
    return
  }
  func.func @transform_0(%arg0: i32) -> (i32, i32, i32) {
    %c0_i32 = arith.constant 0 : i32
    %c0_i32_0 = arith.constant 0 : i32
    %c0_i32_1 = arith.constant 0 : i32
    return %arg0, %c0_i32, %c0_i32_0 : i32, i32, i32
  }
  func.func @transform_1(%arg0: i32) -> (i32, i32, i32) {
    %c0_i32 = arith.constant 0 : i32
    %c0_i32_0 = arith.constant 0 : i32
    %c0_i32_1 = arith.constant 0 : i32
    return %arg0, %c0_i32, %c0_i32_0 : i32, i32, i32
  }
  func.func @transform_2(%arg0: i32) -> (i32, i32, i32) {
    %c0_i32 = arith.constant 0 : i32
    %c0_i32_0 = arith.constant 0 : i32
    %c0_i32_1 = arith.constant 0 : i32
    %c0_i32_2 = arith.constant 0 : i32
    return %c0_i32, %c0_i32_0, %c0_i32_1 : i32, i32, i32
  }
  func.func @transform_3(%arg0: i32) -> (i32, i32) {
    %c0_i32 = arith.constant 0 : i32
    %c0_i32_0 = arith.constant 0 : i32
    %c0_i32_1 = arith.constant 0 : i32
    return %c0_i32, %c0_i32_0 : i32, i32
  }
  func.func @transform_4(%arg0: i32) -> (i32, i32) {
    %c0_i32 = arith.constant 0 : i32
    %c0_i32_0 = arith.constant 0 : i32
    %c0_i32_1 = arith.constant 0 : i32
    return %c0_i32, %c0_i32_0 : i32, i32
  }
  func.func @transform_5(%arg0: i32) -> (i32, i32) {
    %c0_i32 = arith.constant 0 : i32
    %c0_i32_0 = arith.constant 0 : i32
    %c0_i32_1 = arith.constant 0 : i32
    return %c0_i32, %c0_i32_0 : i32, i32
  }
  func.func @transform_6(%arg0: i32) -> (i32, i32) {
    %c0_i32 = arith.constant 0 : i32
    %c0_i32_0 = arith.constant 0 : i32
    %c0_i32_1 = arith.constant 0 : i32
    return %c0_i32, %c0_i32_0 : i32, i32
  }
  func.func @transform_7(%arg0: i32) -> (i32, i32) {
    %c0_i32 = arith.constant 0 : i32
    %c0_i32_0 = arith.constant 0 : i32
    %c0_i32_1 = arith.constant 0 : i32
    return %c0_i32, %c0_i32_0 : i32, i32
  }
  func.func @transform_8(%arg0: i32) -> (i32, i32) {
    %c0_i32 = arith.constant 0 : i32
    %c0_i32_0 = arith.constant 0 : i32
    %c0_i32_1 = arith.constant 0 : i32
    return %c0_i32, %c0_i32_0 : i32, i32
  }
  func.func @transform_9(%arg0: i32) -> (i32, i32) {
    %c0_i32 = arith.constant 0 : i32
    %c0_i32_0 = arith.constant 0 : i32
    %c0_i32_1 = arith.constant 0 : i32
    return %c0_i32, %c0_i32_0 : i32, i32
  }
  func.func @transform_10(%arg0: i32) -> (i32, i32) {
    %c0_i32 = arith.constant 0 : i32
    %c0_i32_0 = arith.constant 0 : i32
    %c0_i32_1 = arith.constant 0 : i32
    return %c0_i32, %c0_i32_0 : i32, i32
  }
  func.func @transform_11(%arg0: i32) -> (i32, i32) {
    %c0_i32 = arith.constant 0 : i32
    %c0_i32_0 = arith.constant 0 : i32
    %c0_i32_1 = arith.constant 0 : i32
    return %c0_i32, %c0_i32_0 : i32, i32
  }
  func.func @transform_12(%arg0: i32) -> (i32, i32) {
    %c0_i32 = arith.constant 0 : i32
    %c0_i32_0 = arith.constant 0 : i32
    %c0_i32_1 = arith.constant 0 : i32
    return %c0_i32, %c0_i32_0 : i32, i32
  }
  func.func @transform_13(%arg0: i32) -> (i32, i32, i32) {
    %c0_i32 = arith.constant 0 : i32
    %c0_i32_0 = arith.constant 0 : i32
    %c0_i32_1 = arith.constant 0 : i32
    return %arg0, %c0_i32, %c0_i32_0 : i32, i32, i32
  }
  func.func @transform_14(%arg0: i32) -> (i32, i32, i32) {
    %c0_i32 = arith.constant 0 : i32
    %c0_i32_0 = arith.constant 0 : i32
    %c0_i32_1 = arith.constant 0 : i32
    return %arg0, %c0_i32, %c0_i32_0 : i32, i32, i32
  }
}

</mosaic_0001>

<llo_original>
// kernel: decoder_layer_forward.1
$region0: #{decoder_layer_forward.1}
  #allocation0 [shape = 'u32[]', space=smem, size = 0x4, offset = 0x4, fixed_abs, tag = 'smem constant byte address 0x4 - core index']
  #allocation1 [shape = 'u32[144,128]{1,0:T(1,128)}', space=vmem, size = 0x12000, scoped, tag = 'internal scratch']
  %s0 = inlined_call_operand.vmem [shape: f32[2,12,4], index: 0, kind: input, shape index: {}]
  %s1 = inlined_call_operand.hbm [shape: f32[2,8,128], index: 1, kind: input, shape index: {}]
  %s2 = inlined_call_operand.vmem [shape: f32[2,16,12], index: 2, kind: input, shape index: {}]
  %s3 = inlined_call_operand.vmem [shape: f32[16,16], index: 3, kind: input, shape index: {}]
  %s4 = inlined_call_operand.hbm [shape: bf16[4,128], index: 4, kind: input, shape index: {}]
  %s5 = inlined_call_operand.vmem [shape: bf16[128,384], index: 5, kind: input, shape index: {}]
  %s6 = inlined_call_operand.hbm [shape: bf16[128,128], index: 6, kind: input, shape index: {}]
  %s7 = inlined_call_operand.hbm [shape: bf16[128,128], index: 7, kind: input, shape index: {}]
  %s8 = inlined_call_operand.vmem [shape: bf16[128,256], index: 8, kind: input, shape index: {}]
  %s9 = inlined_call_operand.hbm [shape: bf16[128,128], index: 9, kind: input, shape index: {}]
  %s10 = inlined_call_operand.vmem [shape: bf16[128,512], index: 10, kind: input, shape index: {}]
  %s11 = inlined_call_operand.vmem [shape: bf16[512,128], index: 11, kind: input, shape index: {}]
  %s12 = inlined_call_operand.vmem [shape: bf16[384,128], index: 12, kind: input, shape index: {}]
  %s13 = inlined_call_operand.hbm [shape: f32[2,16,128], index: 13, kind: output, shape index: {0}]
  %s14 = inlined_call_operand.vmem [shape: f32[2,16,128], index: 14, kind: output, shape index: {1}]
  %15 = xla_tuple %s13, %s14
  %s16 = sld [smem:[#allocation0]]
  $region113: #{decoder_layer_forward.1} parent=0
    _
  %s18 = ssub.s32 1, %s16
  %s19 = scalar_select 0, %s18, %s16
  $region1: #{decoder_layer_forward.1} parent=0
    #allocation2 [shape = 'u8[8192]{0}', space=vmem, size = 0x2000, scoped, tag = 'input window, operand 1']
    #allocation3 [shape = 's32[2]{0}', space=sflag, size = 0x8, scoped, tag = 'scoped memory for decoder_layer_forward.1']
    #allocation4 [shape = 's32[2]{0}', space=sflag, size = 0x8, scoped, tag = 'scoped memory for decoder_layer_forward.1']
    #allocation5 [shape = 'u8[1024]{0}', space=vmem, size = 0x400, scoped, tag = 'input window, operand 4, single buffered']
    #allocation6 [shape = 's32[1]{0}', space=sflag, size = 0x4, scoped, tag = 'scoped memory for decoder_layer_forward.1']
    #allocation7 [shape = 'u8[32768]{0}', space=vmem, size = 0x8000, scoped, tag = 'input window, operand 6, single buffered']
    #allocation8 [shape = 'u8[32768]{0}', space=vmem, size = 0x8000, scoped, tag = 'input window, operand 7, single buffered']
    #allocation9 [shape = 's32[1]{0}', space=sflag, size = 0x4, scoped, tag = 'scoped memory for decoder_layer_forward.1']
    #allocation10 [shape = 'u8[32768]{0}', space=vmem, size = 0x8000, scoped, tag = 'input window, operand 9, single buffered']
    #allocation11 [shape = 'u8[16384]{0}', space=vmem, size = 0x4000, scoped, tag = 'output window, operand 0']
    %20 = vsyncpa [#allocation3], 0
    %s21 = scalar_lea.sflag [#allocation3], 1
    %22 = vsyncpa %s21, 0
    %23 = vsyncpa [#allocation6], 0
    %24 = vsyncpa [#allocation9], 0
    %25 = vsyncpa [#allocation4], 0
    %s26 = scalar_lea.sflag [#allocation4], 1
    %27 = vsyncpa %s26, 0
    loop: start=0, step=1, limit=4
    $region2: #{decoder_layer_forward.1} parent=1 // loop_pre_header
      _
    $region3: #{decoder_layer_forward.1} parent=1 // loop_header
      %s29 = sphi 0, %s33
      %p30 = scmp.ge.s32.totalorder %s29, 4
      %s39 = sphi 0, %s41
      %s42 = sphi 0, %s39
      %s43 = sphi 0, %s42
      %s59 = sphi 0, %s43
      %s65 = sphi 0, %s67
      %s68 = sphi 0, %s65
      %s69 = sphi 0, %s68
      %s85 = sphi 0, %s69
      %s89 = sphi 0, %s89
      %s91 = sphi 0, %s89
      %s92 = sphi 0, %s91
      %s106 = sphi 0, %s92
      %s110 = sphi 0, %s110
      %s112 = sphi 0, %s110
      %s113 = sphi 0, %s112
      %s127 = sphi 0, %s113
      %s131 = sphi 0, %s131
      %s133 = sphi 0, %s131
      %s134 = sphi 0, %s133
      %s148 = sphi 0, %s134
      %s152 = sphi 0, %s152
      %s154 = sphi 0, %s152
      %s155 = sphi 0, %s154
      %s169 = sphi 0, %s155
      %s173 = sphi 0, %s173
      %s175 = sphi 0, %s173
      %s176 = sphi 0, %s175
      %s190 = sphi 0, %s176
      %s194 = sphi 0, %s194
      %s196 = sphi 0, %s194
      %s197 = sphi 0, %s196
      %s211 = sphi 0, %s197
      %s215 = sphi 0, %s215
      %s217 = sphi 0, %s215
      %s218 = sphi 0, %s217
      %s232 = sphi 0, %s218
      %s236 = sphi 0, %s236
      %s238 = sphi 0, %s236
      %s239 = sphi 0, %s238
      %s253 = sphi 0, %s239
      %s257 = sphi 0, %s257
      %s259 = sphi 0, %s257
      %s260 = sphi 0, %s259
      %s274 = sphi 0, %s260
      %s278 = sphi 0, %s278
      %s280 = sphi 0, %s278
      %s281 = sphi 0, %s280
      %s295 = sphi 0, %s281
      %s299 = sphi 0, %s299
      %s301 = sphi 0, %s299
      %s302 = sphi 0, %s301
      %s316 = sphi 0, %s302
      %s322 = sphi 0, %s324
      %s325 = sphi 0, %s322
      %s326 = sphi 0, %s325
      %s342 = sphi 0, %s326
      %s348 = sphi 0, %s350
      %s351 = sphi 0, %s348
      %s352 = sphi 0, %s351
      %s368 = sphi 0, %s352
    $region4: #{decoder_layer_forward.1} parent=1 // loop_header_branch
      %32 = sbr.rel (%p30) target = $region8
    $region5: #{decoder_layer_forward.1} parent=1 // loop_body
      %s34 = ssub.s32 %s29, 1
      %s35 = ssub.s32 %s29, 2
      %s36 = sadd.s32 %s29, 1
      %s37 = ssub.s32 %s29, %s36
      %p38 = scmp.eq.s32.totalorder %s37, 0
      %s40 = sadd.s32 %s39, 1
      %s41 = scalar_select %p38, %s39, %s40
      %p44 = pneg %p38
      %p45 = scmp.eq.s32.totalorder %s29, 1
      %p46 = por %p44, %p45
      %p47 = scmp.ne.s32.totalorder %s39, %s42
      %p48 = scmp.eq.s32.totalorder %s29, 0
      %p49 = por %p47, %p48
      %p50 = scmp.ne.s32.totalorder %s39, %s42
      %p51 = scmp.eq.s32.totalorder %s34, 1
      %p52 = por %p50, %p51
      %p53 = scmp.ne.s32.totalorder %s42, %s43
      %p54 = scmp.eq.s32.totalorder %s34, 0
      %p55 = por %p53, %p54
      %p56 = scmp.ne.s32.totalorder %s42, %s43
      %p57 = scmp.eq.s32.totalorder %s35, 1
      %p58 = por %p56, %p57
      %p60 = scmp.ne.s32.totalorder %s43, %s59
      %p61 = scmp.eq.s32.totalorder %s35, 0
      %p62 = por %p60, %p61
      %s63 = ssub.s32 %s29, %s36
      %p64 = scmp.eq.s32.totalorder %s63, 0
      %s66 = sadd.s32 %s65, 1
      %s67 = scalar_select %p64, %s65, %s66
      %p70 = pneg %p64
      %p71 = scmp.eq.s32.totalorder %s29, 1
      %p72 = por %p70, %p71
      %p73 = scmp.ne.s32.totalorder %s65, %s68
      %p74 = scmp.eq.s32.totalorder %s29, 0
      %p75 = por %p73, %p74
      %p76 = scmp.ne.s32.totalorder %s65, %s68
      %p77 = scmp.eq.s32.totalorder %s34, 1
      %p78 = por %p76, %p77
      %p79 = scmp.ne.s32.totalorder %s68, %s69
      %p80 = scmp.eq.s32.totalorder %s34, 0
      %p81 = por %p79, %p80
      %p82 = scmp.ne.s32.totalorder %s68, %s69
      %p83 = scmp.eq.s32.totalorder %s35, 1
      %p84 = por %p82, %p83
      %p86 = scmp.ne.s32.totalorder %s69, %s85
      %p87 = scmp.eq.s32.totalorder %s35, 0
      %p88 = por %p86, %p87
      %s90 = sadd.s32 %s89, 1
      %p93 = scmp.eq.s32.totalorder %s29, 1
      %p94 = scmp.ne.s32.totalorder %s89, %s91
      %p95 = scmp.eq.s32.totalorder %s29, 0
      %p96 = por %p94, %p95
      %p97 = scmp.ne.s32.totalorder %s89, %s91
      %p98 = scmp.eq.s32.totalorder %s34, 1
      %p99 = por %p97, %p98
      %p100 = scmp.ne.s32.totalorder %s91, %s92
      %p101 = scmp.eq.s32.totalorder %s34, 0
      %p102 = por %p100, %p101
      %p103 = scmp.ne.s32.totalorder %s91, %s92
      %p104 = scmp.eq.s32.totalorder %s35, 1
      %p105 = por %p103, %p104
      %p107 = scmp.ne.s32.totalorder %s92, %s106
      %p108 = scmp.eq.s32.totalorder %s35, 0
      %p109 = por %p107, %p108
      %s111 = sadd.s32 %s110, 1
      %p114 = scmp.eq.s32.totalorder %s29, 1
      %p115 = scmp.ne.s32.totalorder %s110, %s112
      %p116 = scmp.eq.s32.totalorder %s29, 0
      %p117 = por %p115, %p116
      %p118 = scmp.ne.s32.totalorder %s110, %s112
      %p119 = scmp.eq.s32.totalorder %s34, 1
      %p120 = por %p118, %p119
      %p121 = scmp.ne.s32.totalorder %s112, %s113
      %p122 = scmp.eq.s32.totalorder %s34, 0
      %p123 = por %p121, %p122
      %p124 = scmp.ne.s32.totalorder %s112, %s113
      %p125 = scmp.eq.s32.totalorder %s35, 1
      %p126 = por %p124, %p125
      %p128 = scmp.ne.s32.totalorder %s113, %s127
      %p129 = scmp.eq.s32.totalorder %s35, 0
      %p130 = por %p128, %p129
      %s132 = sadd.s32 %s131, 1
      %p135 = scmp.eq.s32.totalorder %s29, 1
      %p136 = scmp.ne.s32.totalorder %s131, %s133
      %p137 = scmp.eq.s32.totalorder %s29, 0
      %p138 = por %p136, %p137
      %p139 = scmp.ne.s32.totalorder %s131, %s133
      %p140 = scmp.eq.s32.totalorder %s34, 1
      %p141 = por %p139, %p140
      %p142 = scmp.ne.s32.totalorder %s133, %s134
      %p143 = scmp.eq.s32.totalorder %s34, 0
      %p144 = por %p142, %p143
      %p145 = scmp.ne.s32.totalorder %s133, %s134
      %p146 = scmp.eq.s32.totalorder %s35, 1
      %p147 = por %p145, %p146
      %p149 = scmp.ne.s32.totalorder %s134, %s148
      %p150 = scmp.eq.s32.totalorder %s35, 0
      %p151 = por %p149, %p150
      %s153 = sadd.s32 %s152, 1
      %p156 = scmp.eq.s32.totalorder %s29, 1
      %p157 = scmp.ne.s32.totalorder %s152, %s154
      %p158 = scmp.eq.s32.totalorder %s29, 0
      %p159 = por %p157, %p158
      %p160 = scmp.ne.s32.totalorder %s152, %s154
      %p161 = scmp.eq.s32.totalorder %s34, 1
      %p162 = por %p160, %p161
      %p163 = scmp.ne.s32.totalorder %s154, %s155
      %p164 = scmp.eq.s32.totalorder %s34, 0
      %p165 = por %p163, %p164
      %p166 = scmp.ne.s32.totalorder %s154, %s155
      %p167 = scmp.eq.s32.totalorder %s35, 1
      %p168 = por %p166, %p167
      %p170 = scmp.ne.s32.totalorder %s155, %s169
      %p171 = scmp.eq.s32.totalorder %s35, 0
      %p172 = por %p170, %p171
      %s174 = sadd.s32 %s173, 1
      %p177 = scmp.eq.s32.totalorder %s29, 1
      %p178 = scmp.ne.s32.totalorder %s173, %s175
      %p179 = scmp.eq.s32.totalorder %s29, 0
      %p180 = por %p178, %p179
      %p181 = scmp.ne.s32.totalorder %s173, %s175
      %p182 = scmp.eq.s32.totalorder %s34, 1
      %p183 = por %p181, %p182
      %p184 = scmp.ne.s32.totalorder %s175, %s176
      %p185 = scmp.eq.s32.totalorder %s34, 0
      %p186 = por %p184, %p185
      %p187 = scmp.ne.s32.totalorder %s175, %s176
      %p188 = scmp.eq.s32.totalorder %s35, 1
      %p189 = por %p187, %p188
      %p191 = scmp.ne.s32.totalorder %s176, %s190
      %p192 = scmp.eq.s32.totalorder %s35, 0
      %p193 = por %p191, %p192
      %s195 = sadd.s32 %s194, 1
      %p198 = scmp.eq.s32.totalorder %s29, 1
      %p199 = scmp.ne.s32.totalorder %s194, %s196
      %p200 = scmp.eq.s32.totalorder %s29, 0
      %p201 = por %p199, %p200
      %p202 = scmp.ne.s32.totalorder %s194, %s196
      %p203 = scmp.eq.s32.totalorder %s34, 1
      %p204 = por %p202, %p203
      %p205 = scmp.ne.s32.totalorder %s196, %s197
      %p206 = scmp.eq.s32.totalorder %s34, 0
      %p207 = por %p205, %p206
      %p208 = scmp.ne.s32.totalorder %s196, %s197
      %p209 = scmp.eq.s32.totalorder %s35, 1
      %p210 = por %p208, %p209
      %p212 = scmp.ne.s32.totalorder %s197, %s211
      %p213 = scmp.eq.s32.totalorder %s35, 0
      %p214 = por %p212, %p213
      %s216 = sadd.s32 %s215, 1
      %p219 = scmp.eq.s32.totalorder %s29, 1
      %p220 = scmp.ne.s32.totalorder %s215, %s217
      %p221 = scmp.eq.s32.totalorder %s29, 0
      %p222 = por %p220, %p221
      %p223 = scmp.ne.s32.totalorder %s215, %s217
      %p224 = scmp.eq.s32.totalorder %s34, 1
      %p225 = por %p223, %p224
      %p226 = scmp.ne.s32.totalorder %s217, %s218
      %p227 = scmp.eq.s32.totalorder %s34, 0
      %p228 = por %p226, %p227
      %p229 = scmp.ne.s32.totalorder %s217, %s218
      %p230 = scmp.eq.s32.totalorder %s35, 1
      %p231 = por %p229, %p230
      %p233 = scmp.ne.s32.totalorder %s218, %s232
      %p234 = scmp.eq.s32.totalorder %s35, 0
      %p235 = por %p233, %p234
      %s237 = sadd.s32 %s236, 1
      %p240 = scmp.eq.s32.totalorder %s29, 1
      %p241 = scmp.ne.s32.totalorder %s236, %s238
      %p242 = scmp.eq.s32.totalorder %s29, 0
      %p243 = por %p241, %p242
      %p244 = scmp.ne.s32.totalorder %s236, %s238
      %p245 = scmp.eq.s32.totalorder %s34, 1
      %p246 = por %p244, %p245
      %p247 = scmp.ne.s32.totalorder %s238, %s239
      %p248 = scmp.eq.s32.totalorder %s34, 0
      %p249 = por %p247, %p248
      %p250 = scmp.ne.s32.totalorder %s238, %s239
      %p251 = scmp.eq.s32.totalorder %s35, 1
      %p252 = por %p250, %p251
      %p254 = scmp.ne.s32.totalorder %s239, %s253
      %p255 = scmp.eq.s32.totalorder %s35, 0
      %p256 = por %p254, %p255
      %s258 = sadd.s32 %s257, 1
      %p261 = scmp.eq.s32.totalorder %s29, 1
      %p262 = scmp.ne.s32.totalorder %s257, %s259
      %p263 = scmp.eq.s32.totalorder %s29, 0
      %p264 = por %p262, %p263
      %p265 = scmp.ne.s32.totalorder %s257, %s259
      %p266 = scmp.eq.s32.totalorder %s34, 1
      %p267 = por %p265, %p266
      %p268 = scmp.ne.s32.totalorder %s259, %s260
      %p269 = scmp.eq.s32.totalorder %s34, 0
      %p270 = por %p268, %p269
      %p271 = scmp.ne.s32.totalorder %s259, %s260
      %p272 = scmp.eq.s32.totalorder %s35, 1
      %p273 = por %p271, %p272
      %p275 = scmp.ne.s32.totalorder %s260, %s274
      %p276 = scmp.eq.s32.totalorder %s35, 0
      %p277 = por %p275, %p276
      %s279 = sadd.s32 %s278, 1
      %p282 = scmp.eq.s32.totalorder %s29, 1
      %p283 = scmp.ne.s32.totalorder %s278, %s280
      %p284 = scmp.eq.s32.totalorder %s29, 0
      %p285 = por %p283, %p284
      %p286 = scmp.ne.s32.totalorder %s278, %s280
      %p287 = scmp.eq.s32.totalorder %s34, 1
      %p288 = por %p286, %p287
      %p289 = scmp.ne.s32.totalorder %s280, %s281
      %p290 = scmp.eq.s32.totalorder %s34, 0
      %p291 = por %p289, %p290
      %p292 = scmp.ne.s32.totalorder %s280, %s281
      %p293 = scmp.eq.s32.totalorder %s35, 1
      %p294 = por %p292, %p293
      %p296 = scmp.ne.s32.totalorder %s281, %s295
      %p297 = scmp.eq.s32.totalorder %s35, 0
      %p298 = por %p296, %p297
      %s300 = sadd.s32 %s299, 1
      %p303 = scmp.eq.s32.totalorder %s29, 1
      %p304 = scmp.ne.s32.totalorder %s299, %s301
      %p305 = scmp.eq.s32.totalorder %s29, 0
      %p306 = por %p304, %p305
      %p307 = scmp.ne.s32.totalorder %s299, %s301
      %p308 = scmp.eq.s32.totalorder %s34, 1
      %p309 = por %p307, %p308
      %p310 = scmp.ne.s32.totalorder %s301, %s302
      %p311 = scmp.eq.s32.totalorder %s34, 0
      %p312 = por %p310, %p311
      %p313 = scmp.ne.s32.totalorder %s301, %s302
      %p314 = scmp.eq.s32.totalorder %s35, 1
      %p315 = por %p313, %p314
      %p317 = scmp.ne.s32.totalorder %s302, %s316
      %p318 = scmp.eq.s32.totalorder %s35, 0
      %p319 = por %p317, %p318
      %s320 = ssub.s32 %s29, %s36
      %p321 = scmp.eq.s32.totalorder %s320, 0
      %s323 = sadd.s32 %s322, 1
      %s324 = scalar_select %p321, %s322, %s323
      %p327 = pneg %p321
      %p328 = scmp.eq.s32.totalorder %s29, 1
      %p329 = por %p327, %p328
      %p330 = scmp.ne.s32.totalorder %s322, %s325
      %p331 = scmp.eq.s32.totalorder %s29, 0
      %p332 = por %p330, %p331
      %p333 = scmp.ne.s32.totalorder %s322, %s325
      %p334 = scmp.eq.s32.totalorder %s34, 1
      %p335 = por %p333, %p334
      %p336 = scmp.ne.s32.totalorder %s325, %s326
      %p337 = scmp.eq.s32.totalorder %s34, 0
      %p338 = por %p336, %p337
      %p339 = scmp.ne.s32.totalorder %s325, %s326
      %p340 = scmp.eq.s32.totalorder %s35, 1
      %p341 = por %p339, %p340
      %p343 = scmp.ne.s32.totalorder %s326, %s342
      %p344 = scmp.eq.s32.totalorder %s35, 0
      %p345 = por %p343, %p344
      %s346 = ssub.s32 %s29, %s36
      %p347 = scmp.eq.s32.totalorder %s346, 0
      %s349 = sadd.s32 %s348, 1
      %s350 = scalar_select %p347, %s348, %s349
      %p353 = pneg %p347
      %p354 = scmp.eq.s32.totalorder %s29, 1
      %p355 = por %p353, %p354
      %p356 = scmp.ne.s32.totalorder %s348, %s351
      %p357 = scmp.eq.s32.totalorder %s29, 0
      %p358 = por %p356, %p357
      %p359 = scmp.ne.s32.totalorder %s348, %s351
      %p360 = scmp.eq.s32.totalorder %s34, 1
      %p361 = por %p359, %p360
      %p362 = scmp.ne.s32.totalorder %s351, %s352
      %p363 = scmp.eq.s32.totalorder %s34, 0
      %p364 = por %p362, %p363
      %p365 = scmp.ne.s32.totalorder %s351, %s352
      %p366 = scmp.eq.s32.totalorder %s35, 1
      %p367 = por %p365, %p366
      %p369 = scmp.ne.s32.totalorder %s352, %s368
      %p370 = scmp.eq.s32.totalorder %s35, 0
      %p371 = por %p369, %p370
      %p372 = scmp.le.s32.totalorder 1, %s29
      %p373 = scmp.lt.s32.totalorder %s29, 3
      %p374 = pnand %p372, %p373
      %p375 = pneg %p374
      // Predicated region
      $region9: #{decoder_layer_forward.1} parent=5 // pred_check
        _
      $region10: #{decoder_layer_forward.1} parent=5 // pred_check_branch
        %377 = sbr.rel (%p374) target = $region12
      $region11: #{decoder_layer_forward.1} parent=5 // pred_region
        %s378 = ssub.s32 %s29, 1
        // Predicated region
        $region13: #{decoder_layer_forward.1} parent=11 // pred_check
          %p379 = pneg %p102
        $region14: #{decoder_layer_forward.1} parent=11 // pred_check_branch
          %381 = sbr.rel (%p379) target = $region16
        $region15: #{decoder_layer_forward.1} parent=11 // pred_region
          _
        $region16: #{decoder_layer_forward.1} parent=11 // pred_fallthru
          _
        // Predicated region
        $region17: #{decoder_layer_forward.1} parent=11 // pred_check
          %p382 = pneg %p123
        $region18: #{decoder_layer_forward.1} parent=11 // pred_check_branch
          %384 = sbr.rel (%p382) target = $region20
        $region19: #{decoder_layer_forward.1} parent=11 // pred_region
          _
        $region20: #{decoder_layer_forward.1} parent=11 // pred_fallthru
          _
        // Predicated region
        $region21: #{decoder_layer_forward.1} parent=11 // pred_check
          %p385 = pneg %p144
        $region22: #{decoder_layer_forward.1} parent=11 // pred_check_branch
          %387 = sbr.rel (%p385) target = $region24
        $region23: #{decoder_layer_forward.1} parent=11 // pred_region
          %s389 = ssub.s32 32, 32
          %390 = vsyncadd [#allocation6], %s389
          %s392 = sshll.u32 [#allocation5], 4
          %s393 = int_to_ptr.vmem [resolvable:$true] %s392
          %395 = dma.hbm_to_vmem [thread:$0]  %s4, 32, %s393, [#allocation6]
        $region24: #{decoder_layer_forward.1} parent=11 // pred_fallthru
          _
        // Predicated region
        $region25: #{decoder_layer_forward.1} parent=11 // pred_check
          %p396 = pneg %p165
        $region26: #{decoder_layer_forward.1} parent=11 // pred_check_branch
          %398 = sbr.rel (%p396) target = $region28
        $region27: #{decoder_layer_forward.1} parent=11 // pred_region
          _
        $region28: #{decoder_layer_forward.1} parent=11 // pred_fallthru
          _
        // Predicated region
        $region29: #{decoder_layer_forward.1} parent=11 // pred_check
          %p399 = pneg %p186
        $region30: #{decoder_layer_forward.1} parent=11 // pred_check_branch
          %401 = sbr.rel (%p399) target = $region32
        $region31: #{decoder_layer_forward.1} parent=11 // pred_region
          %s403 = ssub.s32 1024, 1024
          %404 = vsyncadd [#allocation6], %s403
          %s405 = sshll.u32 [#allocation7], 4
          %s406 = int_to_ptr.vmem [resolvable:$true] %s405
          %411 = dma.hbm_to_vmem [thread:$0]  %s6, 1024, %s406, [#allocation6], 64, 64, 4
        $region32: #{decoder_layer_forward.1} parent=11 // pred_fallthru
          _
        // Predicated region
        $region33: #{decoder_layer_forward.1} parent=11 // pred_check
          %p412 = pneg %p207
        $region34: #{decoder_layer_forward.1} parent=11 // pred_check_branch
          %414 = sbr.rel (%p412) target = $region36
        $region35: #{decoder_layer_forward.1} parent=11 // pred_region
          %s416 = ssub.s32 1024, 1024
          %417 = vsyncadd [#allocation9], %s416
          %s418 = sshll.u32 [#allocation8], 4
          %s419 = int_to_ptr.vmem [resolvable:$true] %s418
          %424 = dma.hbm_to_vmem [thread:$0]  %s7, 1024, %s419, [#allocation9], 64, 64, 4
        $region36: #{decoder_layer_forward.1} parent=11 // pred_fallthru
          _
        // Predicated region
        $region37: #{decoder_layer_forward.1} parent=11 // pred_check
          %p425 = pneg %p228
        $region38: #{decoder_layer_forward.1} parent=11 // pred_check_branch
          %427 = sbr.rel (%p425) target = $region40
        $region39: #{decoder_layer_forward.1} parent=11 // pred_region
          _
        $region40: #{decoder_layer_forward.1} parent=11 // pred_fallthru
          _
        // Predicated region
        $region41: #{decoder_layer_forward.1} parent=11 // pred_check
          %p428 = pneg %p249
        $region42: #{decoder_layer_forward.1} parent=11 // pred_check_branch
          %430 = sbr.rel (%p428) target = $region44
        $region43: #{decoder_layer_forward.1} parent=11 // pred_region
          %s432 = ssub.s32 1024, 1024
          %433 = vsyncadd [#allocation9], %s432
          %s434 = sshll.u32 [#allocation10], 4
          %s435 = int_to_ptr.vmem [resolvable:$true] %s434
          %440 = dma.hbm_to_vmem [thread:$0]  %s9, 1024, %s435, [#allocation9], 64, 64, 4
        $region44: #{decoder_layer_forward.1} parent=11 // pred_fallthru
          _
        // Predicated region
        $region45: #{decoder_layer_forward.1} parent=11 // pred_check
          %p441 = pneg %p270
        $region46: #{decoder_layer_forward.1} parent=11 // pred_check_branch
          %443 = sbr.rel (%p441) target = $region48
        $region47: #{decoder_layer_forward.1} parent=11 // pred_region
          _
        $region48: #{decoder_layer_forward.1} parent=11 // pred_fallthru
          _
        // Predicated region
        $region49: #{decoder_layer_forward.1} parent=11 // pred_check
          %p444 = pneg %p291
        $region50: #{decoder_layer_forward.1} parent=11 // pred_check_branch
          %446 = sbr.rel (%p444) target = $region52
        $region51: #{decoder_layer_forward.1} parent=11 // pred_region
          _
        $region52: #{decoder_layer_forward.1} parent=11 // pred_fallthru
          _
        // Predicated region
        $region53: #{decoder_layer_forward.1} parent=11 // pred_check
          %p447 = pneg %p312
        $region54: #{decoder_layer_forward.1} parent=11 // pred_check_branch
          %449 = sbr.rel (%p447) target = $region56
        $region55: #{decoder_layer_forward.1} parent=11 // pred_region
          _
        $region56: #{decoder_layer_forward.1} parent=11 // pred_fallthru
          _
      $region12: #{decoder_layer_forward.1} parent=5 // pred_fallthru
        _
      %p450 = scmp.lt.s32.totalorder %s29, 2
      // Predicated region
      $region57: #{decoder_layer_forward.1} parent=5 // pred_check
        %p451 = pneg %p450
      $region58: #{decoder_layer_forward.1} parent=5 // pred_check_branch
        %453 = sbr.rel (%p451) target = $region60
      $region59: #{decoder_layer_forward.1} parent=5 // pred_region
        // Predicated region
        $region61: #{decoder_layer_forward.1} parent=59 // pred_check
          %p454 = pneg %p49
        $region62: #{decoder_layer_forward.1} parent=59 // pred_check_branch
          %456 = sbr.rel (%p454) target = $region64
        $region63: #{decoder_layer_forward.1} parent=59 // pred_region
          %p457 = scmp.lt.s32.totalorder %s29, 1
          %s458 = scalar_select %p457, %s29, 1
          %s459 = smul.addr %s458, 2
          %s460 = smul.addr %s459, 8
          %s461 = scalar_lea.vmem %s0, %s460
        $region64: #{decoder_layer_forward.1} parent=59 // pred_fallthru
          _
        // Predicated region
        $region65: #{decoder_layer_forward.1} parent=59 // pred_check
          %p462 = pneg %p75
        $region66: #{decoder_layer_forward.1} parent=59 // pred_check_branch
          %464 = sbr.rel (%p462) target = $region68
        $region67: #{decoder_layer_forward.1} parent=59 // pred_region
          %s465 = sand.u32 %s65, 1
          %s466 = scalar_lea.sflag [#allocation3], %s465
          %s467 = sand.u32 %s65, 1
          %s468 = smul.addr %s467, 8
          %s469 = scalar_lea.vmem [#allocation2], %s468
          %s471 = ssub.s32 128, 128
          %472 = vsyncadd %s466, %s471
          %s473 = smul.addr %s29, 128
          %s474 = scalar_lea.hbm %s1, %s473
          %s476 = sshll.u32 %s469, 4
          %s477 = int_to_ptr.vmem [resolvable:$true] %s476
          %479 = dma.hbm_to_vmem [thread:$0]  %s474, 128, %s477, %s466
        $region68: #{decoder_layer_forward.1} parent=59 // pred_fallthru
          _
      $region60: #{decoder_layer_forward.1} parent=5 // pred_fallthru
        _
      %p480 = scmp.le.s32.totalorder 1, %s29
      %p481 = scmp.lt.s32.totalorder %s29, 3
      %p482 = pnand %p480, %p481
      %p483 = pneg %p482
      // Predicated region
      $region69: #{decoder_layer_forward.1} parent=5 // pred_check
        _
      $region70: #{decoder_layer_forward.1} parent=5 // pred_check_branch
        %485 = sbr.rel (%p482) target = $region72
      $region71: #{decoder_layer_forward.1} parent=5 // pred_region
        %s486 = ssub.s32 %s29, 1
        %s487 = sand.u32 %s68, 1
        %s488 = scalar_lea.sflag [#allocation3], %s487
        %s489 = sand.u32 %s68, 1
        %s490 = smul.addr %s489, 8
        %s491 = scalar_lea.vmem [#allocation2], %s490
        // Predicated region
        $region73: #{decoder_layer_forward.1} parent=71 // pred_check
          %p492 = pneg %p81
        $region74: #{decoder_layer_forward.1} parent=71 // pred_check_branch
          %494 = sbr.rel (%p492) target = $region76
        $region75: #{decoder_layer_forward.1} parent=71 // pred_region
          %495 = dma.done %s488, 128
        $region76: #{decoder_layer_forward.1} parent=71 // pred_fallthru
          _
        // Predicated region
        $region77: #{decoder_layer_forward.1} parent=71 // pred_check
          %p496 = pneg %p144
        $region78: #{decoder_layer_forward.1} parent=71 // pred_check_branch
          %498 = sbr.rel (%p496) target = $region80
        $region79: #{decoder_layer_forward.1} parent=71 // pred_region
          %499 = dma.done [#allocation6], 32
        $region80: #{decoder_layer_forward.1} parent=71 // pred_fallthru
          _
        // Predicated region
        $region81: #{decoder_layer_forward.1} parent=71 // pred_check
          %p500 = pneg %p186
        $region82: #{decoder_layer_forward.1} parent=71 // pred_check_branch
          %502 = sbr.rel (%p500) target = $region84
        $region83: #{decoder_layer_forward.1} parent=71 // pred_region
          %503 = dma.done [#allocation6], 1024
        $region84: #{decoder_layer_forward.1} parent=71 // pred_fallthru
          _
        // Predicated region
        $region85: #{decoder_layer_forward.1} parent=71 // pred_check
          %p504 = pneg %p207
        $region86: #{decoder_layer_forward.1} parent=71 // pred_check_branch
          %506 = sbr.rel (%p504) target = $region88
        $region87: #{decoder_layer_forward.1} parent=71 // pred_region
          %507 = dma.done [#allocation9], 1024
        $region88: #{decoder_layer_forward.1} parent=71 // pred_fallthru
          _
        // Predicated region
        $region89: #{decoder_layer_forward.1} parent=71 // pred_check
          %p508 = pneg %p249
        $region90: #{decoder_layer_forward.1} parent=71 // pred_check_branch
          %510 = sbr.rel (%p508) target = $region92
        $region91: #{decoder_layer_forward.1} parent=71 // pred_region
          %511 = dma.done [#allocation9], 1024
        $region92: #{decoder_layer_forward.1} parent=71 // pred_fallthru
          _
        %p512 = scmp.lt.s32.totalorder %s34, 1
        %s513 = scalar_select %p512, %s34, 1
        %s514 = smul.addr %s513, 2
        %s515 = smul.addr %s514, 8
        %s516 = scalar_lea.vmem %s0, %s515
        %p517 = pneg %p55
        %p518 = pneg %p52
        %s519 = sand.u32 %s68, 1
        %s520 = scalar_lea.sflag [#allocation3], %s519
        %s521 = sand.u32 %s68, 1
        %s522 = smul.addr %s521, 8
        %s523 = scalar_lea.vmem [#allocation2], %s522
        %p524 = pneg %p81
        %p525 = pneg %p78
        %p526 = pneg %p102
        %p527 = pneg %p99
        %p528 = pneg %p123
        %p529 = pneg %p120
        %p530 = pneg %p144
        %p531 = pneg %p141
        %p532 = pneg %p165
        %p533 = pneg %p162
        %p534 = pneg %p186
        %p535 = pneg %p183
        %p536 = pneg %p207
        %p537 = pneg %p204
        %p538 = pneg %p228
        %p539 = pneg %p225
        %p540 = pneg %p249
        %p541 = pneg %p246
        %p542 = pneg %p270
        %p543 = pneg %p267
        %p544 = pneg %p291
        %p545 = pneg %p288
        %p546 = pneg %p312
        %p547 = pneg %p309
        %p548 = pneg %p338
        %p549 = pneg %p335
        %s550 = sand.u32 %s325, 1
        %s551 = scalar_lea.sflag [#allocation4], %s550
        %s552 = sand.u32 %s325, 1
        %s553 = smul.addr %s552, 16
        %s554 = scalar_lea.vmem [#allocation11], %s553
        %p555 = pneg %p364
        %p556 = pneg %p361
        %p557 = scmp.lt.s32.totalorder %s34, 1
        %s558 = scalar_select %p557, %s34, 1
        %s559 = smul.addr %s558, 2
        %s560 = smul.addr %s559, 8
        %s561 = scalar_lea.vmem %s14, %s560
        %p562 = scmp.lt.s32.totalorder %s34, 1
        %s563 = scalar_select %p562, %s34, 1
        %s564 = smul.addr %s563, 2
        %s565 = smul.addr %s564, 8
        %s566 = scalar_lea.vmem %s0, %s565
        %p567 = scmp.lt.s32.totalorder %s34, 1
        %s568 = scalar_select %p567, %s34, 1
        %s569 = smul.addr %s568, 2
        %s570 = smul.addr %s569, 8
        %s571 = scalar_lea.vmem %s14, %s570
        %v573 = vld [vmem:[%s566] sm:$0xff]
        %v574 = vld [vmem:[%s566 + $0x8] sm:$0xf]
        %v575 = vld [vmem:[%s491] sm:$0xff]
        %v576 = vld [vmem:[#allocation5] sm:$0x3]
        %v577 = vpack.c.bf16 %v574, %v573
        %vm578 = vcmask 31744
        %v580 = vsel %vm578, %v577, 0
        %vm582 = vcmask 1041408
        %v584 = vsel %vm582, %v576, 0
        %586 = vmatprep.subr.bf16.mxu0 0
        %587 = vmatpush1.bf16.msra.mxu0 0
        %588 = vmatprep.subr.bf16.mxu0 0
        %589 = vmatpush1.bf16.msra.mxu0 0
        %590 = vmatprep.subr.bf16.mxu0 0
        %591 = vmatpush1.bf16.msra.mxu0 0
        %592 = vmatprep.subr.bf16.mxu0 0
        %593 = vmatpush1.bf16.msra.mxu0 0
        %594 = vmatprep.subr.bf16.mxu0 0
        %595 = vmatpush1.bf16.msra.mxu0 0
        %596 = vmatprep.subr.bf16.mxu0 0
        %597 = vmatpush1.bf16.msra.mxu0 0
        %598 = vmatprep.subr.bf16.mxu0 0
        %599 = vmatpush1.bf16.msra.mxu0 0
        %600 = vmatprep.subr.bf16.mxu0 0
        %601 = vmatpush1.bf16.msra.mxu0 %v584
        %602 = vmatprep.subr.bf16.mxu0 0
        %603 = vmatpush2.bf16.msra.mxu0 0
        %604 = vmatprep.subr.bf16.mxu0 0
        %605 = vmatpush2.bf16.msra.mxu0 0
        %606 = vmatprep.subr.bf16.mxu0 0
        %607 = vmatpush2.bf16.msra.mxu0 0
        %608 = vmatprep.subr.bf16.mxu0 0
        %609 = vmatpush2.bf16.msra.mxu0 0
        %610 = vmatprep.subr.bf16.mxu0 0
        %611 = vmatpush2.bf16.msra.mxu0 0
        %612 = vmatprep.subr.bf16.mxu0 0
        %613 = vmatpush2.bf16.msra.mxu0 0
        %614 = vmatprep.subr.bf16.mxu0 0
        %615 = vmatpush2.bf16.msra.mxu0 0
        %616 = vmatprep.subr.bf16.mxu0 0
        %617 = vmatpush2.bf16.msra.mxu0 0
        %618 = vmatprep.mubr.bf16.mxu0 0
        %619 = vmatmul.mubr.bf16.gmra.mxu0 %v580
        %v620 = vpop.f32.mrf.mxu0
        %v621 = vadd.f32 0.0, %v620
        %v622 = vpop.f32.mrf.mxu0
        %v623 = vpop.f32.mrf.mxu0
        %v624 = vadd.f32 0.0, %v623
        %v625 = vpop.f32.mrf.mxu0
        %626 = vdwg.mxu0
        %v627 = vld [vmem:[%s2] sm:$0xff]
        %v628 = vld [vmem:[%s2 + $0x8] sm:$0xff]
        %vm629 = vcmask 97280
        %v631 = vsel %vm629, %v627, 0
        %v634 = vsel %vm629, %v628, 0
        %vm636 = vcmask 1043456
        %v638 = vsel %vm636, %v624, 0
        %640 = vmatprep.subr.mxu0 0.0
        %641 = vmatpush1.msra.mxu0 0.0
        %642 = vmatprep.subr.mxu0 0.0
        %643 = vmatpush1.msra.mxu0 0.0
        %644 = vmatprep.subr.mxu0 0.0
        %645 = vmatpush1.msra.mxu0 0.0
        %646 = vmatprep.subr.mxu0 0.0
        %647 = vmatpush1.msra.mxu0 0.0
        %648 = vmatprep.subr.mxu0 0.0
        %649 = vmatpush1.msra.mxu0 0.0
        %650 = vmatprep.subr.mxu0 0.0
        %651 = vmatpush1.msra.mxu0 0.0
        %652 = vmatprep.subr.mxu0 0.0
        %653 = vmatpush1.msra.mxu0 0.0
        %654 = vmatprep.subr.mxu0 0.0
        %655 = vmatpush1.msra.mxu0 0.0
        %656 = vmatprep.subr.mxu0 0.0
        %657 = vmatpush1.msra.mxu0 0.0
        %658 = vmatprep.subr.mxu0 0.0
        %659 = vmatpush1.msra.mxu0 0.0
        %660 = vmatprep.subr.mxu0 0.0
        %661 = vmatpush1.msra.mxu0 0.0
        %662 = vmatprep.subr.mxu0 0.0
        %663 = vmatpush1.msra.mxu0 0.0
        %664 = vmatprep.subr.mxu0 0.0
        %665 = vmatpush1.msra.mxu0 0.0
        %666 = vmatprep.subr.mxu0 0.0
        %667 = vmatpush1.msra.mxu0 0.0
        %668 = vmatprep.subr.mxu0 0.0
        %669 = vmatpush1.msra.mxu0 %v638
        %670 = vmatprep.subr.mxu0 0.0
        %671 = vmatpush1.msra.mxu0 %v621
        %672 = vmatprep.subr.mxu0 0.0
        %673 = vmatpush2.msra.mxu0 0.0
        %674 = vmatprep.subr.mxu0 0.0
        %675 = vmatpush2.msra.mxu0 0.0
        %676 = vmatprep.subr.mxu0 0.0
        %677 = vmatpush2.msra.mxu0 0.0
        %678 = vmatprep.subr.mxu0 0.0
        %679 = vmatpush2.msra.mxu0 0.0
        %680 = vmatprep.subr.mxu0 0.0
        %681 = vmatpush2.msra.mxu0 0.0
        %682 = vmatprep.subr.mxu0 0.0
        %683 = vmatpush2.msra.mxu0 0.0
        %684 = vmatprep.subr.mxu0 0.0
        %685 = vmatpush2.msra.mxu0 0.0
        %686 = vmatprep.subr.mxu0 0.0
        %687 = vmatpush2.msra.mxu0 0.0
        %688 = vmatprep.subr.mxu0 0.0
        %689 = vmatpush2.msra.mxu0 0.0
        %690 = vmatprep.subr.mxu0 0.0
        %691 = vmatpush2.msra.mxu0 0.0
        %692 = vmatprep.subr.mxu0 0.0
        %693 = vmatpush2.msra.mxu0 0.0
        %694 = vmatprep.subr.mxu0 0.0
        %695 = vmatpush2.msra.mxu0 0.0
        %696 = vmatprep.subr.mxu0 0.0
        %697 = vmatpush2.msra.mxu0 0.0
        %698 = vmatprep.subr.mxu0 0.0
        %699 = vmatpush2.msra.mxu0 0.0
        %700 = vmatprep.subr.mxu0 0.0
        %701 = vmatpush2.msra.mxu0 0.0
        %702 = vmatprep.subr.mxu0 0.0
        %703 = vmatpush2.msra.mxu0 0.0
        %704 = vmatprep.mubr.f32.mxu0 0.0
        %705 = vmatmul.mubr.f32.gmra.mxu0 %v631
        %v706 = vpop.f32.mrf.mxu0
        %v707 = vadd.f32 0.0, %v706
        %v708 = vpop.f32.mrf.mxu0
        %709 = vmatprep.mubr.f32.mxu0 0.0
        %710 = vmatmul.mubr.f32.gmra.mxu0 %v634
        %v711 = vpop.f32.mrf.mxu0
        %v712 = vadd.f32 0.0, %v711
        %v713 = vpop.f32.mrf.mxu0
        %714 = vdwg.mxu0
        %s715 = scalar_lea.vmem %s2, 16
        %v716 = vld [vmem:[%s715] sm:$0xff]
        %v717 = vld [vmem:[%s715 + $0x8] sm:$0xff]
        %v719 = vsel %vm629, %v716, 0
        %v722 = vsel %vm629, %v717, 0
        %v725 = vsel %vm636, %v574, 0
        %727 = vmatprep.subr.mxu0 0.0
        %728 = vmatpush1.msra.mxu0 0.0
        %729 = vmatprep.subr.mxu0 0.0
        %730 = vmatpush1.msra.mxu0 0.0
        %731 = vmatprep.subr.mxu0 0.0
        %732 = vmatpush1.msra.mxu0 0.0
        %733 = vmatprep.subr.mxu0 0.0
        %734 = vmatpush1.msra.mxu0 0.0
        %735 = vmatprep.subr.mxu0 0.0
        %736 = vmatpush1.msra.mxu0 0.0
        %737 = vmatprep.subr.mxu0 0.0
        %738 = vmatpush1.msra.mxu0 0.0
        %739 = vmatprep.subr.mxu0 0.0
        %740 = vmatpush1.msra.mxu0 0.0
        %741 = vmatprep.subr.mxu0 0.0
        %742 = vmatpush1.msra.mxu0 0.0
        %743 = vmatprep.subr.mxu0 0.0
        %744 = vmatpush1.msra.mxu0 0.0
        %745 = vmatprep.subr.mxu0 0.0
        %746 = vmatpush1.msra.mxu0 0.0
        %747 = vmatprep.subr.mxu0 0.0
        %748 = vmatpush1.msra.mxu0 0.0
        %749 = vmatprep.subr.mxu0 0.0
        %750 = vmatpush1.msra.mxu0 0.0
        %751 = vmatprep.subr.mxu0 0.0
        %752 = vmatpush1.msra.mxu0 0.0
        %753 = vmatprep.subr.mxu0 0.0
        %754 = vmatpush1.msra.mxu0 0.0
        %755 = vmatprep.subr.mxu0 0.0
        %756 = vmatpush1.msra.mxu0 %v725
        %757 = vmatprep.subr.mxu0 0.0
        %758 = vmatpush1.msra.mxu0 %v573
        %759 = vmatprep.subr.mxu0 0.0
        %760 = vmatpush2.msra.mxu0 0.0
        %761 = vmatprep.subr.mxu0 0.0
        %762 = vmatpush2.msra.mxu0 0.0
        %763 = vmatprep.subr.mxu0 0.0
        %764 = vmatpush2.msra.mxu0 0.0
        %765 = vmatprep.subr.mxu0 0.0
        %766 = vmatpush2.msra.mxu0 0.0
        %767 = vmatprep.subr.mxu0 0.0
        %768 = vmatpush2.msra.mxu0 0.0
        %769 = vmatprep.subr.mxu0 0.0
        %770 = vmatpush2.msra.mxu0 0.0
        %771 = vmatprep.subr.mxu0 0.0
        %772 = vmatpush2.msra.mxu0 0.0
        %773 = vmatprep.subr.mxu0 0.0
        %774 = vmatpush2.msra.mxu0 0.0
        %775 = vmatprep.subr.mxu0 0.0
        %776 = vmatpush2.msra.mxu0 0.0
        %777 = vmatprep.subr.mxu0 0.0
        %778 = vmatpush2.msra.mxu0 0.0
        %779 = vmatprep.subr.mxu0 0.0
        %780 = vmatpush2.msra.mxu0 0.0
        %781 = vmatprep.subr.mxu0 0.0
        %782 = vmatpush2.msra.mxu0 0.0
        %783 = vmatprep.subr.mxu0 0.0
        %784 = vmatpush2.msra.mxu0 0.0
        %785 = vmatprep.subr.mxu0 0.0
        %786 = vmatpush2.msra.mxu0 0.0
        %787 = vmatprep.subr.mxu0 0.0
        %788 = vmatpush2.msra.mxu0 0.0
        %789 = vmatprep.subr.mxu0 0.0
        %790 = vmatpush2.msra.mxu0 0.0
        %791 = vmatprep.mubr.f32.mxu0 0.0
        %792 = vmatmul.mubr.f32.gmra.mxu0 %v719
        %v793 = vpop.f32.mrf.mxu0
        %v794 = vadd.f32 0.0, %v793
        %v795 = vpop.f32.mrf.mxu0
        %796 = vmatprep.mubr.f32.mxu0 0.0
        %797 = vmatmul.mubr.f32.gmra.mxu0 %v722
        %v798 = vpop.f32.mrf.mxu0
        %v799 = vadd.f32 0.0, %v798
        %v800 = vpop.f32.mrf.mxu0
        %801 = vdwg.mxu0
        %v802 = vld [vmem:[%s5] sm:$0xff]
        %v803 = vld [vmem:[%s5 + $0x8] sm:$0xf]
        %v804 = vld [vmem:[%s5 + $0xc] sm:$0xff]
        %v805 = vld [vmem:[%s5 + $0x14] sm:$0xf]
        %v806 = vld [vmem:[%s5 + $0x18] sm:$0xff]
        %v807 = vld [vmem:[%s5 + $0x20] sm:$0xf]
        %v808 = vld [vmem:[%s5 + $0x24] sm:$0xff]
        %v809 = vld [vmem:[%s5 + $0x2c] sm:$0xf]
        %v810 = vld [vmem:[%s5 + $0x30] sm:$0xff]
        %v811 = vld [vmem:[%s5 + $0x38] sm:$0xf]
        %v812 = vld [vmem:[%s5 + $0x3c] sm:$0xff]
        %v813 = vld [vmem:[%s5 + $0x44] sm:$0xf]
        %v814 = vld [vmem:[%s5 + $0x48] sm:$0xff]
        %v815 = vld [vmem:[%s5 + $0x50] sm:$0xf]
        %v816 = vld [vmem:[%s5 + $0x54] sm:$0xff]
        %v817 = vld [vmem:[%s5 + $0x5c] sm:$0xf]
        %v818 = vld [vmem:[%s5 + $0x60] sm:$0xff]
        %v819 = vld [vmem:[%s5 + $0x68] sm:$0xf]
        %v820 = vld [vmem:[%s5 + $0x6c] sm:$0xff]
        %v821 = vld [vmem:[%s5 + $0x74] sm:$0xf]
        %v822 = vld [vmem:[%s5 + $0x78] sm:$0xff]
        %v823 = vld [vmem:[%s5 + $0x80] sm:$0xf]
        %v824 = vld [vmem:[%s5 + $0x84] sm:$0xff]
        %v825 = vld [vmem:[%s5 + $0x8c] sm:$0xf]
        %v826 = vld [vmem:[%s5 + $0x90] sm:$0xff]
        %v827 = vld [vmem:[%s5 + $0x98] sm:$0xf]
        %v828 = vld [vmem:[%s5 + $0x9c] sm:$0xff]
        %v829 = vld [vmem:[%s5 + $0xa4] sm:$0xf]
        %v830 = vld [vmem:[%s5 + $0xa8] sm:$0xff]
        %v831 = vld [vmem:[%s5 + $0xb0] sm:$0xf]
        %v832 = vld [vmem:[%s5 + $0xb4] sm:$0xff]
        %v833 = vld [vmem:[%s5 + $0xbc] sm:$0xf]
        %v834 = vpack.c.bf16 %v712, %v707
        %v867 = vunpack.c.l.b16 %v802
        %v868 = vunpack.c.h.b16 %v802
        %v869 = vunpack.c.l.b16 %v803
        %v870 = vunpack.c.l.b16 %v804
        %v871 = vunpack.c.h.b16 %v804
        %v872 = vunpack.c.l.b16 %v805
        %v873 = vunpack.c.l.b16 %v806
        %v874 = vunpack.c.h.b16 %v806
        %v875 = vunpack.c.l.b16 %v807
        %v876 = vunpack.c.l.b16 %v808
        %v877 = vunpack.c.h.b16 %v808
        %v878 = vunpack.c.l.b16 %v809
        %v879 = vunpack.c.l.b16 %v810
        %v880 = vunpack.c.h.b16 %v810
        %v881 = vunpack.c.l.b16 %v811
        %v882 = vunpack.c.l.b16 %v812
        %v883 = vunpack.c.h.b16 %v812
        %v884 = vunpack.c.l.b16 %v813
        %v885 = vunpack.c.l.b16 %v814
        %v886 = vunpack.c.h.b16 %v814
        %v887 = vunpack.c.l.b16 %v815
        %v888 = vunpack.c.l.b16 %v816
        %v889 = vunpack.c.h.b16 %v816
        %v890 = vunpack.c.l.b16 %v817
        %v891 = vunpack.c.l.b16 %v818
        %v892 = vunpack.c.h.b16 %v818
        %v893 = vunpack.c.l.b16 %v819
        %v894 = vunpack.c.l.b16 %v820
        %v895 = vunpack.c.h.b16 %v820
        %v896 = vunpack.c.l.b16 %v821
        %v897 = vunpack.c.l.b16 %v822
        %v898 = vunpack.c.h.b16 %v822
        %v899 = vunpack.c.l.b16 %v823
        %v900 = vunpack.c.l.b16 %v824
        %v901 = vunpack.c.h.b16 %v824
        %v902 = vunpack.c.l.b16 %v825
        %v903 = vunpack.c.l.b16 %v826
        %v904 = vunpack.c.h.b16 %v826
        %v905 = vunpack.c.l.b16 %v827
        %v906 = vunpack.c.l.b16 %v828
        %v907 = vunpack.c.h.b16 %v828
        %v908 = vunpack.c.l.b16 %v829
        %v909 = vunpack.c.l.b16 %v830
        %v910 = vunpack.c.h.b16 %v830
        %v911 = vunpack.c.l.b16 %v831
        %v912 = vunpack.c.l.b16 %v832
        %v913 = vunpack.c.h.b16 %v832
        %v914 = vunpack.c.l.b16 %v833
        %v915 = vpack.c.b16 %v870, %v867
        %v916 = vpack.c.b16 %v871, %v868
        %v917 = vpack.c.b16 %v872, %v869
        %v918 = vpack.c.b16 %v876, %v873
        %v919 = vpack.c.b16 %v877, %v874
        %v920 = vpack.c.b16 %v878, %v875
        %v921 = vpack.c.b16 %v882, %v879
        %v922 = vpack.c.b16 %v883, %v880
        %v923 = vpack.c.b16 %v884, %v881
        %v924 = vpack.c.b16 %v888, %v885
        %v925 = vpack.c.b16 %v889, %v886
        %v926 = vpack.c.b16 %v890, %v887
        %v927 = vpack.c.b16 %v894, %v891
        %v928 = vpack.c.b16 %v895, %v892
        %v929 = vpack.c.b16 %v896, %v893
        %v930 = vpack.c.b16 %v900, %v897
        %v931 = vpack.c.b16 %v901, %v898
        %v932 = vpack.c.b16 %v902, %v899
        %v933 = vpack.c.b16 %v906, %v903
        %v934 = vpack.c.b16 %v907, %v904
        %v935 = vpack.c.b16 %v908, %v905
        %v936 = vpack.c.b16 %v912, %v909
        %v937 = vpack.c.b16 %v913, %v910
        %v938 = vpack.c.b16 %v914, %v911
        %963 = vmatprep.subr.bf16.mxu0 %v937
        %964 = vmatpush1.bf16.msra.mxu0 %v936
        %965 = vmatprep.subr.bf16.mxu0 %v934
        %966 = vmatpush1.bf16.msra.mxu0 %v933
        %967 = vmatprep.subr.bf16.mxu0 %v931
        %968 = vmatpush1.bf16.msra.mxu0 %v930
        %969 = vmatprep.subr.bf16.mxu0 %v928
        %970 = vmatpush1.bf16.msra.mxu0 %v927
        %971 = vmatprep.subr.bf16.mxu0 %v925
        %972 = vmatpush1.bf16.msra.mxu0 %v924
        %973 = vmatprep.subr.bf16.mxu0 %v922
        %974 = vmatpush1.bf16.msra.mxu0 %v921
        %975 = vmatprep.subr.bf16.mxu0 %v919
        %976 = vmatpush1.bf16.msra.mxu0 %v918
        %977 = vmatprep.subr.bf16.mxu0 %v916
        %978 = vmatpush1.bf16.msra.mxu0 %v915
        %979 = vmatprep.subr.bf16.mxu0 0
        %980 = vmatpush2.bf16.msra.mxu0 0
        %981 = vmatprep.subr.bf16.mxu0 0
        %982 = vmatpush2.bf16.msra.mxu0 0
        %983 = vmatprep.subr.bf16.mxu0 0
        %984 = vmatpush2.bf16.msra.mxu0 0
        %985 = vmatprep.subr.bf16.mxu0 0
        %986 = vmatpush2.bf16.msra.mxu0 0
        %987 = vmatprep.subr.bf16.mxu0 0
        %988 = vmatpush2.bf16.msra.mxu0 0
        %989 = vmatprep.subr.bf16.mxu0 0
        %990 = vmatpush2.bf16.msra.mxu0 0
        %991 = vmatprep.subr.bf16.mxu0 0
        %992 = vmatpush2.bf16.msra.mxu0 0
        %993 = vmatprep.subr.bf16.mxu0 0
        %994 = vmatpush2.bf16.msra.mxu0 0
        %995 = vmatprep.mubr.bf16.mxu0 0
        %996 = vmatmul.mubr.bf16.gmra.mxu0 %v834
        %v997 = vpop.f32.mrf.mxu0
        %v998 = vadd.f32 0.0, %v997
        %v999 = vpop.f32.mrf.mxu0
        %v1000 = vadd.f32 0.0, %v999
        %v1001 = vpop.f32.mrf.mxu0
        %v1002 = vadd.f32 0.0, %v1001
        %v1003 = vpop.f32.mrf.mxu0
        %v1004 = vadd.f32 0.0, %v1003
        %1005 = vdwg.mxu0
        %1006 = vmatprep.subr.bf16.mxu0 0
        %1007 = vmatpush1.bf16.msra.mxu0 %v938
        %1008 = vmatprep.subr.bf16.mxu0 0
        %1009 = vmatpush1.bf16.msra.mxu0 %v935
        %1010 = vmatprep.subr.bf16.mxu0 0
        %1011 = vmatpush1.bf16.msra.mxu0 %v932
        %1012 = vmatprep.subr.bf16.mxu0 0
        %1013 = vmatpush1.bf16.msra.mxu0 %v929
        %1014 = vmatprep.subr.bf16.mxu0 0
        %1015 = vmatpush1.bf16.msra.mxu0 %v926
        %1016 = vmatprep.subr.bf16.mxu0 0
        %1017 = vmatpush1.bf16.msra.mxu0 %v923
        %1018 = vmatprep.subr.bf16.mxu0 0
        %1019 = vmatpush1.bf16.msra.mxu0 %v920
        %1020 = vmatprep.subr.bf16.mxu0 0
        %1021 = vmatpush1.bf16.msra.mxu0 %v917
        %1022 = vmatprep.subr.bf16.mxu0 0
        %1023 = vmatpush2.bf16.msra.mxu0 0
        %1024 = vmatprep.subr.bf16.mxu0 0
        %1025 = vmatpush2.bf16.msra.mxu0 0
        %1026 = vmatprep.subr.bf16.mxu0 0
        %1027 = vmatpush2.bf16.msra.mxu0 0
        %1028 = vmatprep.subr.bf16.mxu0 0
        %1029 = vmatpush2.bf16.msra.mxu0 0
        %1030 = vmatprep.subr.bf16.mxu0 0
        %1031 = vmatpush2.bf16.msra.mxu0 0
        %1032 = vmatprep.subr.bf16.mxu0 0
        %1033 = vmatpush2.bf16.msra.mxu0 0
        %1034 = vmatprep.subr.bf16.mxu0 0
        %1035 = vmatpush2.bf16.msra.mxu0 0
        %1036 = vmatprep.subr.bf16.mxu0 0
        %1037 = vmatpush2.bf16.msra.mxu0 0
        %1038 = vmatprep.mubr.bf16.mxu0 0
        %1039 = vmatmul.mubr.bf16.gmra.mxu0 %v834
        %v1040 = vpop.f32.mrf.mxu0
        %v1041 = vadd.f32 0.0, %v1040
        %v1042 = vpop.f32.mrf.mxu0
        %v1043 = vpop.f32.mrf.mxu0
        %v1044 = vadd.f32 0.0, %v1043
        %v1045 = vpop.f32.mrf.mxu0
        %1046 = vdwg.mxu0
        %v1047 = vmul.f32 %v998, 0.088388346
        %v1048 = vmul.f32 %v1002, 0.088388346
        %v1049 = vpack.c.bf16 %v1048, %v1047
        %v1050 = vpack.c.bf16 %v1004, %v1000
        %1051 = vmatprep.subr.bf16.mxu0 0
        %1052 = vmatpush1.bf16.xpose.msra.mxu0 0
        %1053 = vmatprep.subr.bf16.mxu0 0
        %1054 = vmatpush1.bf16.xpose.msra.mxu0 0
        %1055 = vmatprep.subr.bf16.mxu0 0
        %1056 = vmatpush1.bf16.xpose.msra.mxu0 0
        %1057 = vmatprep.subr.bf16.mxu0 0
        %1058 = vmatpush1.bf16.xpose.msra.mxu0 0
        %1059 = vmatprep.subr.bf16.mxu0 0
        %1060 = vmatpush1.bf16.xpose.msra.mxu0 0
        %1061 = vmatprep.subr.bf16.mxu0 0
        %1062 = vmatpush1.bf16.xpose.msra.mxu0 0
        %1063 = vmatprep.subr.bf16.mxu0 0
        %1064 = vmatpush1.bf16.xpose.msra.mxu0 0
        %1065 = vmatprep.subr.bf16.mxu0 0
        %1066 = vmatpush1.bf16.xpose.msra.mxu0 %v1050
        %1067 = vmatprep.subr.bf16.mxu0 0
        %1068 = vmatpush2.bf16.xpose.msra.mxu0 0
        %1069 = vmatprep.subr.bf16.mxu0 0
        %1070 = vmatpush2.bf16.xpose.msra.mxu0 0
        %1071 = vmatprep.subr.bf16.mxu0 0
        %1072 = vmatpush2.bf16.xpose.msra.mxu0 0
        %1073 = vmatprep.subr.bf16.mxu0 0
        %1074 = vmatpush2.bf16.xpose.msra.mxu0 0
        %1075 = vmatprep.subr.bf16.mxu0 0
        %1076 = vmatpush2.bf16.xpose.msra.mxu0 0
        %1077 = vmatprep.subr.bf16.mxu0 0
        %1078 = vmatpush2.bf16.xpose.msra.mxu0 0
        %1079 = vmatprep.subr.bf16.mxu0 0
        %1080 = vmatpush2.bf16.xpose.msra.mxu0 0
        %1081 = vmatprep.subr.bf16.mxu0 0
        %1082 = vmatpush2.bf16.xpose.msra.mxu0 0
        %1083 = vmatprep.mubr.bf16.mxu0 0
        %1084 = vmatmul.mubr.bf16.gmra.mxu0 %v1049
        %v1085 = vpop.f32.mrf.mxu0
        %v1086 = vadd.f32 0.0, %v1085
        %v1087 = vpop.f32.mrf.mxu0
        %v1088 = vpop.f32.mrf.mxu0
        %v1089 = vadd.f32 0.0, %v1088
        %v1090 = vpop.f32.mrf.mxu0
        %1091 = vdwg.mxu0
        %vm1092 = vcmask 130048
        %v1093 = vsel %vm1092, %v1086, -inf
        %1094 = vmax.xlane.f32.xlu0 %v1093
        %v1095 = vpop.xlane.xlu0 %1094
        %v1096 = vsel %vm1092, %v1089, -inf
        %1097 = vmax.xlane.f32.xlu0 %v1096
        %v1098 = vpop.xlane.xlu0 %1097
        %v1099 = vsub.f32 %v1086, %v1095
        %v1100 = vsub.f32 %v1089, %v1098
        %v1101 = vmul.f32 %v1099, 1.442695
        %v1102 = vpow.pop %v1101
        %v1103 = vmul.f32 %v1100, 1.442695
        %v1104 = vpow.pop %v1103
        %v1105 = vsel %vm1092, %v1102, 0.0
        %1106 = vadd.xlane.f32.xlu0 %v1105
        %v1107 = vpop.xlane.xlu0 %1106
        %v1108 = vsel %vm1092, %v1104, 0.0
        %1109 = vadd.xlane.f32.xlu0 %v1108
        %v1110 = vpop.xlane.xlu0 %1109
        %v1111 = vrcp.pop %v1107
        %v1112 = vrcp.pop %v1110
        %v1113 = vmul.f32 %v1102, %v1111
        %v1114 = vmul.f32 %v1104, %v1112
        %v1115 = vpack.c.bf16 %v1114, %v1113
        %v1116 = vpack.c.bf16 %v1044, %v1041
        %v1118 = vsel %vm1092, %v1115, 0
        %1120 = vmatprep.subr.bf16.mxu0 0
        %1121 = vmatpush1.bf16.msra.mxu0 0
        %1122 = vmatprep.subr.bf16.mxu0 0
        %1123 = vmatpush1.bf16.msra.mxu0 0
        %1124 = vmatprep.subr.bf16.mxu0 0
        %1125 = vmatpush1.bf16.msra.mxu0 0
        %1126 = vmatprep.subr.bf16.mxu0 0
        %1127 = vmatpush1.bf16.msra.mxu0 0
        %1128 = vmatprep.subr.bf16.mxu0 0
        %1129 = vmatpush1.bf16.msra.mxu0 0
        %1130 = vmatprep.subr.bf16.mxu0 0
        %1131 = vmatpush1.bf16.msra.mxu0 0
        %1132 = vmatprep.subr.bf16.mxu0 0
        %1133 = vmatpush1.bf16.msra.mxu0 0
        %1134 = vmatprep.subr.bf16.mxu0 0
        %1135 = vmatpush1.bf16.msra.mxu0 %v1116
        %1136 = vmatprep.subr.bf16.mxu0 0
        %1137 = vmatpush2.bf16.msra.mxu0 0
        %1138 = vmatprep.subr.bf16.mxu0 0
        %1139 = vmatpush2.bf16.msra.mxu0 0
        %1140 = vmatprep.subr.bf16.mxu0 0
        %1141 = vmatpush2.bf16.msra.mxu0 0
        %1142 = vmatprep.subr.bf16.mxu0 0
        %1143 = vmatpush2.bf16.msra.mxu0 0
        %1144 = vmatprep.subr.bf16.mxu0 0
        %1145 = vmatpush2.bf16.msra.mxu0 0
        %1146 = vmatprep.subr.bf16.mxu0 0
        %1147 = vmatpush2.bf16.msra.mxu0 0
        %1148 = vmatprep.subr.bf16.mxu0 0
        %1149 = vmatpush2.bf16.msra.mxu0 0
        %1150 = vmatprep.subr.bf16.mxu0 0
        %1151 = vmatpush2.bf16.msra.mxu0 0
        %1152 = vmatprep.mubr.bf16.mxu0 0
        %1153 = vmatmul.mubr.bf16.gmra.mxu0 %v1118
        %v1154 = vpop.f32.mrf.mxu0
        %v1155 = vadd.f32 0.0, %v1154
        %v1156 = vpop.f32.mrf.mxu0
        %v1157 = vpop.f32.mrf.mxu0
        %v1158 = vadd.f32 0.0, %v1157
        %v1159 = vpop.f32.mrf.mxu0
        %1160 = vdwg.mxu0
        %v1161 = vld [vmem:[#allocation7] sm:$0xf]
        %v1162 = vld [vmem:[#allocation7 + $0x4] sm:$0xf]
        %v1163 = vld [vmem:[#allocation7 + $0x8] sm:$0xf]
        %v1164 = vld [vmem:[#allocation7 + $0xc] sm:$0xf]
        %v1165 = vld [vmem:[#allocation7 + $0x10] sm:$0xf]
        %v1166 = vld [vmem:[#allocation7 + $0x14] sm:$0xf]
        %v1167 = vld [vmem:[#allocation7 + $0x18] sm:$0xf]
        %v1168 = vld [vmem:[#allocation7 + $0x1c] sm:$0xf]
        %v1169 = vld [vmem:[#allocation7 + $0x20] sm:$0xf]
        %v1170 = vld [vmem:[#allocation7 + $0x24] sm:$0xf]
        %v1171 = vld [vmem:[#allocation7 + $0x28] sm:$0xf]
        %v1172 = vld [vmem:[#allocation7 + $0x2c] sm:$0xf]
        %v1173 = vld [vmem:[#allocation7 + $0x30] sm:$0xf]
        %v1174 = vld [vmem:[#allocation7 + $0x34] sm:$0xf]
        %v1175 = vld [vmem:[#allocation7 + $0x38] sm:$0xf]
        %v1176 = vld [vmem:[#allocation7 + $0x3c] sm:$0xf]
        %v1177 = vpack.c.bf16 %v1158, %v1155
        %v1194 = vunpack.c.l.b16 %v1161
        %v1195 = vunpack.c.l.b16 %v1162
        %v1196 = vunpack.c.l.b16 %v1163
        %v1197 = vunpack.c.l.b16 %v1164
        %v1198 = vunpack.c.l.b16 %v1165
        %v1199 = vunpack.c.l.b16 %v1166
        %v1200 = vunpack.c.l.b16 %v1167
        %v1201 = vunpack.c.l.b16 %v1168
        %v1202 = vunpack.c.l.b16 %v1169
        %v1203 = vunpack.c.l.b16 %v1170
        %v1204 = vunpack.c.l.b16 %v1171
        %v1205 = vunpack.c.l.b16 %v1172
        %v1206 = vunpack.c.l.b16 %v1173
        %v1207 = vunpack.c.l.b16 %v1174
        %v1208 = vunpack.c.l.b16 %v1175
        %v1209 = vunpack.c.l.b16 %v1176
        %v1210 = vpack.c.b16 %v1195, %v1194
        %v1211 = vpack.c.b16 %v1197, %v1196
        %v1212 = vpack.c.b16 %v1199, %v1198
        %v1213 = vpack.c.b16 %v1201, %v1200
        %v1214 = vpack.c.b16 %v1203, %v1202
        %v1215 = vpack.c.b16 %v1205, %v1204
        %v1216 = vpack.c.b16 %v1207, %v1206
        %v1217 = vpack.c.b16 %v1209, %v1208
        %1226 = vmatprep.subr.bf16.mxu0 0
        %1227 = vmatpush1.bf16.msra.mxu0 %v1217
        %1228 = vmatprep.subr.bf16.mxu0 0
        %1229 = vmatpush1.bf16.msra.mxu0 %v1216
        %1230 = vmatprep.subr.bf16.mxu0 0
        %1231 = vmatpush1.bf16.msra.mxu0 %v1215
        %1232 = vmatprep.subr.bf16.mxu0 0
        %1233 = vmatpush1.bf16.msra.mxu0 %v1214
        %1234 = vmatprep.subr.bf16.mxu0 0
        %1235 = vmatpush1.bf16.msra.mxu0 %v1213
        %1236 = vmatprep.subr.bf16.mxu0 0
        %1237 = vmatpush1.bf16.msra.mxu0 %v1212
        %1238 = vmatprep.subr.bf16.mxu0 0
        %1239 = vmatpush1.bf16.msra.mxu0 %v1211
        %1240 = vmatprep.subr.bf16.mxu0 0
        %1241 = vmatpush1.bf16.msra.mxu0 %v1210
        %1242 = vmatprep.subr.bf16.mxu0 0
        %1243 = vmatpush2.bf16.msra.mxu0 0
        %1244 = vmatprep.subr.bf16.mxu0 0
        %1245 = vmatpush2.bf16.msra.mxu0 0
        %1246 = vmatprep.subr.bf16.mxu0 0
        %1247 = vmatpush2.bf16.msra.mxu0 0
        %1248 = vmatprep.subr.bf16.mxu0 0
        %1249 = vmatpush2.bf16.msra.mxu0 0
        %1250 = vmatprep.subr.bf16.mxu0 0
        %1251 = vmatpush2.bf16.msra.mxu0 0
        %1252 = vmatprep.subr.bf16.mxu0 0
        %1253 = vmatpush2.bf16.msra.mxu0 0
        %1254 = vmatprep.subr.bf16.mxu0 0
        %1255 = vmatpush2.bf16.msra.mxu0 0
        %1256 = vmatprep.subr.bf16.mxu0 0
        %1257 = vmatpush2.bf16.msra.mxu0 0
        %1258 = vmatprep.mubr.bf16.mxu0 0
        %1259 = vmatmul.mubr.bf16.gmra.mxu0 %v1177
        %v1260 = vpop.f32.mrf.mxu0
        %v1261 = vadd.f32 0.0, %v1260
        %v1262 = vpop.f32.mrf.mxu0
        %v1263 = vpop.f32.mrf.mxu0
        %v1264 = vadd.f32 0.0, %v1263
        %v1265 = vpop.f32.mrf.mxu0
        %1266 = vdwg.mxu0
        %v1267 = vadd.f32 %v707, %v1261
        %v1268 = vadd.f32 %v712, %v1264
        %v1269 = vld [vmem:[%s3] sm:$0xff]
        %v1270 = vld [vmem:[%s3 + $0x8] sm:$0xff]
        %v1272 = vsel %vm1092, %v1269, 0
        %v1275 = vsel %vm1092, %v1270, 0
        %1277 = vmatprep.subr.mxu0 0.0
        %1278 = vmatpush1.msra.mxu0 0.0
        %1279 = vmatprep.subr.mxu0 0.0
        %1280 = vmatpush1.msra.mxu0 0.0
        %1281 = vmatprep.subr.mxu0 0.0
        %1282 = vmatpush1.msra.mxu0 0.0
        %1283 = vmatprep.subr.mxu0 0.0
        %1284 = vmatpush1.msra.mxu0 0.0
        %1285 = vmatprep.subr.mxu0 0.0
        %1286 = vmatpush1.msra.mxu0 0.0
        %1287 = vmatprep.subr.mxu0 0.0
        %1288 = vmatpush1.msra.mxu0 0.0
        %1289 = vmatprep.subr.mxu0 0.0
        %1290 = vmatpush1.msra.mxu0 0.0
        %1291 = vmatprep.subr.mxu0 0.0
        %1292 = vmatpush1.msra.mxu0 0.0
        %1293 = vmatprep.subr.mxu0 0.0
        %1294 = vmatpush1.msra.mxu0 0.0
        %1295 = vmatprep.subr.mxu0 0.0
        %1296 = vmatpush1.msra.mxu0 0.0
        %1297 = vmatprep.subr.mxu0 0.0
        %1298 = vmatpush1.msra.mxu0 0.0
        %1299 = vmatprep.subr.mxu0 0.0
        %1300 = vmatpush1.msra.mxu0 0.0
        %1301 = vmatprep.subr.mxu0 0.0
        %1302 = vmatpush1.msra.mxu0 0.0
        %1303 = vmatprep.subr.mxu0 0.0
        %1304 = vmatpush1.msra.mxu0 0.0
        %1305 = vmatprep.subr.mxu0 0.0
        %1306 = vmatpush1.msra.mxu0 %v1268
        %1307 = vmatprep.subr.mxu0 0.0
        %1308 = vmatpush1.msra.mxu0 %v1267
        %1309 = vmatprep.subr.mxu0 0.0
        %1310 = vmatpush2.msra.mxu0 0.0
        %1311 = vmatprep.subr.mxu0 0.0
        %1312 = vmatpush2.msra.mxu0 0.0
        %1313 = vmatprep.subr.mxu0 0.0
        %1314 = vmatpush2.msra.mxu0 0.0
        %1315 = vmatprep.subr.mxu0 0.0
        %1316 = vmatpush2.msra.mxu0 0.0
        %1317 = vmatprep.subr.mxu0 0.0
        %1318 = vmatpush2.msra.mxu0 0.0
        %1319 = vmatprep.subr.mxu0 0.0
        %1320 = vmatpush2.msra.mxu0 0.0
        %1321 = vmatprep.subr.mxu0 0.0
        %1322 = vmatpush2.msra.mxu0 0.0
        %1323 = vmatprep.subr.mxu0 0.0
        %1324 = vmatpush2.msra.mxu0 0.0
        %1325 = vmatprep.subr.mxu0 0.0
        %1326 = vmatpush2.msra.mxu0 0.0
        %1327 = vmatprep.subr.mxu0 0.0
        %1328 = vmatpush2.msra.mxu0 0.0
        %1329 = vmatprep.subr.mxu0 0.0
        %1330 = vmatpush2.msra.mxu0 0.0
        %1331 = vmatprep.subr.mxu0 0.0
        %1332 = vmatpush2.msra.mxu0 0.0
        %1333 = vmatprep.subr.mxu0 0.0
        %1334 = vmatpush2.msra.mxu0 0.0
        %1335 = vmatprep.subr.mxu0 0.0
        %1336 = vmatpush2.msra.mxu0 0.0
        %1337 = vmatprep.subr.mxu0 0.0
        %1338 = vmatpush2.msra.mxu0 0.0
        %1339 = vmatprep.subr.mxu0 0.0
        %1340 = vmatpush2.msra.mxu0 0.0
        %1341 = vmatprep.mubr.f32.mxu0 0.0
        %1342 = vmatmul.mubr.f32.gmra.mxu0 %v1272
        %v1343 = vpop.f32.mrf.mxu0
        %v1344 = vadd.f32 0.0, %v1343
        %v1345 = vpop.f32.mrf.mxu0
        %1346 = vmatprep.mubr.f32.mxu0 0.0
        %1347 = vmatmul.mubr.f32.gmra.mxu0 %v1275
        %v1348 = vpop.f32.mrf.mxu0
        %v1349 = vadd.f32 0.0, %v1348
        %v1350 = vpop.f32.mrf.mxu0
        %1351 = vdwg.mxu0
        %v1352 = vsub.f32 %v1267, %v1344
        %v1353 = vsub.f32 %v1268, %v1349
        %v1354 = vld [vmem:[#allocation8] sm:$0xf]
        %v1355 = vld [vmem:[#allocation8 + $0x4] sm:$0xf]
        %v1356 = vld [vmem:[#allocation8 + $0x8] sm:$0xf]
        %v1357 = vld [vmem:[#allocation8 + $0xc] sm:$0xf]
        %v1358 = vld [vmem:[#allocation8 + $0x10] sm:$0xf]
        %v1359 = vld [vmem:[#allocation8 + $0x14] sm:$0xf]
        %v1360 = vld [vmem:[#allocation8 + $0x18] sm:$0xf]
        %v1361 = vld [vmem:[#allocation8 + $0x1c] sm:$0xf]
        %v1362 = vld [vmem:[#allocation8 + $0x20] sm:$0xf]
        %v1363 = vld [vmem:[#allocation8 + $0x24] sm:$0xf]
        %v1364 = vld [vmem:[#allocation8 + $0x28] sm:$0xf]
        %v1365 = vld [vmem:[#allocation8 + $0x2c] sm:$0xf]
        %v1366 = vld [vmem:[#allocation8 + $0x30] sm:$0xf]
        %v1367 = vld [vmem:[#allocation8 + $0x34] sm:$0xf]
        %v1368 = vld [vmem:[#allocation8 + $0x38] sm:$0xf]
        %v1369 = vld [vmem:[#allocation8 + $0x3c] sm:$0xf]
        %v1370 = vpack.c.bf16 %v1353, %v1352
        %v1387 = vunpack.c.l.b16 %v1354
        %v1388 = vunpack.c.l.b16 %v1355
        %v1389 = vunpack.c.l.b16 %v1356
        %v1390 = vunpack.c.l.b16 %v1357
        %v1391 = vunpack.c.l.b16 %v1358
        %v1392 = vunpack.c.l.b16 %v1359
        %v1393 = vunpack.c.l.b16 %v1360
        %v1394 = vunpack.c.l.b16 %v1361
        %v1395 = vunpack.c.l.b16 %v1362
        %v1396 = vunpack.c.l.b16 %v1363
        %v1397 = vunpack.c.l.b16 %v1364
        %v1398 = vunpack.c.l.b16 %v1365
        %v1399 = vunpack.c.l.b16 %v1366
        %v1400 = vunpack.c.l.b16 %v1367
        %v1401 = vunpack.c.l.b16 %v1368
        %v1402 = vunpack.c.l.b16 %v1369
        %v1403 = vpack.c.b16 %v1388, %v1387
        %v1404 = vpack.c.b16 %v1390, %v1389
        %v1405 = vpack.c.b16 %v1392, %v1391
        %v1406 = vpack.c.b16 %v1394, %v1393
        %v1407 = vpack.c.b16 %v1396, %v1395
        %v1408 = vpack.c.b16 %v1398, %v1397
        %v1409 = vpack.c.b16 %v1400, %v1399
        %v1410 = vpack.c.b16 %v1402, %v1401
        %1419 = vmatprep.subr.bf16.mxu0 0
        %1420 = vmatpush1.bf16.msra.mxu0 %v1410
        %1421 = vmatprep.subr.bf16.mxu0 0
        %1422 = vmatpush1.bf16.msra.mxu0 %v1409
        %1423 = vmatprep.subr.bf16.mxu0 0
        %1424 = vmatpush1.bf16.msra.mxu0 %v1408
        %1425 = vmatprep.subr.bf16.mxu0 0
        %1426 = vmatpush1.bf16.msra.mxu0 %v1407
        %1427 = vmatprep.subr.bf16.mxu0 0
        %1428 = vmatpush1.bf16.msra.mxu0 %v1406
        %1429 = vmatprep.subr.bf16.mxu0 0
        %1430 = vmatpush1.bf16.msra.mxu0 %v1405
        %1431 = vmatprep.subr.bf16.mxu0 0
        %1432 = vmatpush1.bf16.msra.mxu0 %v1404
        %1433 = vmatprep.subr.bf16.mxu0 0
        %1434 = vmatpush1.bf16.msra.mxu0 %v1403
        %1435 = vmatprep.subr.bf16.mxu0 0
        %1436 = vmatpush2.bf16.msra.mxu0 0
        %1437 = vmatprep.subr.bf16.mxu0 0
        %1438 = vmatpush2.bf16.msra.mxu0 0
        %1439 = vmatprep.subr.bf16.mxu0 0
        %1440 = vmatpush2.bf16.msra.mxu0 0
        %1441 = vmatprep.subr.bf16.mxu0 0
        %1442 = vmatpush2.bf16.msra.mxu0 0
        %1443 = vmatprep.subr.bf16.mxu0 0
        %1444 = vmatpush2.bf16.msra.mxu0 0
        %1445 = vmatprep.subr.bf16.mxu0 0
        %1446 = vmatpush2.bf16.msra.mxu0 0
        %1447 = vmatprep.subr.bf16.mxu0 0
        %1448 = vmatpush2.bf16.msra.mxu0 0
        %1449 = vmatprep.subr.bf16.mxu0 0
        %1450 = vmatpush2.bf16.msra.mxu0 0
        %1451 = vmatprep.mubr.bf16.mxu0 0
        %1452 = vmatmul.mubr.bf16.gmra.mxu0 %v1370
        %v1453 = vpop.f32.mrf.mxu0
        %v1454 = vadd.f32 0.0, %v1453
        %v1455 = vpop.f32.mrf.mxu0
        %v1456 = vpop.f32.mrf.mxu0
        %v1457 = vadd.f32 0.0, %v1456
        %v1458 = vpop.f32.mrf.mxu0
        %1459 = vdwg.mxu0
        %v1460 = vmul.f32 %v1454, 0.088388346
        %v1461 = vmul.f32 %v1457, 0.088388346
        %v1462 = vld [vmem:[%s8] sm:$0xff]
        %v1463 = vld [vmem:[%s8 + $0x8] sm:$0xff]
        %v1464 = vld [vmem:[%s8 + $0x10] sm:$0xff]
        %v1465 = vld [vmem:[%s8 + $0x18] sm:$0xff]
        %v1466 = vld [vmem:[%s8 + $0x20] sm:$0xff]
        %v1467 = vld [vmem:[%s8 + $0x28] sm:$0xff]
        %v1468 = vld [vmem:[%s8 + $0x30] sm:$0xff]
        %v1469 = vld [vmem:[%s8 + $0x38] sm:$0xff]
        %v1470 = vld [vmem:[%s8 + $0x40] sm:$0xff]
        %v1471 = vld [vmem:[%s8 + $0x48] sm:$0xff]
        %v1472 = vld [vmem:[%s8 + $0x50] sm:$0xff]
        %v1473 = vld [vmem:[%s8 + $0x58] sm:$0xff]
        %v1474 = vld [vmem:[%s8 + $0x60] sm:$0xff]
        %v1475 = vld [vmem:[%s8 + $0x68] sm:$0xff]
        %v1476 = vld [vmem:[%s8 + $0x70] sm:$0xff]
        %v1477 = vld [vmem:[%s8 + $0x78] sm:$0xff]
        %v1478 = vpack.c.bf16 %v575, %v575
        %v1495 = vunpack.c.l.b16 %v1462
        %v1496 = vunpack.c.h.b16 %v1462
        %v1497 = vunpack.c.l.b16 %v1463
        %v1498 = vunpack.c.h.b16 %v1463
        %v1499 = vunpack.c.l.b16 %v1464
        %v1500 = vunpack.c.h.b16 %v1464
        %v1501 = vunpack.c.l.b16 %v1465
        %v1502 = vunpack.c.h.b16 %v1465
        %v1503 = vunpack.c.l.b16 %v1466
        %v1504 = vunpack.c.h.b16 %v1466
        %v1505 = vunpack.c.l.b16 %v1467
        %v1506 = vunpack.c.h.b16 %v1467
        %v1507 = vunpack.c.l.b16 %v1468
        %v1508 = vunpack.c.h.b16 %v1468
        %v1509 = vunpack.c.l.b16 %v1469
        %v1510 = vunpack.c.h.b16 %v1469
        %v1511 = vunpack.c.l.b16 %v1470
        %v1512 = vunpack.c.h.b16 %v1470
        %v1513 = vunpack.c.l.b16 %v1471
        %v1514 = vunpack.c.h.b16 %v1471
        %v1515 = vunpack.c.l.b16 %v1472
        %v1516 = vunpack.c.h.b16 %v1472
        %v1517 = vunpack.c.l.b16 %v1473
        %v1518 = vunpack.c.h.b16 %v1473
        %v1519 = vunpack.c.l.b16 %v1474
        %v1520 = vunpack.c.h.b16 %v1474
        %v1521 = vunpack.c.l.b16 %v1475
        %v1522 = vunpack.c.h.b16 %v1475
        %v1523 = vunpack.c.l.b16 %v1476
        %v1524 = vunpack.c.h.b16 %v1476
        %v1525 = vunpack.c.l.b16 %v1477
        %v1526 = vunpack.c.h.b16 %v1477
        %v1527 = vpack.c.b16 %v1497, %v1495
        %v1528 = vpack.c.b16 %v1498, %v1496
        %v1529 = vpack.c.b16 %v1501, %v1499
        %v1530 = vpack.c.b16 %v1502, %v1500
        %v1531 = vpack.c.b16 %v1505, %v1503
        %v1532 = vpack.c.b16 %v1506, %v1504
        %v1533 = vpack.c.b16 %v1509, %v1507
        %v1534 = vpack.c.b16 %v1510, %v1508
        %v1535 = vpack.c.b16 %v1513, %v1511
        %v1536 = vpack.c.b16 %v1514, %v1512
        %v1537 = vpack.c.b16 %v1517, %v1515
        %v1538 = vpack.c.b16 %v1518, %v1516
        %v1539 = vpack.c.b16 %v1521, %v1519
        %v1540 = vpack.c.b16 %v1522, %v1520
        %v1541 = vpack.c.b16 %v1525, %v1523
        %v1542 = vpack.c.b16 %v1526, %v1524
        %1559 = vmatprep.subr.bf16.mxu0 %v1542
        %1560 = vmatpush1.bf16.msra.mxu0 %v1541
        %1561 = vmatprep.subr.bf16.mxu0 %v1540
        %1562 = vmatpush1.bf16.msra.mxu0 %v1539
        %1563 = vmatprep.subr.bf16.mxu0 %v1538
        %1564 = vmatpush1.bf16.msra.mxu0 %v1537
        %1565 = vmatprep.subr.bf16.mxu0 %v1536
        %1566 = vmatpush1.bf16.msra.mxu0 %v1535
        %1567 = vmatprep.subr.bf16.mxu0 %v1534
        %1568 = vmatpush1.bf16.msra.mxu0 %v1533
        %1569 = vmatprep.subr.bf16.mxu0 %v1532
        %1570 = vmatpush1.bf16.msra.mxu0 %v1531
        %1571 = vmatprep.subr.bf16.mxu0 %v1530
        %1572 = vmatpush1.bf16.msra.mxu0 %v1529
        %1573 = vmatprep.subr.bf16.mxu0 %v1528
        %1574 = vmatpush1.bf16.msra.mxu0 %v1527
        %1575 = vmatprep.subr.bf16.mxu0 0
        %1576 = vmatpush2.bf16.msra.mxu0 0
        %1577 = vmatprep.subr.bf16.mxu0 0
        %1578 = vmatpush2.bf16.msra.mxu0 0
        %1579 = vmatprep.subr.bf16.mxu0 0
        %1580 = vmatpush2.bf16.msra.mxu0 0
        %1581 = vmatprep.subr.bf16.mxu0 0
        %1582 = vmatpush2.bf16.msra.mxu0 0
        %1583 = vmatprep.subr.bf16.mxu0 0
        %1584 = vmatpush2.bf16.msra.mxu0 0
        %1585 = vmatprep.subr.bf16.mxu0 0
        %1586 = vmatpush2.bf16.msra.mxu0 0
        %1587 = vmatprep.subr.bf16.mxu0 0
        %1588 = vmatpush2.bf16.msra.mxu0 0
        %1589 = vmatprep.subr.bf16.mxu0 0
        %1590 = vmatpush2.bf16.msra.mxu0 0
        %1591 = vmatprep.mubr.bf16.mxu0 0
        %1592 = vmatmul.mubr.bf16.gmra.mxu0 %v1478
        %v1593 = vpop.f32.mrf.mxu0
        %v1594 = vadd.f32 0.0, %v1593
        %v1595 = vpop.f32.mrf.mxu0
        %v1596 = vadd.f32 0.0, %v1595
        %v1597 = vpop.f32.mrf.mxu0
        %v1598 = vpop.f32.mrf.mxu0
        %1599 = vdwg.mxu0
        %v1600 = vpack.c.bf16 %v1461, %v1460
        %v1601 = vpack.c.bf16 %v1594, %v1594
        %1602 = vmatprep.subr.bf16.mxu0 0
        %1603 = vmatpush1.bf16.xpose.msra.mxu0 0
        %1604 = vmatprep.subr.bf16.mxu0 0
        %1605 = vmatpush1.bf16.xpose.msra.mxu0 0
        %1606 = vmatprep.subr.bf16.mxu0 0
        %1607 = vmatpush1.bf16.xpose.msra.mxu0 0
        %1608 = vmatprep.subr.bf16.mxu0 0
        %1609 = vmatpush1.bf16.xpose.msra.mxu0 0
        %1610 = vmatprep.subr.bf16.mxu0 0
        %1611 = vmatpush1.bf16.xpose.msra.mxu0 0
        %1612 = vmatprep.subr.bf16.mxu0 0
        %1613 = vmatpush1.bf16.xpose.msra.mxu0 0
        %1614 = vmatprep.subr.bf16.mxu0 0
        %1615 = vmatpush1.bf16.xpose.msra.mxu0 0
        %1616 = vmatprep.subr.bf16.mxu0 0
        %1617 = vmatpush1.bf16.xpose.msra.mxu0 %v1601
        %1618 = vmatprep.subr.bf16.mxu0 0
        %1619 = vmatpush2.bf16.xpose.msra.mxu0 0
        %1620 = vmatprep.subr.bf16.mxu0 0
        %1621 = vmatpush2.bf16.xpose.msra.mxu0 0
        %1622 = vmatprep.subr.bf16.mxu0 0
        %1623 = vmatpush2.bf16.xpose.msra.mxu0 0
        %1624 = vmatprep.subr.bf16.mxu0 0
        %1625 = vmatpush2.bf16.xpose.msra.mxu0 0
        %1626 = vmatprep.subr.bf16.mxu0 0
        %1627 = vmatpush2.bf16.xpose.msra.mxu0 0
        %1628 = vmatprep.subr.bf16.mxu0 0
        %1629 = vmatpush2.bf16.xpose.msra.mxu0 0
        %1630 = vmatprep.subr.bf16.mxu0 0
        %1631 = vmatpush2.bf16.xpose.msra.mxu0 0
        %1632 = vmatprep.subr.bf16.mxu0 0
        %1633 = vmatpush2.bf16.xpose.msra.mxu0 0
        %1634 = vmatprep.mubr.bf16.mxu0 0
        %1635 = vmatmul.mubr.bf16.gmra.mxu0 %v1600
        %v1636 = vpop.f32.mrf.mxu0
        %v1637 = vadd.f32 0.0, %v1636
        %v1638 = vpop.f32.mrf.mxu0
        %v1639 = vpop.f32.mrf.mxu0
        %v1640 = vadd.f32 0.0, %v1639
        %v1641 = vpop.f32.mrf.mxu0
        %1642 = vdwg.mxu0
        %vm1643 = vcmask 64512
        %v1644 = vsel %vm1643, %v1637, -inf
        %1645 = vmax.xlane.f32.xlu0 %v1644
        %v1646 = vpop.xlane.xlu0 %1645
        %v1647 = vsel %vm1643, %v1640, -inf
        %1648 = vmax.xlane.f32.xlu0 %v1647
        %v1649 = vpop.xlane.xlu0 %1648
        %v1650 = vsub.f32 %v1637, %v1646
        %v1651 = vsub.f32 %v1640, %v1649
        %v1652 = vmul.f32 %v1650, 1.442695
        %v1653 = vpow.pop %v1652
        %v1654 = vmul.f32 %v1651, 1.442695
        %v1655 = vpow.pop %v1654
        %v1656 = vsel %vm1643, %v1653, 0.0
        %1657 = vadd.xlane.f32.xlu0 %v1656
        %v1658 = vpop.xlane.xlu0 %1657
        %v1659 = vsel %vm1643, %v1655, 0.0
        %1660 = vadd.xlane.f32.xlu0 %v1659
        %v1661 = vpop.xlane.xlu0 %1660
        %v1662 = vrcp.pop %v1658
        %v1663 = vrcp.pop %v1661
        %v1664 = vmul.f32 %v1653, %v1662
        %v1665 = vmul.f32 %v1655, %v1663
        %v1666 = vpack.c.bf16 %v1665, %v1664
        %v1667 = vpack.c.bf16 %v1596, %v1596
        %v1669 = vsel %vm1643, %v1666, 0
        %v1672 = vsel %vm636, %v1667, 0
        %1674 = vmatprep.subr.bf16.mxu0 0
        %1675 = vmatpush1.bf16.msra.mxu0 0
        %1676 = vmatprep.subr.bf16.mxu0 0
        %1677 = vmatpush1.bf16.msra.mxu0 0
        %1678 = vmatprep.subr.bf16.mxu0 0
        %1679 = vmatpush1.bf16.msra.mxu0 0
        %1680 = vmatprep.subr.bf16.mxu0 0
        %1681 = vmatpush1.bf16.msra.mxu0 0
        %1682 = vmatprep.subr.bf16.mxu0 0
        %1683 = vmatpush1.bf16.msra.mxu0 0
        %1684 = vmatprep.subr.bf16.mxu0 0
        %1685 = vmatpush1.bf16.msra.mxu0 0
        %1686 = vmatprep.subr.bf16.mxu0 0
        %1687 = vmatpush1.bf16.msra.mxu0 0
        %1688 = vmatprep.subr.bf16.mxu0 0
        %1689 = vmatpush1.bf16.msra.mxu0 %v1672
        %1690 = vmatprep.subr.bf16.mxu0 0
        %1691 = vmatpush2.bf16.msra.mxu0 0
        %1692 = vmatprep.subr.bf16.mxu0 0
        %1693 = vmatpush2.bf16.msra.mxu0 0
        %1694 = vmatprep.subr.bf16.mxu0 0
        %1695 = vmatpush2.bf16.msra.mxu0 0
        %1696 = vmatprep.subr.bf16.mxu0 0
        %1697 = vmatpush2.bf16.msra.mxu0 0
        %1698 = vmatprep.subr.bf16.mxu0 0
        %1699 = vmatpush2.bf16.msra.mxu0 0
        %1700 = vmatprep.subr.bf16.mxu0 0
        %1701 = vmatpush2.bf16.msra.mxu0 0
        %1702 = vmatprep.subr.bf16.mxu0 0
        %1703 = vmatpush2.bf16.msra.mxu0 0
        %1704 = vmatprep.subr.bf16.mxu0 0
        %1705 = vmatpush2.bf16.msra.mxu0 0
        %1706 = vmatprep.mubr.bf16.mxu0 0
        %1707 = vmatmul.mubr.bf16.gmra.mxu0 %v1669
        %v1708 = vpop.f32.mrf.mxu0
        %v1709 = vadd.f32 0.0, %v1708
        %v1710 = vpop.f32.mrf.mxu0
        %v1711 = vpop.f32.mrf.mxu0
        %v1712 = vadd.f32 0.0, %v1711
        %v1713 = vpop.f32.mrf.mxu0
        %1714 = vdwg.mxu0
        %v1715 = vld [vmem:[#allocation10] sm:$0xf]
        %v1716 = vld [vmem:[#allocation10 + $0x4] sm:$0xf]
        %v1717 = vld [vmem:[#allocation10 + $0x8] sm:$0xf]
        %v1718 = vld [vmem:[#allocation10 + $0xc] sm:$0xf]
        %v1719 = vld [vmem:[#allocation10 + $0x10] sm:$0xf]
        %v1720 = vld [vmem:[#allocation10 + $0x14] sm:$0xf]
        %v1721 = vld [vmem:[#allocation10 + $0x18] sm:$0xf]
        %v1722 = vld [vmem:[#allocation10 + $0x1c] sm:$0xf]
        %v1723 = vld [vmem:[#allocation10 + $0x20] sm:$0xf]
        %v1724 = vld [vmem:[#allocation10 + $0x24] sm:$0xf]
        %v1725 = vld [vmem:[#allocation10 + $0x28] sm:$0xf]
        %v1726 = vld [vmem:[#allocation10 + $0x2c] sm:$0xf]
        %v1727 = vld [vmem:[#allocation10 + $0x30] sm:$0xf]
        %v1728 = vld [vmem:[#allocation10 + $0x34] sm:$0xf]
        %v1729 = vld [vmem:[#allocation10 + $0x38] sm:$0xf]
        %v1730 = vld [vmem:[#allocation10 + $0x3c] sm:$0xf]
        %v1731 = vpack.c.bf16 %v1712, %v1709
        %v1748 = vunpack.c.l.b16 %v1715
        %v1749 = vunpack.c.l.b16 %v1716
        %v1750 = vunpack.c.l.b16 %v1717
        %v1751 = vunpack.c.l.b16 %v1718
        %v1752 = vunpack.c.l.b16 %v1719
        %v1753 = vunpack.c.l.b16 %v1720
        %v1754 = vunpack.c.l.b16 %v1721
        %v1755 = vunpack.c.l.b16 %v1722
        %v1756 = vunpack.c.l.b16 %v1723
        %v1757 = vunpack.c.l.b16 %v1724
        %v1758 = vunpack.c.l.b16 %v1725
        %v1759 = vunpack.c.l.b16 %v1726
        %v1760 = vunpack.c.l.b16 %v1727
        %v1761 = vunpack.c.l.b16 %v1728
        %v1762 = vunpack.c.l.b16 %v1729
        %v1763 = vunpack.c.l.b16 %v1730
        %v1764 = vpack.c.b16 %v1749, %v1748
        %v1765 = vpack.c.b16 %v1751, %v1750
        %v1766 = vpack.c.b16 %v1753, %v1752
        %v1767 = vpack.c.b16 %v1755, %v1754
        %v1768 = vpack.c.b16 %v1757, %v1756
        %v1769 = vpack.c.b16 %v1759, %v1758
        %v1770 = vpack.c.b16 %v1761, %v1760
        %v1771 = vpack.c.b16 %v1763, %v1762
        %1780 = vmatprep.subr.bf16.mxu0 0
        %1781 = vmatpush1.bf16.msra.mxu0 %v1771
        %1782 = vmatprep.subr.bf16.mxu0 0
        %1783 = vmatpush1.bf16.msra.mxu0 %v1770
        %1784 = vmatprep.subr.bf16.mxu0 0
        %1785 = vmatpush1.bf16.msra.mxu0 %v1769
        %1786 = vmatprep.subr.bf16.mxu0 0
        %1787 = vmatpush1.bf16.msra.mxu0 %v1768
        %1788 = vmatprep.subr.bf16.mxu0 0
        %1789 = vmatpush1.bf16.msra.mxu0 %v1767
        %1790 = vmatprep.subr.bf16.mxu0 0
        %1791 = vmatpush1.bf16.msra.mxu0 %v1766
        %1792 = vmatprep.subr.bf16.mxu0 0
        %1793 = vmatpush1.bf16.msra.mxu0 %v1765
        %1794 = vmatprep.subr.bf16.mxu0 0
        %1795 = vmatpush1.bf16.msra.mxu0 %v1764
        %1796 = vmatprep.subr.bf16.mxu0 0
        %1797 = vmatpush2.bf16.msra.mxu0 0
        %1798 = vmatprep.subr.bf16.mxu0 0
        %1799 = vmatpush2.bf16.msra.mxu0 0
        %1800 = vmatprep.subr.bf16.mxu0 0
        %1801 = vmatpush2.bf16.msra.mxu0 0
        %1802 = vmatprep.subr.bf16.mxu0 0
        %1803 = vmatpush2.bf16.msra.mxu0 0
        %1804 = vmatprep.subr.bf16.mxu0 0
        %1805 = vmatpush2.bf16.msra.mxu0 0
        %1806 = vmatprep.subr.bf16.mxu0 0
        %1807 = vmatpush2.bf16.msra.mxu0 0
        %1808 = vmatprep.subr.bf16.mxu0 0
        %1809 = vmatpush2.bf16.msra.mxu0 0
        %1810 = vmatprep.subr.bf16.mxu0 0
        %1811 = vmatpush2.bf16.msra.mxu0 0
        %1812 = vmatprep.mubr.bf16.mxu0 0
        %1813 = vmatmul.mubr.bf16.gmra.mxu0 %v1731
        %v1814 = vpop.f32.mrf.mxu0
        %v1815 = vadd.f32 0.0, %v1814
        %v1816 = vpop.f32.mrf.mxu0
        %v1817 = vpop.f32.mrf.mxu0
        %v1818 = vadd.f32 0.0, %v1817
        %v1819 = vpop.f32.mrf.mxu0
        %1820 = vdwg.mxu0
        %v1821 = vadd.f32 %v1352, %v1815
        %v1822 = vadd.f32 %v1353, %v1818
        %1823 = vmatprep.subr.mxu0 0.0
        %1824 = vmatpush1.msra.mxu0 0.0
        %1825 = vmatprep.subr.mxu0 0.0
        %1826 = vmatpush1.msra.mxu0 0.0
        %1827 = vmatprep.subr.mxu0 0.0
        %1828 = vmatpush1.msra.mxu0 0.0
        %1829 = vmatprep.subr.mxu0 0.0
        %1830 = vmatpush1.msra.mxu0 0.0
        %1831 = vmatprep.subr.mxu0 0.0
        %1832 = vmatpush1.msra.mxu0 0.0
        %1833 = vmatprep.subr.mxu0 0.0
        %1834 = vmatpush1.msra.mxu0 0.0
        %1835 = vmatprep.subr.mxu0 0.0
        %1836 = vmatpush1.msra.mxu0 0.0
        %1837 = vmatprep.subr.mxu0 0.0
        %1838 = vmatpush1.msra.mxu0 0.0
        %1839 = vmatprep.subr.mxu0 0.0
        %1840 = vmatpush1.msra.mxu0 0.0
        %1841 = vmatprep.subr.mxu0 0.0
        %1842 = vmatpush1.msra.mxu0 0.0
        %1843 = vmatprep.subr.mxu0 0.0
        %1844 = vmatpush1.msra.mxu0 0.0
        %1845 = vmatprep.subr.mxu0 0.0
        %1846 = vmatpush1.msra.mxu0 0.0
        %1847 = vmatprep.subr.mxu0 0.0
        %1848 = vmatpush1.msra.mxu0 0.0
        %1849 = vmatprep.subr.mxu0 0.0
        %1850 = vmatpush1.msra.mxu0 0.0
        %1851 = vmatprep.subr.mxu0 0.0
        %1852 = vmatpush1.msra.mxu0 %v1822
        %1853 = vmatprep.subr.mxu0 0.0
        %1854 = vmatpush1.msra.mxu0 %v1821
        %1855 = vmatprep.subr.mxu0 0.0
        %1856 = vmatpush2.msra.mxu0 0.0
        %1857 = vmatprep.subr.mxu0 0.0
        %1858 = vmatpush2.msra.mxu0 0.0
        %1859 = vmatprep.subr.mxu0 0.0
        %1860 = vmatpush2.msra.mxu0 0.0
        %1861 = vmatprep.subr.mxu0 0.0
        %1862 = vmatpush2.msra.mxu0 0.0
        %1863 = vmatprep.subr.mxu0 0.0
        %1864 = vmatpush2.msra.mxu0 0.0
        %1865 = vmatprep.subr.mxu0 0.0
        %1866 = vmatpush2.msra.mxu0 0.0
        %1867 = vmatprep.subr.mxu0 0.0
        %1868 = vmatpush2.msra.mxu0 0.0
        %1869 = vmatprep.subr.mxu0 0.0
        %1870 = vmatpush2.msra.mxu0 0.0
        %1871 = vmatprep.subr.mxu0 0.0
        %1872 = vmatpush2.msra.mxu0 0.0
        %1873 = vmatprep.subr.mxu0 0.0
        %1874 = vmatpush2.msra.mxu0 0.0
        %1875 = vmatprep.subr.mxu0 0.0
        %1876 = vmatpush2.msra.mxu0 0.0
        %1877 = vmatprep.subr.mxu0 0.0
        %1878 = vmatpush2.msra.mxu0 0.0
        %1879 = vmatprep.subr.mxu0 0.0
        %1880 = vmatpush2.msra.mxu0 0.0
        %1881 = vmatprep.subr.mxu0 0.0
        %1882 = vmatpush2.msra.mxu0 0.0
        %1883 = vmatprep.subr.mxu0 0.0
        %1884 = vmatpush2.msra.mxu0 0.0
        %1885 = vmatprep.subr.mxu0 0.0
        %1886 = vmatpush2.msra.mxu0 0.0
        %1887 = vmatprep.mubr.f32.mxu0 0.0
        %1888 = vmatmul.mubr.f32.gmra.mxu0 %v1272
        %v1889 = vpop.f32.mrf.mxu0
        %v1890 = vadd.f32 0.0, %v1889
        %v1891 = vpop.f32.mrf.mxu0
        %1892 = vmatprep.mubr.f32.mxu0 0.0
        %1893 = vmatmul.mubr.f32.gmra.mxu0 %v1275
        %v1894 = vpop.f32.mrf.mxu0
        %v1895 = vadd.f32 0.0, %v1894
        %v1896 = vpop.f32.mrf.mxu0
        %1897 = vdwg.mxu0
        %v1898 = vsub.f32 %v1821, %v1890
        %v1899 = vsub.f32 %v1822, %v1895
        %v1900 = vadd.f32 %v1344, %v1890
        %v1901 = vadd.f32 %v1349, %v1895
        %v1902 = vld [vmem:[%s10] sm:$0xff]
        %v1903 = vld [vmem:[%s10 + $0x8] sm:$0xff]
        %v1904 = vld [vmem:[%s10 + $0x10] sm:$0xff]
        %v1905 = vld [vmem:[%s10 + $0x18] sm:$0xff]
        %v1906 = vld [vmem:[%s10 + $0x20] sm:$0xff]
        %v1907 = vld [vmem:[%s10 + $0x28] sm:$0xff]
        %v1908 = vld [vmem:[%s10 + $0x30] sm:$0xff]
        %v1909 = vld [vmem:[%s10 + $0x38] sm:$0xff]
        %v1910 = vld [vmem:[%s10 + $0x40] sm:$0xff]
        %v1911 = vld [vmem:[%s10 + $0x48] sm:$0xff]
        %v1912 = vld [vmem:[%s10 + $0x50] sm:$0xff]
        %v1913 = vld [vmem:[%s10 + $0x58] sm:$0xff]
        %v1914 = vld [vmem:[%s10 + $0x60] sm:$0xff]
        %v1915 = vld [vmem:[%s10 + $0x68] sm:$0xff]
        %v1916 = vld [vmem:[%s10 + $0x70] sm:$0xff]
        %v1917 = vld [vmem:[%s10 + $0x78] sm:$0xff]
        %v1918 = vld [vmem:[%s10 + $0x80] sm:$0xff]
        %v1919 = vld [vmem:[%s10 + $0x88] sm:$0xff]
        %v1920 = vld [vmem:[%s10 + $0x90] sm:$0xff]
        %v1921 = vld [vmem:[%s10 + $0x98] sm:$0xff]
        %v1922 = vld [vmem:[%s10 + $0xa0] sm:$0xff]
        %v1923 = vld [vmem:[%s10 + $0xa8] sm:$0xff]
        %v1924 = vld [vmem:[%s10 + $0xb0] sm:$0xff]
        %v1925 = vld [vmem:[%s10 + $0xb8] sm:$0xff]
        %v1926 = vld [vmem:[%s10 + $0xc0] sm:$0xff]
        %v1927 = vld [vmem:[%s10 + $0xc8] sm:$0xff]
        %v1928 = vld [vmem:[%s10 + $0xd0] sm:$0xff]
        %v1929 = vld [vmem:[%s10 + $0xd8] sm:$0xff]
        %v1930 = vld [vmem:[%s10 + $0xe0] sm:$0xff]
        %v1931 = vld [vmem:[%s10 + $0xe8] sm:$0xff]
        %v1932 = vld [vmem:[%s10 + $0xf0] sm:$0xff]
        %v1933 = vld [vmem:[%s10 + $0xf8] sm:$0xff]
        %v1934 = vpack.c.bf16 %v1899, %v1898
        %v1967 = vunpack.c.l.b16 %v1902
        %v1968 = vunpack.c.h.b16 %v1902
        %v1969 = vunpack.c.l.b16 %v1903
        %v1970 = vunpack.c.h.b16 %v1903
        %v1971 = vunpack.c.l.b16 %v1904
        %v1972 = vunpack.c.h.b16 %v1904
        %v1973 = vunpack.c.l.b16 %v1905
        %v1974 = vunpack.c.h.b16 %v1905
        %v1975 = vunpack.c.l.b16 %v1906
        %v1976 = vunpack.c.h.b16 %v1906
        %v1977 = vunpack.c.l.b16 %v1907
        %v1978 = vunpack.c.h.b16 %v1907
        %v1979 = vunpack.c.l.b16 %v1908
        %v1980 = vunpack.c.h.b16 %v1908
        %v1981 = vunpack.c.l.b16 %v1909
        %v1982 = vunpack.c.h.b16 %v1909
        %v1983 = vunpack.c.l.b16 %v1910
        %v1984 = vunpack.c.h.b16 %v1910
        %v1985 = vunpack.c.l.b16 %v1911
        %v1986 = vunpack.c.h.b16 %v1911
        %v1987 = vunpack.c.l.b16 %v1912
        %v1988 = vunpack.c.h.b16 %v1912
        %v1989 = vunpack.c.l.b16 %v1913
        %v1990 = vunpack.c.h.b16 %v1913
        %v1991 = vunpack.c.l.b16 %v1914
        %v1992 = vunpack.c.h.b16 %v1914
        %v1993 = vunpack.c.l.b16 %v1915
        %v1994 = vunpack.c.h.b16 %v1915
        %v1995 = vunpack.c.l.b16 %v1916
        %v1996 = vunpack.c.h.b16 %v1916
        %v1997 = vunpack.c.l.b16 %v1917
        %v1998 = vunpack.c.h.b16 %v1917
        %v1999 = vunpack.c.l.b16 %v1918
        %v2000 = vunpack.c.h.b16 %v1918
        %v2001 = vunpack.c.l.b16 %v1919
        %v2002 = vunpack.c.h.b16 %v1919
        %v2003 = vunpack.c.l.b16 %v1920
        %v2004 = vunpack.c.h.b16 %v1920
        %v2005 = vunpack.c.l.b16 %v1921
        %v2006 = vunpack.c.h.b16 %v1921
        %v2007 = vunpack.c.l.b16 %v1922
        %v2008 = vunpack.c.h.b16 %v1922
        %v2009 = vunpack.c.l.b16 %v1923
        %v2010 = vunpack.c.h.b16 %v1923
        %v2011 = vunpack.c.l.b16 %v1924
        %v2012 = vunpack.c.h.b16 %v1924
        %v2013 = vunpack.c.l.b16 %v1925
        %v2014 = vunpack.c.h.b16 %v1925
        %v2015 = vunpack.c.l.b16 %v1926
        %v2016 = vunpack.c.h.b16 %v1926
        %v2017 = vunpack.c.l.b16 %v1927
        %v2018 = vunpack.c.h.b16 %v1927
        %v2019 = vunpack.c.l.b16 %v1928
        %v2020 = vunpack.c.h.b16 %v1928
        %v2021 = vunpack.c.l.b16 %v1929
        %v2022 = vunpack.c.h.b16 %v1929
        %v2023 = vunpack.c.l.b16 %v1930
        %v2024 = vunpack.c.h.b16 %v1930
        %v2025 = vunpack.c.l.b16 %v1931
        %v2026 = vunpack.c.h.b16 %v1931
        %v2027 = vunpack.c.l.b16 %v1932
        %v2028 = vunpack.c.h.b16 %v1932
        %v2029 = vunpack.c.l.b16 %v1933
        %v2030 = vunpack.c.h.b16 %v1933
        %v2031 = vpack.c.b16 %v1971, %v1967
        %v2032 = vpack.c.b16 %v1972, %v1968
        %v2033 = vpack.c.b16 %v1973, %v1969
        %v2034 = vpack.c.b16 %v1974, %v1970
        %v2035 = vpack.c.b16 %v1979, %v1975
        %v2036 = vpack.c.b16 %v1980, %v1976
        %v2037 = vpack.c.b16 %v1981, %v1977
        %v2038 = vpack.c.b16 %v1982, %v1978
        %v2039 = vpack.c.b16 %v1987, %v1983
        %v2040 = vpack.c.b16 %v1988, %v1984
        %v2041 = vpack.c.b16 %v1989, %v1985
        %v2042 = vpack.c.b16 %v1990, %v1986
        %v2043 = vpack.c.b16 %v1995, %v1991
        %v2044 = vpack.c.b16 %v1996, %v1992
        %v2045 = vpack.c.b16 %v1997, %v1993
        %v2046 = vpack.c.b16 %v1998, %v1994
        %v2047 = vpack.c.b16 %v2003, %v1999
        %v2048 = vpack.c.b16 %v2004, %v2000
        %v2049 = vpack.c.b16 %v2005, %v2001
        %v2050 = vpack.c.b16 %v2006, %v2002
        %v2051 = vpack.c.b16 %v2011, %v2007
        %v2052 = vpack.c.b16 %v2012, %v2008
        %v2053 = vpack.c.b16 %v2013, %v2009
        %v2054 = vpack.c.b16 %v2014, %v2010
        %v2055 = vpack.c.b16 %v2019, %v2015
        %v2056 = vpack.c.b16 %v2020, %v2016
        %v2057 = vpack.c.b16 %v2021, %v2017
        %v2058 = vpack.c.b16 %v2022, %v2018
        %v2059 = vpack.c.b16 %v2027, %v2023
        %v2060 = vpack.c.b16 %v2028, %v2024
        %v2061 = vpack.c.b16 %v2029, %v2025
        %v2062 = vpack.c.b16 %v2030, %v2026
        %2095 = vmatprep.subr.bf16.mxu0 %v2060
        %2096 = vmatpush1.bf16.msra.mxu0 %v2059
        %2097 = vmatprep.subr.bf16.mxu0 %v2056
        %2098 = vmatpush1.bf16.msra.mxu0 %v2055
        %2099 = vmatprep.subr.bf16.mxu0 %v2052
        %2100 = vmatpush1.bf16.msra.mxu0 %v2051
        %2101 = vmatprep.subr.bf16.mxu0 %v2048
        %2102 = vmatpush1.bf16.msra.mxu0 %v2047
        %2103 = vmatprep.subr.bf16.mxu0 %v2044
        %2104 = vmatpush1.bf16.msra.mxu0 %v2043
        %2105 = vmatprep.subr.bf16.mxu0 %v2040
        %2106 = vmatpush1.bf16.msra.mxu0 %v2039
        %2107 = vmatprep.subr.bf16.mxu0 %v2036
        %2108 = vmatpush1.bf16.msra.mxu0 %v2035
        %2109 = vmatprep.subr.bf16.mxu0 %v2032
        %2110 = vmatpush1.bf16.msra.mxu0 %v2031
        %2111 = vmatprep.subr.bf16.mxu0 0
        %2112 = vmatpush2.bf16.msra.mxu0 0
        %2113 = vmatprep.subr.bf16.mxu0 0
        %2114 = vmatpush2.bf16.msra.mxu0 0
        %2115 = vmatprep.subr.bf16.mxu0 0
        %2116 = vmatpush2.bf16.msra.mxu0 0
        %2117 = vmatprep.subr.bf16.mxu0 0
        %2118 = vmatpush2.bf16.msra.mxu0 0
        %2119 = vmatprep.subr.bf16.mxu0 0
        %2120 = vmatpush2.bf16.msra.mxu0 0
        %2121 = vmatprep.subr.bf16.mxu0 0
        %2122 = vmatpush2.bf16.msra.mxu0 0
        %2123 = vmatprep.subr.bf16.mxu0 0
        %2124 = vmatpush2.bf16.msra.mxu0 0
        %2125 = vmatprep.subr.bf16.mxu0 0
        %2126 = vmatpush2.bf16.msra.mxu0 0
        %2127 = vmatprep.mubr.bf16.mxu0 0
        %2128 = vmatmul.mubr.bf16.gmra.mxu0 %v1934
        %v2129 = vpop.f32.mrf.mxu0
        %v2130 = vadd.f32 0.0, %v2129
        %v2131 = vpop.f32.mrf.mxu0
        %v2132 = vadd.f32 0.0, %v2131
        %v2133 = vpop.f32.mrf.mxu0
        %v2134 = vadd.f32 0.0, %v2133
        %v2135 = vpop.f32.mrf.mxu0
        %v2136 = vadd.f32 0.0, %v2135
        %2137 = vdwg.mxu0
        %2138 = vmatprep.subr.bf16.mxu0 %v2062
        %2139 = vmatpush1.bf16.msra.mxu0 %v2061
        %2140 = vmatprep.subr.bf16.mxu0 %v2058
        %2141 = vmatpush1.bf16.msra.mxu0 %v2057
        %2142 = vmatprep.subr.bf16.mxu0 %v2054
        %2143 = vmatpush1.bf16.msra.mxu0 %v2053
        %2144 = vmatprep.subr.bf16.mxu0 %v2050
        %2145 = vmatpush1.bf16.msra.mxu0 %v2049
        %2146 = vmatprep.subr.bf16.mxu0 %v2046
        %2147 = vmatpush1.bf16.msra.mxu0 %v2045
        %2148 = vmatprep.subr.bf16.mxu0 %v2042
        %2149 = vmatpush1.bf16.msra.mxu0 %v2041
        %2150 = vmatprep.subr.bf16.mxu0 %v2038
        %2151 = vmatpush1.bf16.msra.mxu0 %v2037
        %2152 = vmatprep.subr.bf16.mxu0 %v2034
        %2153 = vmatpush1.bf16.msra.mxu0 %v2033
        %2154 = vmatprep.subr.bf16.mxu0 0
        %2155 = vmatpush2.bf16.msra.mxu0 0
        %2156 = vmatprep.subr.bf16.mxu0 0
        %2157 = vmatpush2.bf16.msra.mxu0 0
        %2158 = vmatprep.subr.bf16.mxu0 0
        %2159 = vmatpush2.bf16.msra.mxu0 0
        %2160 = vmatprep.subr.bf16.mxu0 0
        %2161 = vmatpush2.bf16.msra.mxu0 0
        %2162 = vmatprep.subr.bf16.mxu0 0
        %2163 = vmatpush2.bf16.msra.mxu0 0
        %2164 = vmatprep.subr.bf16.mxu0 0
        %2165 = vmatpush2.bf16.msra.mxu0 0
        %2166 = vmatprep.subr.bf16.mxu0 0
        %2167 = vmatpush2.bf16.msra.mxu0 0
        %2168 = vmatprep.subr.bf16.mxu0 0
        %2169 = vmatpush2.bf16.msra.mxu0 0
        %2170 = vmatprep.mubr.bf16.mxu0 0
        %2171 = vmatmul.mubr.bf16.gmra.mxu0 %v1934
        %v2172 = vpop.f32.mrf.mxu0
        %v2173 = vadd.f32 0.0, %v2172
        %v2174 = vpop.f32.mrf.mxu0
        %v2175 = vadd.f32 0.0, %v2174
        %v2176 = vpop.f32.mrf.mxu0
        %v2177 = vadd.f32 0.0, %v2176
        %v2178 = vpop.f32.mrf.mxu0
        %v2179 = vadd.f32 0.0, %v2178
        %2180 = vdwg.mxu0
        %v2181 = vmax.f32 %v2130, 0.0
        %v2182 = vmax.f32 %v2132, 0.0
        %v2183 = vmax.f32 %v2173, 0.0
        %v2184 = vmax.f32 %v2175, 0.0
        %v2185 = vmax.f32 %v2134, 0.0
        %v2186 = vmax.f32 %v2136, 0.0
        %v2187 = vmax.f32 %v2177, 0.0
        %v2188 = vmax.f32 %v2179, 0.0
        %v2189 = vld [vmem:[%s11] sm:$0xf]
        %v2190 = vld [vmem:[%s11 + $0x4] sm:$0xf]
        %v2191 = vld [vmem:[%s11 + $0x8] sm:$0xf]
        %v2192 = vld [vmem:[%s11 + $0xc] sm:$0xf]
        %v2193 = vld [vmem:[%s11 + $0x10] sm:$0xf]
        %v2194 = vld [vmem:[%s11 + $0x14] sm:$0xf]
        %v2195 = vld [vmem:[%s11 + $0x18] sm:$0xf]
        %v2196 = vld [vmem:[%s11 + $0x1c] sm:$0xf]
        %v2197 = vld [vmem:[%s11 + $0x20] sm:$0xf]
        %v2198 = vld [vmem:[%s11 + $0x24] sm:$0xf]
        %v2199 = vld [vmem:[%s11 + $0x28] sm:$0xf]
        %v2200 = vld [vmem:[%s11 + $0x2c] sm:$0xf]
        %v2201 = vld [vmem:[%s11 + $0x30] sm:$0xf]
        %v2202 = vld [vmem:[%s11 + $0x34] sm:$0xf]
        %v2203 = vld [vmem:[%s11 + $0x38] sm:$0xf]
        %v2204 = vld [vmem:[%s11 + $0x3c] sm:$0xf]
        %v2205 = vld [vmem:[%s11 + $0x40] sm:$0xf]
        %v2206 = vld [vmem:[%s11 + $0x44] sm:$0xf]
        %v2207 = vld [vmem:[%s11 + $0x48] sm:$0xf]
        %v2208 = vld [vmem:[%s11 + $0x4c] sm:$0xf]
        %v2209 = vld [vmem:[%s11 + $0x50] sm:$0xf]
        %v2210 = vld [vmem:[%s11 + $0x54] sm:$0xf]
        %v2211 = vld [vmem:[%s11 + $0x58] sm:$0xf]
        %v2212 = vld [vmem:[%s11 + $0x5c] sm:$0xf]
        %v2213 = vld [vmem:[%s11 + $0x60] sm:$0xf]
        %v2214 = vld [vmem:[%s11 + $0x64] sm:$0xf]
        %v2215 = vld [vmem:[%s11 + $0x68] sm:$0xf]
        %v2216 = vld [vmem:[%s11 + $0x6c] sm:$0xf]
        %v2217 = vld [vmem:[%s11 + $0x70] sm:$0xf]
        %v2218 = vld [vmem:[%s11 + $0x74] sm:$0xf]
        %v2219 = vld [vmem:[%s11 + $0x78] sm:$0xf]
        %v2220 = vld [vmem:[%s11 + $0x7c] sm:$0xf]
        %v2221 = vld [vmem:[%s11 + $0x80] sm:$0xf]
        %v2222 = vld [vmem:[%s11 + $0x84] sm:$0xf]
        %v2223 = vld [vmem:[%s11 + $0x88] sm:$0xf]
        %v2224 = vld [vmem:[%s11 + $0x8c] sm:$0xf]
        %v2225 = vld [vmem:[%s11 + $0x90] sm:$0xf]
        %v2226 = vld [vmem:[%s11 + $0x94] sm:$0xf]
        %v2227 = vld [vmem:[%s11 + $0x98] sm:$0xf]
        %v2228 = vld [vmem:[%s11 + $0x9c] sm:$0xf]
        %v2229 = vld [vmem:[%s11 + $0xa0] sm:$0xf]
        %v2230 = vld [vmem:[%s11 + $0xa4] sm:$0xf]
        %v2231 = vld [vmem:[%s11 + $0xa8] sm:$0xf]
        %v2232 = vld [vmem:[%s11 + $0xac] sm:$0xf]
        %v2233 = vld [vmem:[%s11 + $0xb0] sm:$0xf]
        %v2234 = vld [vmem:[%s11 + $0xb4] sm:$0xf]
        %v2235 = vld [vmem:[%s11 + $0xb8] sm:$0xf]
        %v2236 = vld [vmem:[%s11 + $0xbc] sm:$0xf]
        %v2237 = vld [vmem:[%s11 + $0xc0] sm:$0xf]
        %v2238 = vld [vmem:[%s11 + $0xc4] sm:$0xf]
        %v2239 = vld [vmem:[%s11 + $0xc8] sm:$0xf]
        %v2240 = vld [vmem:[%s11 + $0xcc] sm:$0xf]
        %v2241 = vld [vmem:[%s11 + $0xd0] sm:$0xf]
        %v2242 = vld [vmem:[%s11 + $0xd4] sm:$0xf]
        %v2243 = vld [vmem:[%s11 + $0xd8] sm:$0xf]
        %v2244 = vld [vmem:[%s11 + $0xdc] sm:$0xf]
        %v2245 = vld [vmem:[%s11 + $0xe0] sm:$0xf]
        %v2246 = vld [vmem:[%s11 + $0xe4] sm:$0xf]
        %v2247 = vld [vmem:[%s11 + $0xe8] sm:$0xf]
        %v2248 = vld [vmem:[%s11 + $0xec] sm:$0xf]
        %v2249 = vld [vmem:[%s11 + $0xf0] sm:$0xf]
        %v2250 = vld [vmem:[%s11 + $0xf4] sm:$0xf]
        %v2251 = vld [vmem:[%s11 + $0xf8] sm:$0xf]
        %v2252 = vld [vmem:[%s11 + $0xfc] sm:$0xf]
        %v2253 = vpack.c.bf16 %v2185, %v2181
        %v2254 = vpack.c.bf16 %v2186, %v2182
        %v2255 = vpack.c.bf16 %v2187, %v2183
        %v2256 = vpack.c.bf16 %v2188, %v2184
        %v2321 = vunpack.c.l.b16 %v2189
        %v2322 = vunpack.c.l.b16 %v2190
        %v2323 = vunpack.c.l.b16 %v2191
        %v2324 = vunpack.c.l.b16 %v2192
        %v2325 = vunpack.c.l.b16 %v2193
        %v2326 = vunpack.c.l.b16 %v2194
        %v2327 = vunpack.c.l.b16 %v2195
        %v2328 = vunpack.c.l.b16 %v2196
        %v2329 = vunpack.c.l.b16 %v2197
        %v2330 = vunpack.c.l.b16 %v2198
        %v2331 = vunpack.c.l.b16 %v2199
        %v2332 = vunpack.c.l.b16 %v2200
        %v2333 = vunpack.c.l.b16 %v2201
        %v2334 = vunpack.c.l.b16 %v2202
        %v2335 = vunpack.c.l.b16 %v2203
        %v2336 = vunpack.c.l.b16 %v2204
        %v2337 = vunpack.c.l.b16 %v2205
        %v2338 = vunpack.c.l.b16 %v2206
        %v2339 = vunpack.c.l.b16 %v2207
        %v2340 = vunpack.c.l.b16 %v2208
        %v2341 = vunpack.c.l.b16 %v2209
        %v2342 = vunpack.c.l.b16 %v2210
        %v2343 = vunpack.c.l.b16 %v2211
        %v2344 = vunpack.c.l.b16 %v2212
        %v2345 = vunpack.c.l.b16 %v2213
        %v2346 = vunpack.c.l.b16 %v2214
        %v2347 = vunpack.c.l.b16 %v2215
        %v2348 = vunpack.c.l.b16 %v2216
        %v2349 = vunpack.c.l.b16 %v2217
        %v2350 = vunpack.c.l.b16 %v2218
        %v2351 = vunpack.c.l.b16 %v2219
        %v2352 = vunpack.c.l.b16 %v2220
        %v2353 = vunpack.c.l.b16 %v2221
        %v2354 = vunpack.c.l.b16 %v2222
        %v2355 = vunpack.c.l.b16 %v2223
        %v2356 = vunpack.c.l.b16 %v2224
        %v2357 = vunpack.c.l.b16 %v2225
        %v2358 = vunpack.c.l.b16 %v2226
        %v2359 = vunpack.c.l.b16 %v2227
        %v2360 = vunpack.c.l.b16 %v2228
        %v2361 = vunpack.c.l.b16 %v2229
        %v2362 = vunpack.c.l.b16 %v2230
        %v2363 = vunpack.c.l.b16 %v2231
        %v2364 = vunpack.c.l.b16 %v2232
        %v2365 = vunpack.c.l.b16 %v2233
        %v2366 = vunpack.c.l.b16 %v2234
        %v2367 = vunpack.c.l.b16 %v2235
        %v2368 = vunpack.c.l.b16 %v2236
        %v2369 = vunpack.c.l.b16 %v2237
        %v2370 = vunpack.c.l.b16 %v2238
        %v2371 = vunpack.c.l.b16 %v2239
        %v2372 = vunpack.c.l.b16 %v2240
        %v2373 = vunpack.c.l.b16 %v2241
        %v2374 = vunpack.c.l.b16 %v2242
        %v2375 = vunpack.c.l.b16 %v2243
        %v2376 = vunpack.c.l.b16 %v2244
        %v2377 = vunpack.c.l.b16 %v2245
        %v2378 = vunpack.c.l.b16 %v2246
        %v2379 = vunpack.c.l.b16 %v2247
        %v2380 = vunpack.c.l.b16 %v2248
        %v2381 = vunpack.c.l.b16 %v2249
        %v2382 = vunpack.c.l.b16 %v2250
        %v2383 = vunpack.c.l.b16 %v2251
        %v2384 = vunpack.c.l.b16 %v2252
        %v2385 = vpack.c.b16 %v2322, %v2321
        %v2386 = vpack.c.b16 %v2324, %v2323
        %v2387 = vpack.c.b16 %v2326, %v2325
        %v2388 = vpack.c.b16 %v2328, %v2327
        %v2389 = vpack.c.b16 %v2330, %v2329
        %v2390 = vpack.c.b16 %v2332, %v2331
        %v2391 = vpack.c.b16 %v2334, %v2333
        %v2392 = vpack.c.b16 %v2336, %v2335
        %v2393 = vpack.c.b16 %v2338, %v2337
        %v2394 = vpack.c.b16 %v2340, %v2339
        %v2395 = vpack.c.b16 %v2342, %v2341
        %v2396 = vpack.c.b16 %v2344, %v2343
        %v2397 = vpack.c.b16 %v2346, %v2345
        %v2398 = vpack.c.b16 %v2348, %v2347
        %v2399 = vpack.c.b16 %v2350, %v2349
        %v2400 = vpack.c.b16 %v2352, %v2351
        %v2401 = vpack.c.b16 %v2354, %v2353
        %v2402 = vpack.c.b16 %v2356, %v2355
        %v2403 = vpack.c.b16 %v2358, %v2357
        %v2404 = vpack.c.b16 %v2360, %v2359
        %v2405 = vpack.c.b16 %v2362, %v2361
        %v2406 = vpack.c.b16 %v2364, %v2363
        %v2407 = vpack.c.b16 %v2366, %v2365
        %v2408 = vpack.c.b16 %v2368, %v2367
        %v2409 = vpack.c.b16 %v2370, %v2369
        %v2410 = vpack.c.b16 %v2372, %v2371
        %v2411 = vpack.c.b16 %v2374, %v2373
        %v2412 = vpack.c.b16 %v2376, %v2375
        %v2413 = vpack.c.b16 %v2378, %v2377
        %v2414 = vpack.c.b16 %v2380, %v2379
        %v2415 = vpack.c.b16 %v2382, %v2381
        %v2416 = vpack.c.b16 %v2384, %v2383
        %2449 = vmatprep.subr.bf16.mxu0 0
        %2450 = vmatpush1.bf16.msra.mxu0 %v2392
        %2451 = vmatprep.subr.bf16.mxu0 0
        %2452 = vmatpush1.bf16.msra.mxu0 %v2391
        %2453 = vmatprep.subr.bf16.mxu0 0
        %2454 = vmatpush1.bf16.msra.mxu0 %v2390
        %2455 = vmatprep.subr.bf16.mxu0 0
        %2456 = vmatpush1.bf16.msra.mxu0 %v2389
        %2457 = vmatprep.subr.bf16.mxu0 0
        %2458 = vmatpush1.bf16.msra.mxu0 %v2388
        %2459 = vmatprep.subr.bf16.mxu0 0
        %2460 = vmatpush1.bf16.msra.mxu0 %v2387
        %2461 = vmatprep.subr.bf16.mxu0 0
        %2462 = vmatpush1.bf16.msra.mxu0 %v2386
        %2463 = vmatprep.subr.bf16.mxu0 0
        %2464 = vmatpush1.bf16.msra.mxu0 %v2385
        %2465 = vmatprep.subr.bf16.mxu0 0
        %2466 = vmatpush2.bf16.msra.mxu0 %v2400
        %2467 = vmatprep.subr.bf16.mxu0 0
        %2468 = vmatpush2.bf16.msra.mxu0 %v2399
        %2469 = vmatprep.subr.bf16.mxu0 0
        %2470 = vmatpush2.bf16.msra.mxu0 %v2398
        %2471 = vmatprep.subr.bf16.mxu0 0
        %2472 = vmatpush2.bf16.msra.mxu0 %v2397
        %2473 = vmatprep.subr.bf16.mxu0 0
        %2474 = vmatpush2.bf16.msra.mxu0 %v2396
        %2475 = vmatprep.subr.bf16.mxu0 0
        %2476 = vmatpush2.bf16.msra.mxu0 %v2395
        %2477 = vmatprep.subr.bf16.mxu0 0
        %2478 = vmatpush2.bf16.msra.mxu0 %v2394
        %2479 = vmatprep.subr.bf16.mxu0 0
        %2480 = vmatpush2.bf16.msra.mxu0 %v2393
        %2481 = vmatprep.mubr.bf16.mxu0 %v2254
        %2482 = vmatmul.mubr.bf16.gmra.mxu0 %v2253
        %v2483 = vpop.f32.mrf.mxu0
        %v2484 = vadd.f32 0.0, %v2483
        %v2485 = vpop.f32.mrf.mxu0
        %v2486 = vpop.f32.mrf.mxu0
        %v2487 = vadd.f32 0.0, %v2486
        %v2488 = vpop.f32.mrf.mxu0
        %2489 = vdwg.mxu0
        %2490 = vmatprep.subr.bf16.mxu0 0
        %2491 = vmatpush1.bf16.msra.mxu0 %v2408
        %2492 = vmatprep.subr.bf16.mxu0 0
        %2493 = vmatpush1.bf16.msra.mxu0 %v2407
        %2494 = vmatprep.subr.bf16.mxu0 0
        %2495 = vmatpush1.bf16.msra.mxu0 %v2406
        %2496 = vmatprep.subr.bf16.mxu0 0
        %2497 = vmatpush1.bf16.msra.mxu0 %v2405
        %2498 = vmatprep.subr.bf16.mxu0 0
        %2499 = vmatpush1.bf16.msra.mxu0 %v2404
        %2500 = vmatprep.subr.bf16.mxu0 0
        %2501 = vmatpush1.bf16.msra.mxu0 %v2403
        %2502 = vmatprep.subr.bf16.mxu0 0
        %2503 = vmatpush1.bf16.msra.mxu0 %v2402
        %2504 = vmatprep.subr.bf16.mxu0 0
        %2505 = vmatpush1.bf16.msra.mxu0 %v2401
        %2506 = vmatprep.subr.bf16.mxu0 0
        %2507 = vmatpush2.bf16.msra.mxu0 %v2416
        %2508 = vmatprep.subr.bf16.mxu0 0
        %2509 = vmatpush2.bf16.msra.mxu0 %v2415
        %2510 = vmatprep.subr.bf16.mxu0 0
        %2511 = vmatpush2.bf16.msra.mxu0 %v2414
        %2512 = vmatprep.subr.bf16.mxu0 0
        %2513 = vmatpush2.bf16.msra.mxu0 %v2413
        %2514 = vmatprep.subr.bf16.mxu0 0
        %2515 = vmatpush2.bf16.msra.mxu0 %v2412
        %2516 = vmatprep.subr.bf16.mxu0 0
        %2517 = vmatpush2.bf16.msra.mxu0 %v2411
        %2518 = vmatprep.subr.bf16.mxu0 0
        %2519 = vmatpush2.bf16.msra.mxu0 %v2410
        %2520 = vmatprep.subr.bf16.mxu0 0
        %2521 = vmatpush2.bf16.msra.mxu0 %v2409
        %2522 = vmatprep.mubr.bf16.mxu0 %v2256
        %2523 = vmatmul.mubr.bf16.gmra.mxu0 %v2255
        %v2524 = vpop.f32.mrf.mxu0
        %v2525 = vadd.f32 %v2484, %v2524
        %v2526 = vpop.f32.mrf.mxu0
        %v2527 = vpop.f32.mrf.mxu0
        %v2528 = vadd.f32 %v2487, %v2527
        %v2529 = vpop.f32.mrf.mxu0
        %2530 = vdwg.mxu0
        %v2531 = vadd.f32 %v1898, %v2525
        %v2532 = vadd.f32 %v1899, %v2528
        %2533 = vmatprep.subr.mxu0 0.0
        %2534 = vmatpush1.msra.mxu0 0.0
        %2535 = vmatprep.subr.mxu0 0.0
        %2536 = vmatpush1.msra.mxu0 0.0
        %2537 = vmatprep.subr.mxu0 0.0
        %2538 = vmatpush1.msra.mxu0 0.0
        %2539 = vmatprep.subr.mxu0 0.0
        %2540 = vmatpush1.msra.mxu0 0.0
        %2541 = vmatprep.subr.mxu0 0.0
        %2542 = vmatpush1.msra.mxu0 0.0
        %2543 = vmatprep.subr.mxu0 0.0
        %2544 = vmatpush1.msra.mxu0 0.0
        %2545 = vmatprep.subr.mxu0 0.0
        %2546 = vmatpush1.msra.mxu0 0.0
        %2547 = vmatprep.subr.mxu0 0.0
        %2548 = vmatpush1.msra.mxu0 0.0
        %2549 = vmatprep.subr.mxu0 0.0
        %2550 = vmatpush1.msra.mxu0 0.0
        %2551 = vmatprep.subr.mxu0 0.0
        %2552 = vmatpush1.msra.mxu0 0.0
        %2553 = vmatprep.subr.mxu0 0.0
        %2554 = vmatpush1.msra.mxu0 0.0
        %2555 = vmatprep.subr.mxu0 0.0
        %2556 = vmatpush1.msra.mxu0 0.0
        %2557 = vmatprep.subr.mxu0 0.0
        %2558 = vmatpush1.msra.mxu0 0.0
        %2559 = vmatprep.subr.mxu0 0.0
        %2560 = vmatpush1.msra.mxu0 0.0
        %2561 = vmatprep.subr.mxu0 0.0
        %2562 = vmatpush1.msra.mxu0 %v2532
        %2563 = vmatprep.subr.mxu0 0.0
        %2564 = vmatpush1.msra.mxu0 %v2531
        %2565 = vmatprep.subr.mxu0 0.0
        %2566 = vmatpush2.msra.mxu0 0.0
        %2567 = vmatprep.subr.mxu0 0.0
        %2568 = vmatpush2.msra.mxu0 0.0
        %2569 = vmatprep.subr.mxu0 0.0
        %2570 = vmatpush2.msra.mxu0 0.0
        %2571 = vmatprep.subr.mxu0 0.0
        %2572 = vmatpush2.msra.mxu0 0.0
        %2573 = vmatprep.subr.mxu0 0.0
        %2574 = vmatpush2.msra.mxu0 0.0
        %2575 = vmatprep.subr.mxu0 0.0
        %2576 = vmatpush2.msra.mxu0 0.0
        %2577 = vmatprep.subr.mxu0 0.0
        %2578 = vmatpush2.msra.mxu0 0.0
        %2579 = vmatprep.subr.mxu0 0.0
        %2580 = vmatpush2.msra.mxu0 0.0
        %2581 = vmatprep.subr.mxu0 0.0
        %2582 = vmatpush2.msra.mxu0 0.0
        %2583 = vmatprep.subr.mxu0 0.0
        %2584 = vmatpush2.msra.mxu0 0.0
        %2585 = vmatprep.subr.mxu0 0.0
        %2586 = vmatpush2.msra.mxu0 0.0
        %2587 = vmatprep.subr.mxu0 0.0
        %2588 = vmatpush2.msra.mxu0 0.0
        %2589 = vmatprep.subr.mxu0 0.0
        %2590 = vmatpush2.msra.mxu0 0.0
        %2591 = vmatprep.subr.mxu0 0.0
        %2592 = vmatpush2.msra.mxu0 0.0
        %2593 = vmatprep.subr.mxu0 0.0
        %2594 = vmatpush2.msra.mxu0 0.0
        %2595 = vmatprep.subr.mxu0 0.0
        %2596 = vmatpush2.msra.mxu0 0.0
        %2597 = vmatprep.mubr.f32.mxu0 0.0
        %2598 = vmatmul.mubr.f32.gmra.mxu0 %v1272
        %v2599 = vpop.f32.mrf.mxu0
        %v2600 = vadd.f32 0.0, %v2599
        %v2601 = vpop.f32.mrf.mxu0
        %2602 = vmatprep.mubr.f32.mxu0 0.0
        %2603 = vmatmul.mubr.f32.gmra.mxu0 %v1275
        %v2604 = vpop.f32.mrf.mxu0
        %v2605 = vadd.f32 0.0, %v2604
        %v2606 = vpop.f32.mrf.mxu0
        %2607 = vdwg.mxu0
        %v2608 = vsub.f32 %v2531, %v2600
        %v2609 = vsub.f32 %v2532, %v2605
        %v2610 = vadd.f32 %v1900, %v2600
        %v2611 = vadd.f32 %v1901, %v2605
        %v2612 = vrot.slane %v2610, 7
        %v2613 = vrot.slane %v2611, 7
        %v2614 = vlaneseq
        %v2615 = vshrl.u32 %v2614, 7
        %vm2616 = vcmp.lt.s32.totalorder %v2615, 1
        %v2617 = vsel %vm2616, %v2612, %v2613
        %v2618 = vsel %vm2616, %v2613, %v2612
        %v2619 = vrot.slane %v2610, 1
        %v2620 = vrot.slane %v2611, 1
        %vm2621 = vcmp.lt.s32.totalorder %v2615, 7
        %v2622 = vsel %vm2621, %v2619, %v2620
        %v2623 = vsel %vm2621, %v2620, %v2619
        %v2624 = vld [vmem:[%s12] sm:$0xf]
        %v2625 = vld [vmem:[%s12 + $0x4] sm:$0xf]
        %v2626 = vld [vmem:[%s12 + $0x8] sm:$0xf]
        %v2627 = vld [vmem:[%s12 + $0xc] sm:$0xf]
        %v2628 = vld [vmem:[%s12 + $0x10] sm:$0xf]
        %v2629 = vld [vmem:[%s12 + $0x14] sm:$0xf]
        %v2630 = vld [vmem:[%s12 + $0x18] sm:$0xf]
        %v2631 = vld [vmem:[%s12 + $0x1c] sm:$0xf]
        %v2632 = vld [vmem:[%s12 + $0x20] sm:$0xf]
        %v2633 = vld [vmem:[%s12 + $0x24] sm:$0xf]
        %v2634 = vld [vmem:[%s12 + $0x28] sm:$0xf]
        %v2635 = vld [vmem:[%s12 + $0x2c] sm:$0xf]
        %v2636 = vld [vmem:[%s12 + $0x30] sm:$0xf]
        %v2637 = vld [vmem:[%s12 + $0x34] sm:$0xf]
        %v2638 = vld [vmem:[%s12 + $0x38] sm:$0xf]
        %v2639 = vld [vmem:[%s12 + $0x3c] sm:$0xf]
        %v2640 = vld [vmem:[%s12 + $0x40] sm:$0xf]
        %v2641 = vld [vmem:[%s12 + $0x44] sm:$0xf]
        %v2642 = vld [vmem:[%s12 + $0x48] sm:$0xf]
        %v2643 = vld [vmem:[%s12 + $0x4c] sm:$0xf]
        %v2644 = vld [vmem:[%s12 + $0x50] sm:$0xf]
        %v2645 = vld [vmem:[%s12 + $0x54] sm:$0xf]
        %v2646 = vld [vmem:[%s12 + $0x58] sm:$0xf]
        %v2647 = vld [vmem:[%s12 + $0x5c] sm:$0xf]
        %v2648 = vld [vmem:[%s12 + $0x60] sm:$0xf]
        %v2649 = vld [vmem:[%s12 + $0x64] sm:$0xf]
        %v2650 = vld [vmem:[%s12 + $0x68] sm:$0xf]
        %v2651 = vld [vmem:[%s12 + $0x6c] sm:$0xf]
        %v2652 = vld [vmem:[%s12 + $0x70] sm:$0xf]
        %v2653 = vld [vmem:[%s12 + $0x74] sm:$0xf]
        %v2654 = vld [vmem:[%s12 + $0x78] sm:$0xf]
        %v2655 = vld [vmem:[%s12 + $0x7c] sm:$0xf]
        %v2656 = vld [vmem:[%s12 + $0x80] sm:$0xf]
        %v2657 = vld [vmem:[%s12 + $0x84] sm:$0xf]
        %v2658 = vld [vmem:[%s12 + $0x88] sm:$0xf]
        %v2659 = vld [vmem:[%s12 + $0x8c] sm:$0xf]
        %v2660 = vld [vmem:[%s12 + $0x90] sm:$0xf]
        %v2661 = vld [vmem:[%s12 + $0x94] sm:$0xf]
        %v2662 = vld [vmem:[%s12 + $0x98] sm:$0xf]
        %v2663 = vld [vmem:[%s12 + $0x9c] sm:$0xf]
        %v2664 = vld [vmem:[%s12 + $0xa0] sm:$0xf]
        %v2665 = vld [vmem:[%s12 + $0xa4] sm:$0xf]
        %v2666 = vld [vmem:[%s12 + $0xa8] sm:$0xf]
        %v2667 = vld [vmem:[%s12 + $0xac] sm:$0xf]
        %v2668 = vld [vmem:[%s12 + $0xb0] sm:$0xf]
        %v2669 = vld [vmem:[%s12 + $0xb4] sm:$0xf]
        %v2670 = vld [vmem:[%s12 + $0xb8] sm:$0xf]
        %v2671 = vld [vmem:[%s12 + $0xbc] sm:$0xf]
        %v2672 = vpack.c.bf16 %v2617, %v2618
        %v2673 = vpack.c.bf16 %v2611, %v2610
        %v2674 = vpack.c.bf16 %v2623, %v2622
        %2675 = vst [vmem:[%s554] sm:$0xff] %v2608
        %2676 = vst [vmem:[%s554 + $0x8] sm:$0xff] %v2609
        %2678 = vset.pattern.permute.xlu0 0
        %2679 = vperm.xlu0 %2678, %v794
        %v2680 = vpop.permute.xlu0 %2679
        %2683 = vset.pattern.permute.xlu0 0
        %2684 = vperm.xlu0 %2683, %v799
        %v2685 = vpop.permute.xlu0 %2684
        %v2735 = vunpack.c.l.b16 %v2624
        %v2736 = vunpack.c.l.b16 %v2625
        %v2737 = vunpack.c.l.b16 %v2626
        %v2738 = vunpack.c.l.b16 %v2627
        %v2739 = vunpack.c.l.b16 %v2628
        %v2740 = vunpack.c.l.b16 %v2629
        %v2741 = vunpack.c.l.b16 %v2630
        %v2742 = vunpack.c.l.b16 %v2631
        %v2743 = vunpack.c.l.b16 %v2632
        %v2744 = vunpack.c.l.b16 %v2633
        %v2745 = vunpack.c.l.b16 %v2634
        %v2746 = vunpack.c.l.b16 %v2635
        %v2747 = vunpack.c.l.b16 %v2636
        %v2748 = vunpack.c.l.b16 %v2637
        %v2749 = vunpack.c.l.b16 %v2638
        %v2750 = vunpack.c.l.b16 %v2639
        %v2751 = vunpack.c.l.b16 %v2640
        %v2752 = vunpack.c.l.b16 %v2641
        %v2753 = vunpack.c.l.b16 %v2642
        %v2754 = vunpack.c.l.b16 %v2643
        %v2755 = vunpack.c.l.b16 %v2644
        %v2756 = vunpack.c.l.b16 %v2645
        %v2757 = vunpack.c.l.b16 %v2646
        %v2758 = vunpack.c.l.b16 %v2647
        %v2759 = vunpack.c.l.b16 %v2648
        %v2760 = vunpack.c.l.b16 %v2649
        %v2761 = vunpack.c.l.b16 %v2650
        %v2762 = vunpack.c.l.b16 %v2651
        %v2763 = vunpack.c.l.b16 %v2652
        %v2764 = vunpack.c.l.b16 %v2653
        %v2765 = vunpack.c.l.b16 %v2654
        %v2766 = vunpack.c.l.b16 %v2655
        %v2767 = vunpack.c.l.b16 %v2656
        %v2768 = vunpack.c.l.b16 %v2657
        %v2769 = vunpack.c.l.b16 %v2658
        %v2770 = vunpack.c.l.b16 %v2659
        %v2771 = vunpack.c.l.b16 %v2660
        %v2772 = vunpack.c.l.b16 %v2661
        %v2773 = vunpack.c.l.b16 %v2662
        %v2774 = vunpack.c.l.b16 %v2663
        %v2775 = vunpack.c.l.b16 %v2664
        %v2776 = vunpack.c.l.b16 %v2665
        %v2777 = vunpack.c.l.b16 %v2666
        %v2778 = vunpack.c.l.b16 %v2667
        %v2779 = vunpack.c.l.b16 %v2668
        %v2780 = vunpack.c.l.b16 %v2669
        %v2781 = vunpack.c.l.b16 %v2670
        %v2782 = vunpack.c.l.b16 %v2671
        %v2783 = vpack.c.b16 %v2736, %v2735
        %v2784 = vpack.c.b16 %v2738, %v2737
        %v2785 = vpack.c.b16 %v2740, %v2739
        %v2786 = vpack.c.b16 %v2742, %v2741
        %v2787 = vpack.c.b16 %v2744, %v2743
        %v2788 = vpack.c.b16 %v2746, %v2745
        %v2789 = vpack.c.b16 %v2748, %v2747
        %v2790 = vpack.c.b16 %v2750, %v2749
        %v2791 = vpack.c.b16 %v2752, %v2751
        %v2792 = vpack.c.b16 %v2754, %v2753
        %v2793 = vpack.c.b16 %v2756, %v2755
        %v2794 = vpack.c.b16 %v2758, %v2757
        %v2795 = vpack.c.b16 %v2760, %v2759
        %v2796 = vpack.c.b16 %v2762, %v2761
        %v2797 = vpack.c.b16 %v2764, %v2763
        %v2798 = vpack.c.b16 %v2766, %v2765
        %v2799 = vpack.c.b16 %v2768, %v2767
        %v2800 = vpack.c.b16 %v2770, %v2769
        %v2801 = vpack.c.b16 %v2772, %v2771
        %v2802 = vpack.c.b16 %v2774, %v2773
        %v2803 = vpack.c.b16 %v2776, %v2775
        %v2804 = vpack.c.b16 %v2778, %v2777
        %v2805 = vpack.c.b16 %v2780, %v2779
        %v2806 = vpack.c.b16 %v2782, %v2781
        %2831 = vmatprep.subr.bf16.mxu0 0
        %2832 = vmatpush1.bf16.msra.mxu0 %v2790
        %2833 = vmatprep.subr.bf16.mxu0 0
        %2834 = vmatpush1.bf16.msra.mxu0 %v2789
        %2835 = vmatprep.subr.bf16.mxu0 0
        %2836 = vmatpush1.bf16.msra.mxu0 %v2788
        %2837 = vmatprep.subr.bf16.mxu0 0
        %2838 = vmatpush1.bf16.msra.mxu0 %v2787
        %2839 = vmatprep.subr.bf16.mxu0 0
        %2840 = vmatpush1.bf16.msra.mxu0 %v2786
        %2841 = vmatprep.subr.bf16.mxu0 0
        %2842 = vmatpush1.bf16.msra.mxu0 %v2785
        %2843 = vmatprep.subr.bf16.mxu0 0
        %2844 = vmatpush1.bf16.msra.mxu0 %v2784
        %2845 = vmatprep.subr.bf16.mxu0 0
        %2846 = vmatpush1.bf16.msra.mxu0 %v2783
        %2847 = vmatprep.subr.bf16.mxu0 0
        %2848 = vmatpush2.bf16.msra.mxu0 %v2798
        %2849 = vmatprep.subr.bf16.mxu0 0
        %2850 = vmatpush2.bf16.msra.mxu0 %v2797
        %2851 = vmatprep.subr.bf16.mxu0 0
        %2852 = vmatpush2.bf16.msra.mxu0 %v2796
        %2853 = vmatprep.subr.bf16.mxu0 0
        %2854 = vmatpush2.bf16.msra.mxu0 %v2795
        %2855 = vmatprep.subr.bf16.mxu0 0
        %2856 = vmatpush2.bf16.msra.mxu0 %v2794
        %2857 = vmatprep.subr.bf16.mxu0 0
        %2858 = vmatpush2.bf16.msra.mxu0 %v2793
        %2859 = vmatprep.subr.bf16.mxu0 0
        %2860 = vmatpush2.bf16.msra.mxu0 %v2792
        %2861 = vmatprep.subr.bf16.mxu0 0
        %2862 = vmatpush2.bf16.msra.mxu0 %v2791
        %2863 = vmatprep.mubr.bf16.mxu0 %v2673
        %2864 = vmatmul.mubr.bf16.gmra.mxu0 %v2672
        %v2865 = vpop.f32.mrf.mxu0
        %v2866 = vadd.f32 %v2680, %v2865
        %v2867 = vpop.f32.mrf.mxu0
        %v2868 = vpop.f32.mrf.mxu0
        %v2869 = vadd.f32 %v2685, %v2868
        %v2870 = vpop.f32.mrf.mxu0
        %2871 = vdwg.mxu0
        %2872 = vmatprep.subr.bf16.mxu0 0
        %2873 = vmatpush1.bf16.msra.mxu0 %v2806
        %2874 = vmatprep.subr.bf16.mxu0 0
        %2875 = vmatpush1.bf16.msra.mxu0 %v2805
        %2876 = vmatprep.subr.bf16.mxu0 0
        %2877 = vmatpush1.bf16.msra.mxu0 %v2804
        %2878 = vmatprep.subr.bf16.mxu0 0
        %2879 = vmatpush1.bf16.msra.mxu0 %v2803
        %2880 = vmatprep.subr.bf16.mxu0 0
        %2881 = vmatpush1.bf16.msra.mxu0 %v2802
        %2882 = vmatprep.subr.bf16.mxu0 0
        %2883 = vmatpush1.bf16.msra.mxu0 %v2801
        %2884 = vmatprep.subr.bf16.mxu0 0
        %2885 = vmatpush1.bf16.msra.mxu0 %v2800
        %2886 = vmatprep.subr.bf16.mxu0 0
        %2887 = vmatpush1.bf16.msra.mxu0 %v2799
        %2888 = vmatprep.subr.bf16.mxu0 0
        %2889 = vmatpush2.bf16.msra.mxu0 0
        %2890 = vmatprep.subr.bf16.mxu0 0
        %2891 = vmatpush2.bf16.msra.mxu0 0
        %2892 = vmatprep.subr.bf16.mxu0 0
        %2893 = vmatpush2.bf16.msra.mxu0 0
        %2894 = vmatprep.subr.bf16.mxu0 0
        %2895 = vmatpush2.bf16.msra.mxu0 0
        %2896 = vmatprep.subr.bf16.mxu0 0
        %2897 = vmatpush2.bf16.msra.mxu0 0
        %2898 = vmatprep.subr.bf16.mxu0 0
        %2899 = vmatpush2.bf16.msra.mxu0 0
        %2900 = vmatprep.subr.bf16.mxu0 0
        %2901 = vmatpush2.bf16.msra.mxu0 0
        %2902 = vmatprep.subr.bf16.mxu0 0
        %2903 = vmatpush2.bf16.msra.mxu0 0
        %2904 = vmatprep.mubr.bf16.mxu0 0
        %2905 = vmatmul.mubr.bf16.gmra.mxu0 %v2674
        %v2906 = vpop.f32.mrf.mxu0
        %v2907 = vadd.f32 %v2866, %v2906
        %v2908 = vpop.f32.mrf.mxu0
        %v2909 = vpop.f32.mrf.mxu0
        %v2910 = vadd.f32 %v2869, %v2909
        %v2911 = vpop.f32.mrf.mxu0
        %2912 = vdwg.mxu0
        %2913 = vst [vmem:[%s571] sm:$0xff] %v2907
        %2914 = vst [vmem:[%s571 + $0x8] sm:$0xff] %v2910
        %s2915 = sand.u32 %s325, 1
        %s2916 = scalar_lea.sflag [#allocation4], %s2915
        %s2917 = sand.u32 %s325, 1
        %s2918 = smul.addr %s2917, 16
        %s2919 = scalar_lea.vmem [#allocation11], %s2918
        %p2920 = scmp.lt.s32.totalorder %s34, 1
        %s2921 = scalar_select %p2920, %s34, 1
        %s2922 = smul.addr %s2921, 2
        %s2923 = smul.addr %s2922, 8
        %s2924 = scalar_lea.vmem %s14, %s2923
        // Predicated region
        $region93: #{decoder_layer_forward.1} parent=71 // pred_check
          %p2925 = pneg %p335
        $region94: #{decoder_layer_forward.1} parent=71 // pred_check_branch
          %2927 = sbr.rel (%p2925) target = $region96
        $region95: #{decoder_layer_forward.1} parent=71 // pred_region
          %s2929 = ssub.s32 256, 256
          %2930 = vsyncadd %s2916, %s2929
          %s2931 = smul.addr %s34, 2
          %s2932 = smul.addr %s2931, 128
          %s2933 = scalar_lea.hbm %s13, %s2932
          %s2934 = sshll.u32 %s2919, 4
          %s2935 = int_to_ptr.vmem [resolvable:$true] %s2934
          %2940 = dma.vmem_to_hbm [thread:$0]  %s2935, 256, %s2933, %s2916, 128, 128, 8
        $region96: #{decoder_layer_forward.1} parent=71 // pred_fallthru
          _
        // Predicated region
        $region97: #{decoder_layer_forward.1} parent=71 // pred_check
          %p2941 = pneg %p361
        $region98: #{decoder_layer_forward.1} parent=71 // pred_check_branch
          %2943 = sbr.rel (%p2941) target = $region100
        $region99: #{decoder_layer_forward.1} parent=71 // pred_region
          _
        $region100: #{decoder_layer_forward.1} parent=71 // pred_fallthru
          _
      $region72: #{decoder_layer_forward.1} parent=5 // pred_fallthru
        _
      %p2944 = scmp.le.s32.totalorder 2, %s29
      // Predicated region
      $region101: #{decoder_layer_forward.1} parent=5 // pred_check
        %p2945 = pneg %p2944
      $region102: #{decoder_layer_forward.1} parent=5 // pred_check_branch
        %2947 = sbr.rel (%p2945) target = $region104
      $region103: #{decoder_layer_forward.1} parent=5 // pred_region
        %s2948 = ssub.s32 %s29, 2
        // Predicated region
        $region105: #{decoder_layer_forward.1} parent=103 // pred_check
          %p2949 = pneg %p341
        $region106: #{decoder_layer_forward.1} parent=103 // pred_check_branch
          %2951 = sbr.rel (%p2949) target = $region108
        $region107: #{decoder_layer_forward.1} parent=103 // pred_region
          %s2952 = sand.u32 %s326, 1
          %s2953 = scalar_lea.sflag [#allocation4], %s2952
          %s2954 = sand.u32 %s326, 1
          %s2955 = smul.addr %s2954, 16
          %s2956 = scalar_lea.vmem [#allocation11], %s2955
          %2957 = dma.done %s2953, 256
        $region108: #{decoder_layer_forward.1} parent=103 // pred_fallthru
          _
        // Predicated region
        $region109: #{decoder_layer_forward.1} parent=103 // pred_check
          %p2958 = pneg %p367
        $region110: #{decoder_layer_forward.1} parent=103 // pred_check_branch
          %2960 = sbr.rel (%p2958) target = $region112
        $region111: #{decoder_layer_forward.1} parent=103 // pred_region
          %p2961 = scmp.lt.s32.totalorder %s35, 1
          %s2962 = scalar_select %p2961, %s35, 1
          %s2963 = smul.addr %s2962, 2
          %s2964 = smul.addr %s2963, 8
          %s2965 = scalar_lea.vmem %s14, %s2964
        $region112: #{decoder_layer_forward.1} parent=103 // pred_fallthru
          _
      $region104: #{decoder_layer_forward.1} parent=5 // pred_fallthru
        _
    $region6: #{decoder_layer_forward.1} parent=1 // loop_footer
      %s33 = sadd.s32 1, %s29
    $region7: #{decoder_layer_forward.1} parent=1 // loop_footer_branch
      %28 = sbr.rel target = $region3
    $region8: #{decoder_layer_forward.1} parent=1 // loop_exit
      _
    %2966 = vsyncpa [#allocation3], 1
    %s2967 = scalar_lea.sflag [#allocation3], 1
    %2968 = vsyncpa %s2967, 1
    %2969 = vsyncpa [#allocation6], 1
    %2970 = vsyncpa [#allocation9], 1
    %2971 = vsyncpa [#allocation4], 1
    %s2972 = scalar_lea.sflag [#allocation4], 1
    %2973 = vsyncpa %s2972, 1

// kernel: decoder_layer_forward.1
$region0: #{decoder_layer_forward.1}
  #allocation0 [shape = 'u32[]', space=smem, size = 0x4, offset = 0x4, fixed_abs, tag = 'smem constant byte address 0x4 - core index']
  #allocation1 [shape = 'u32[144,128]{1,0:T(1,128)}', space=vmem, size = 0x12000, scoped, tag = 'internal scratch']
  %s0 = inlined_call_operand.vmem [shape: f32[2,12,4], index: 0, kind: input, shape index: {}]
  %s1 = inlined_call_operand.hbm [shape: f32[2,8,128], index: 1, kind: input, shape index: {}]
  %s2 = inlined_call_operand.vmem [shape: f32[2,16,12], index: 2, kind: input, shape index: {}]
  %s3 = inlined_call_operand.vmem [shape: f32[16,16], index: 3, kind: input, shape index: {}]
  %s4 = inlined_call_operand.hbm [shape: bf16[4,128], index: 4, kind: input, shape index: {}]
  %s5 = inlined_call_operand.vmem [shape: bf16[128,384], index: 5, kind: input, shape index: {}]
  %s6 = inlined_call_operand.hbm [shape: bf16[128,128], index: 6, kind: input, shape index: {}]
  %s7 = inlined_call_operand.hbm [shape: bf16[128,128], index: 7, kind: input, shape index: {}]
  %s8 = inlined_call_operand.vmem [shape: bf16[128,256], index: 8, kind: input, shape index: {}]
  %s9 = inlined_call_operand.hbm [shape: bf16[128,128], index: 9, kind: input, shape index: {}]
  %s10 = inlined_call_operand.vmem [shape: bf16[128,512], index: 10, kind: input, shape index: {}]
  %s11 = inlined_call_operand.vmem [shape: bf16[512,128], index: 11, kind: input, shape index: {}]
  %s12 = inlined_call_operand.vmem [shape: bf16[384,128], index: 12, kind: input, shape index: {}]
  %s13 = inlined_call_operand.hbm [shape: f32[2,16,128], index: 13, kind: output, shape index: {0}]
  %s14 = inlined_call_operand.vmem [shape: f32[2,16,128], index: 14, kind: output, shape index: {1}]
  %15 = xla_tuple %s13, %s14
  %s16 = sld [smem:[#allocation0]]
  $region113: #{decoder_layer_forward.1} parent=0
    _
  %s18 = ssub.s32 1, %s16
  %s19 = scalar_select 0, %s18, %s16
  $region1: #{decoder_layer_forward.1} parent=0
    #allocation2 [shape = 'u8[8192]{0}', space=vmem, size = 0x2000, scoped, tag = 'input window, operand 1']
    #allocation3 [shape = 's32[2]{0}', space=sflag, size = 0x8, scoped, tag = 'scoped memory for decoder_layer_forward.1']
    #allocation4 [shape = 's32[2]{0}', space=sflag, size = 0x8, scoped, tag = 'scoped memory for decoder_layer_forward.1']
    #allocation5 [shape = 'u8[1024]{0}', space=vmem, size = 0x400, scoped, tag = 'input window, operand 4, single buffered']
    #allocation6 [shape = 's32[1]{0}', space=sflag, size = 0x4, scoped, tag = 'scoped memory for decoder_layer_forward.1']
    #allocation7 [shape = 'u8[32768]{0}', space=vmem, size = 0x8000, scoped, tag = 'input window, operand 6, single buffered']
    #allocation8 [shape = 'u8[32768]{0}', space=vmem, size = 0x8000, scoped, tag = 'input window, operand 7, single buffered']
    #allocation9 [shape = 's32[1]{0}', space=sflag, size = 0x4, scoped, tag = 'scoped memory for decoder_layer_forward.1']
    #allocation10 [shape = 'u8[32768]{0}', space=vmem, size = 0x8000, scoped, tag = 'input window, operand 9, single buffered']
    #allocation11 [shape = 'u8[16384]{0}', space=vmem, size = 0x4000, scoped, tag = 'output window, operand 0']
    %20 = vsyncpa [#allocation3], 0
    %s21 = scalar_lea.sflag [#allocation3], 1
    %22 = vsyncpa %s21, 0
    %23 = vsyncpa [#allocation6], 0
    %24 = vsyncpa [#allocation9], 0
    %25 = vsyncpa [#allocation4], 0
    %s26 = scalar_lea.sflag [#allocation4], 1
    %27 = vsyncpa %s26, 0
    loop: start=0, step=1, limit=4
    $region2: #{decoder_layer_forward.1} parent=1 // loop_pre_header
      _
    $region3: #{decoder_layer_forward.1} parent=1 // loop_header
      %s29 = sphi 0, %s33
      %p30 = scmp.ge.s32.totalorder %s29, 4
      %s39 = sphi 0, %s41
      %s42 = sphi 0, %s39
      %s43 = sphi 0, %s42
      %s59 = sphi 0, %s43
      %s65 = sphi 0, %s67
      %s68 = sphi 0, %s65
      %s69 = sphi 0, %s68
      %s85 = sphi 0, %s69
      %s89 = sphi 0, %s89
      %s91 = sphi 0, %s89
      %s92 = sphi 0, %s91
      %s106 = sphi 0, %s92
      %s110 = sphi 0, %s110
      %s112 = sphi 0, %s110
      %s113 = sphi 0, %s112
      %s127 = sphi 0, %s113
      %s131 = sphi 0, %s131
      %s133 = sphi 0, %s131
      %s134 = sphi 0, %s133
      %s148 = sphi 0, %s134
      %s152 = sphi 0, %s152
      %s154 = sphi 0, %s152
      %s155 = sphi 0, %s154
      %s169 = sphi 0, %s155
      %s173 = sphi 0, %s173
      %s175 = sphi 0, %s173
      %s176 = sphi 0, %s175
      %s190 = sphi 0, %s176
      %s194 = sphi 0, %s194
      %s196 = sphi 0, %s194
      %s197 = sphi 0, %s196
      %s211 = sphi 0, %s197
      %s215 = sphi 0, %s215
      %s217 = sphi 0, %s215
      %s218 = sphi 0, %s217
      %s232 = sphi 0, %s218
      %s236 = sphi 0, %s236
      %s238 = sphi 0, %s236
      %s239 = sphi 0, %s238
      %s253 = sphi 0, %s239
      %s257 = sphi 0, %s257
      %s259 = sphi 0, %s257
      %s260 = sphi 0, %s259
      %s274 = sphi 0, %s260
      %s278 = sphi 0, %s278
      %s280 = sphi 0, %s278
      %s281 = sphi 0, %s280
      %s295 = sphi 0, %s281
      %s299 = sphi 0, %s299
      %s301 = sphi 0, %s299
      %s302 = sphi 0, %s301
      %s316 = sphi 0, %s302
      %s322 = sphi 0, %s324
      %s325 = sphi 0, %s322
      %s326 = sphi 0, %s325
      %s342 = sphi 0, %s326
      %s348 = sphi 0, %s350
      %s351 = sphi 0, %s348
      %s352 = sphi 0, %s351
      %s368 = sphi 0, %s352
    $region4: #{decoder_layer_forward.1} parent=1 // loop_header_branch
      %32 = sbr.rel (%p30) target = $region8
    $region5: #{decoder_layer_forward.1} parent=1 // loop_body
      %s34 = ssub.s32 %s29, 1
      %s35 = ssub.s32 %s29, 2
      %s36 = sadd.s32 %s29, 1
      %s37 = ssub.s32 %s29, %s36
      %p38 = scmp.eq.s32.totalorder %s37, 0
      %s40 = sadd.s32 %s39, 1
      %s41 = scalar_select %p38, %s39, %s40
      %p44 = pneg %p38
      %p45 = scmp.eq.s32.totalorder %s29, 1
      %p46 = por %p44, %p45
      %p47 = scmp.ne.s32.totalorder %s39, %s42
      %p48 = scmp.eq.s32.totalorder %s29, 0
      %p49 = por %p47, %p48
      %p50 = scmp.ne.s32.totalorder %s39, %s42
      %p51 = scmp.eq.s32.totalorder %s34, 1
      %p52 = por %p50, %p51
      %p53 = scmp.ne.s32.totalorder %s42, %s43
      %p54 = scmp.eq.s32.totalorder %s34, 0
      %p55 = por %p53, %p54
      %p56 = scmp.ne.s32.totalorder %s42, %s43
      %p57 = scmp.eq.s32.totalorder %s35, 1
      %p58 = por %p56, %p57
      %p60 = scmp.ne.s32.totalorder %s43, %s59
      %p61 = scmp.eq.s32.totalorder %s35, 0
      %p62 = por %p60, %p61
      %s63 = ssub.s32 %s29, %s36
      %p64 = scmp.eq.s32.totalorder %s63, 0
      %s66 = sadd.s32 %s65, 1
      %s67 = scalar_select %p64, %s65, %s66
      %p70 = pneg %p64
      %p71 = scmp.eq.s32.totalorder %s29, 1
      %p72 = por %p70, %p71
      %p73 = scmp.ne.s32.totalorder %s65, %s68
      %p74 = scmp.eq.s32.totalorder %s29, 0
      %p75 = por %p73, %p74
      %p76 = scmp.ne.s32.totalorder %s65, %s68
      %p77 = scmp.eq.s32.totalorder %s34, 1
      %p78 = por %p76, %p77
      %p79 = scmp.ne.s32.totalorder %s68, %s69
      %p80 = scmp.eq.s32.totalorder %s34, 0
      %p81 = por %p79, %p80
      %p82 = scmp.ne.s32.totalorder %s68, %s69
      %p83 = scmp.eq.s32.totalorder %s35, 1
      %p84 = por %p82, %p83
      %p86 = scmp.ne.s32.totalorder %s69, %s85
      %p87 = scmp.eq.s32.totalorder %s35, 0
      %p88 = por %p86, %p87
      %s90 = sadd.s32 %s89, 1
      %p93 = scmp.eq.s32.totalorder %s29, 1
      %p94 = scmp.ne.s32.totalorder %s89, %s91
      %p95 = scmp.eq.s32.totalorder %s29, 0
      %p96 = por %p94, %p95
      %p97 = scmp.ne.s32.totalorder %s89, %s91
      %p98 = scmp.eq.s32.totalorder %s34, 1
      %p99 = por %p97, %p98
      %p100 = scmp.ne.s32.totalorder %s91, %s92
      %p101 = scmp.eq.s32.totalorder %s34, 0
      %p102 = por %p100, %p101
      %p103 = scmp.ne.s32.totalorder %s91, %s92
      %p104 = scmp.eq.s32.totalorder %s35, 1
      %p105 = por %p103, %p104
      %p107 = scmp.ne.s32.totalorder %s92, %s106
      %p108 = scmp.eq.s32.totalorder %s35, 0
      %p109 = por %p107, %p108
      %s111 = sadd.s32 %s110, 1
      %p114 = scmp.eq.s32.totalorder %s29, 1
      %p115 = scmp.ne.s32.totalorder %s110, %s112
      %p116 = scmp.eq.s32.totalorder %s29, 0
      %p117 = por %p115, %p116
      %p118 = scmp.ne.s32.totalorder %s110, %s112
      %p119 = scmp.eq.s32.totalorder %s34, 1
      %p120 = por %p118, %p119
      %p121 = scmp.ne.s32.totalorder %s112, %s113
      %p122 = scmp.eq.s32.totalorder %s34, 0
      %p123 = por %p121, %p122
      %p124 = scmp.ne.s32.totalorder %s112, %s113
      %p125 = scmp.eq.s32.totalorder %s35, 1
      %p126 = por %p124, %p125
      %p128 = scmp.ne.s32.totalorder %s113, %s127
      %p129 = scmp.eq.s32.totalorder %s35, 0
      %p130 = por %p128, %p129
      %s132 = sadd.s32 %s131, 1
      %p135 = scmp.eq.s32.totalorder %s29, 1
      %p136 = scmp.ne.s32.totalorder %s131, %s133
      %p137 = scmp.eq.s32.totalorder %s29, 0
      %p138 = por %p136, %p137
      %p139 = scmp.ne.s32.totalorder %s131, %s133
      %p140 = scmp.eq.s32.totalorder %s34, 1
      %p141 = por %p139, %p140
      %p142 = scmp.ne.s32.totalorder %s133, %s134
      %p143 = scmp.eq.s32.totalorder %s34, 0
      %p144 = por %p142, %p143
      %p145 = scmp.ne.s32.totalorder %s133, %s134
      %p146 = scmp.eq.s32.totalorder %s35, 1
      %p147 = por %p145, %p146
      %p149 = scmp.ne.s32.totalorder %s134, %s148
      %p150 = scmp.eq.s32.totalorder %s35, 0
      %p151 = por %p149, %p150
      %s153 = sadd.s32 %s152, 1
      %p156 = scmp.eq.s32.totalorder %s29, 1
      %p157 = scmp.ne.s32.totalorder %s152, %s154
      %p158 = scmp.eq.s32.totalorder %s29, 0
      %p159 = por %p157, %p158
      %p160 = scmp.ne.s32.totalorder %s152, %s154
      %p161 = scmp.eq.s32.totalorder %s34, 1
      %p162 = por %p160, %p161
      %p163 = scmp.ne.s32.totalorder %s154, %s155
      %p164 = scmp.eq.s32.totalorder %s34, 0
      %p165 = por %p163, %p164
      %p166 = scmp.ne.s32.totalorder %s154, %s155
      %p167 = scmp.eq.s32.totalorder %s35, 1
      %p168 = por %p166, %p167
      %p170 = scmp.ne.s32.totalorder %s155, %s169
      %p171 = scmp.eq.s32.totalorder %s35, 0
      %p172 = por %p170, %p171
      %s174 = sadd.s32 %s173, 1
      %p177 = scmp.eq.s32.totalorder %s29, 1
      %p178 = scmp.ne.s32.totalorder %s173, %s175
      %p179 = scmp.eq.s32.totalorder %s29, 0
      %p180 = por %p178, %p179
      %p181 = scmp.ne.s32.totalorder %s173, %s175
      %p182 = scmp.eq.s32.totalorder %s34, 1
      %p183 = por %p181, %p182
      %p184 = scmp.ne.s32.totalorder %s175, %s176
      %p185 = scmp.eq.s32.totalorder %s34, 0
      %p186 = por %p184, %p185
      %p187 = scmp.ne.s32.totalorder %s175, %s176
      %p188 = scmp.eq.s32.totalorder %s35, 1
      %p189 = por %p187, %p188
      %p191 = scmp.ne.s32.totalorder %s176, %s190
      %p192 = scmp.eq.s32.totalorder %s35, 0
      %p193 = por %p191, %p192
      %s195 = sadd.s32 %s194, 1
      %p198 = scmp.eq.s32.totalorder %s29, 1
      %p199 = scmp.ne.s32.totalorder %s194, %s196
      %p200 = scmp.eq.s32.totalorder %s29, 0
      %p201 = por %p199, %p200
      %p202 = scmp.ne.s32.totalorder %s194, %s196
      %p203 = scmp.eq.s32.totalorder %s34, 1
      %p204 = por %p202, %p203
      %p205 = scmp.ne.s32.totalorder %s196, %s197
      %p206 = scmp.eq.s32.totalorder %s34, 0
      %p207 = por %p205, %p206
      %p208 = scmp.ne.s32.totalorder %s196, %s197
      %p209 = scmp.eq.s32.totalorder %s35, 1
      %p210 = por %p208, %p209
      %p212 = scmp.ne.s32.totalorder %s197, %s211
      %p213 = scmp.eq.s32.totalorder %s35, 0
      %p214 = por %p212, %p213
      %s216 = sadd.s32 %s215, 1
      %p219 = scmp.eq.s32.totalorder %s29, 1
      %p220 = scmp.ne.s32.totalorder %s215, %s217
      %p221 = scmp.eq.s32.totalorder %s29, 0
      %p222 = por %p220, %p221
      %p223 = scmp.ne.s32.totalorder %s215, %s217
      %p224 = scmp.eq.s32.totalorder %s34, 1
      %p225 = por %p223, %p224
      %p226 = scmp.ne.s32.totalorder %s217, %s218
      %p227 = scmp.eq.s32.totalorder %s34, 0
      %p228 = por %p226, %p227
      %p229 = scmp.ne.s32.totalorder %s217, %s218
      %p230 = scmp.eq.s32.totalorder %s35, 1
      %p231 = por %p229, %p230
      %p233 = scmp.ne.s32.totalorder %s218, %s232
      %p234 = scmp.eq.s32.totalorder %s35, 0
      %p235 = por %p233, %p234
      %s237 = sadd.s32 %s236, 1
      %p240 = scmp.eq.s32.totalorder %s29, 1
      %p241 = scmp.ne.s32.totalorder %s236, %s238
      %p242 = scmp.eq.s32.totalorder %s29, 0
      %p243 = por %p241, %p242
      %p244 = scmp.ne.s32.totalorder %s236, %s238
      %p245 = scmp.eq.s32.totalorder %s34, 1
      %p246 = por %p244, %p245
      %p247 = scmp.ne.s32.totalorder %s238, %s239
      %p248 = scmp.eq.s32.totalorder %s34, 0
      %p249 = por %p247, %p248
      %p250 = scmp.ne.s32.totalorder %s238, %s239
      %p251 = scmp.eq.s32.totalorder %s35, 1
      %p252 = por %p250, %p251
      %p254 = scmp.ne.s32.totalorder %s239, %s253
      %p255 = scmp.eq.s32.totalorder %s35, 0
      %p256 = por %p254, %p255
      %s258 = sadd.s32 %s257, 1
      %p261 = scmp.eq.s32.totalorder %s29, 1
      %p262 = scmp.ne.s32.totalorder %s257, %s259
      %p263 = scmp.eq.s32.totalorder %s29, 0
      %p264 = por %p262, %p263
      %p265 = scmp.ne.s32.totalorder %s257, %s259
      %p266 = scmp.eq.s32.totalorder %s34, 1
      %p267 = por %p265, %p266
      %p268 = scmp.ne.s32.totalorder %s259, %s260
      %p269 = scmp.eq.s32.totalorder %s34, 0
      %p270 = por %p268, %p269
      %p271 = scmp.ne.s32.totalorder %s259, %s260
      %p272 = scmp.eq.s32.totalorder %s35, 1
      %p273 = por %p271, %p272
      %p275 = scmp.ne.s32.totalorder %s260, %s274
      %p276 = scmp.eq.s32.totalorder %s35, 0
      %p277 = por %p275, %p276
      %s279 = sadd.s32 %s278, 1
      %p282 = scmp.eq.s32.totalorder %s29, 1
      %p283 = scmp.ne.s32.totalorder %s278, %s280
      %p284 = scmp.eq.s32.totalorder %s29, 0
      %p285 = por %p283, %p284
      %p286 = scmp.ne.s32.totalorder %s278, %s280
      %p287 = scmp.eq.s32.totalorder %s34, 1
      %p288 = por %p286, %p287
      %p289 = scmp.ne.s32.totalorder %s280, %s281
      %p290 = scmp.eq.s32.totalorder %s34, 0
      %p291 = por %p289, %p290
      %p292 = scmp.ne.s32.totalorder %s280, %s281
      %p293 = scmp.eq.s32.totalorder %s35, 1
      %p294 = por %p292, %p293
      %p296 = scmp.ne.s32.totalorder %s281, %s295
      %p297 = scmp.eq.s32.totalorder %s35, 0
      %p298 = por %p296, %p297
      %s300 = sadd.s32 %s299, 1
      %p303 = scmp.eq.s32.totalorder %s29, 1
      %p304 = scmp.ne.s32.totalorder %s299, %s301
      %p305 = scmp.eq.s32.totalorder %s29, 0
      %p306 = por %p304, %p305
      %p307 = scmp.ne.s32.totalorder %s299, %s301
      %p308 = scmp.eq.s32.totalorder %s34, 1
      %p309 = por %p307, %p308
      %p310 = scmp.ne.s32.totalorder %s301, %s302
      %p311 = scmp.eq.s32.totalorder %s34, 0
      %p312 = por %p310, %p311
      %p313 = scmp.ne.s32.totalorder %s301, %s302
      %p314 = scmp.eq.s32.totalorder %s35, 1
      %p315 = por %p313, %p314
      %p317 = scmp.ne.s32.totalorder %s302, %s316
      %p318 = scmp.eq.s32.totalorder %s35, 0
      %p319 = por %p317, %p318
      %s320 = ssub.s32 %s29, %s36
      %p321 = scmp.eq.s32.totalorder %s320, 0
      %s323 = sadd.s32 %s322, 1
      %s324 = scalar_select %p321, %s322, %s323
      %p327 = pneg %p321
      %p328 = scmp.eq.s32.totalorder %s29, 1
      %p329 = por %p327, %p328
      %p330 = scmp.ne.s32.totalorder %s322, %s325
      %p331 = scmp.eq.s32.totalorder %s29, 0
      %p332 = por %p330, %p331
      %p333 = scmp.ne.s32.totalorder %s322, %s325
      %p334 = scmp.eq.s32.totalorder %s34, 1
      %p335 = por %p333, %p334
      %p336 = scmp.ne.s32.totalorder %s325, %s326
      %p337 = scmp.eq.s32.totalorder %s34, 0
      %p338 = por %p336, %p337
      %p339 = scmp.ne.s32.totalorder %s325, %s326
      %p340 = scmp.eq.s32.totalorder %s35, 1
      %p341 = por %p339, %p340
      %p343 = scmp.ne.s32.totalorder %s326, %s342
      %p344 = scmp.eq.s32.totalorder %s35, 0
      %p345 = por %p343, %p344
      %s346 = ssub.s32 %s29, %s36
      %p347 = scmp.eq.s32.totalorder %s346, 0
      %s349 = sadd.s32 %s348, 1
      %s350 = scalar_select %p347, %s348, %s349
      %p353 = pneg %p347
      %p354 = scmp.eq.s32.totalorder %s29, 1
      %p355 = por %p353, %p354
      %p356 = scmp.ne.s32.totalorder %s348, %s351
      %p357 = scmp.eq.s32.totalorder %s29, 0
      %p358 = por %p356, %p357
      %p359 = scmp.ne.s32.totalorder %s348, %s351
      %p360 = scmp.eq.s32.totalorder %s34, 1
      %p361 = por %p359, %p360
      %p362 = scmp.ne.s32.totalorder %s351, %s352
      %p363 = scmp.eq.s32.totalorder %s34, 0
      %p364 = por %p362, %p363
      %p365 = scmp.ne.s32.totalorder %s351, %s352
      %p366 = scmp.eq.s32.totalorder %s35, 1
      %p367 = por %p365, %p366
      %p369 = scmp.ne.s32.totalorder %s352, %s368
      %p370 = scmp.eq.s32.totalorder %s35, 0
      %p371 = por %p369, %p370
      %p372 = scmp.le.s32.totalorder 1, %s29
      %p373 = scmp.lt.s32.totalorder %s29, 3
      %p374 = pnand %p372, %p373
      %p375 = pneg %p374
      // Predicated region
      $region9: #{decoder_layer_forward.1} parent=5 // pred_check
        _
      $region10: #{decoder_layer_forward.1} parent=5 // pred_check_branch
        %377 = sbr.rel (%p374) target = $region12
      $region11: #{decoder_layer_forward.1} parent=5 // pred_region
        %s378 = ssub.s32 %s29, 1
        // Predicated region
        $region13: #{decoder_layer_forward.1} parent=11 // pred_check
          %p379 = pneg %p102
        $region14: #{decoder_layer_forward.1} parent=11 // pred_check_branch
          %381 = sbr.rel (%p379) target = $region16
        $region15: #{decoder_layer_forward.1} parent=11 // pred_region
          _
        $region16: #{decoder_layer_forward.1} parent=11 // pred_fallthru
          _
        // Predicated region
        $region17: #{decoder_layer_forward.1} parent=11 // pred_check
          %p382 = pneg %p123
        $region18: #{decoder_layer_forward.1} parent=11 // pred_check_branch
          %384 = sbr.rel (%p382) target = $region20
        $region19: #{decoder_layer_forward.1} parent=11 // pred_region
          _
        $region20: #{decoder_layer_forward.1} parent=11 // pred_fallthru
          _
        // Predicated region
        $region21: #{decoder_layer_forward.1} parent=11 // pred_check
          %p385 = pneg %p144
        $region22: #{decoder_layer_forward.1} parent=11 // pred_check_branch
          %387 = sbr.rel (%p385) target = $region24
        $region23: #{decoder_layer_forward.1} parent=11 // pred_region
          %s389 = ssub.s32 32, 32
          %390 = vsyncadd [#allocation6], %s389
          %s392 = sshll.u32 [#allocation5], 4
          %s393 = int_to_ptr.vmem [resolvable:$true] %s392
          %395 = dma.hbm_to_vmem [thread:$0]  %s4, 32, %s393, [#allocation6]
        $region24: #{decoder_layer_forward.1} parent=11 // pred_fallthru
          _
        // Predicated region
        $region25: #{decoder_layer_forward.1} parent=11 // pred_check
          %p396 = pneg %p165
        $region26: #{decoder_layer_forward.1} parent=11 // pred_check_branch
          %398 = sbr.rel (%p396) target = $region28
        $region27: #{decoder_layer_forward.1} parent=11 // pred_region
          _
        $region28: #{decoder_layer_forward.1} parent=11 // pred_fallthru
          _
        // Predicated region
        $region29: #{decoder_layer_forward.1} parent=11 // pred_check
          %p399 = pneg %p186
        $region30: #{decoder_layer_forward.1} parent=11 // pred_check_branch
          %401 = sbr.rel (%p399) target = $region32
        $region31: #{decoder_layer_forward.1} parent=11 // pred_region
          %s403 = ssub.s32 1024, 1024
          %404 = vsyncadd [#allocation6], %s403
          %s405 = sshll.u32 [#allocation7], 4
          %s406 = int_to_ptr.vmem [resolvable:$true] %s405
          %411 = dma.hbm_to_vmem [thread:$0]  %s6, 1024, %s406, [#allocation6], 64, 64, 4
        $region32: #{decoder_layer_forward.1} parent=11 // pred_fallthru
          _
        // Predicated region
        $region33: #{decoder_layer_forward.1} parent=11 // pred_check
          %p412 = pneg %p207
        $region34: #{decoder_layer_forward.1} parent=11 // pred_check_branch
          %414 = sbr.rel (%p412) target = $region36
        $region35: #{decoder_layer_forward.1} parent=11 // pred_region
          %s416 = ssub.s32 1024, 1024
          %417 = vsyncadd [#allocation9], %s416
          %s418 = sshll.u32 [#allocation8], 4
          %s419 = int_to_ptr.vmem [resolvable:$true] %s418
          %424 = dma.hbm_to_vmem [thread:$0]  %s7, 1024, %s419, [#allocation9], 64, 64, 4
        $region36: #{decoder_layer_forward.1} parent=11 // pred_fallthru
          _
        // Predicated region
        $region37: #{decoder_layer_forward.1} parent=11 // pred_check
          %p425 = pneg %p228
        $region38: #{decoder_layer_forward.1} parent=11 // pred_check_branch
          %427 = sbr.rel (%p425) target = $region40
        $region39: #{decoder_layer_forward.1} parent=11 // pred_region
          _
        $region40: #{decoder_layer_forward.1} parent=11 // pred_fallthru
          _
        // Predicated region
        $region41: #{decoder_layer_forward.1} parent=11 // pred_check
          %p428 = pneg %p249
        $region42: #{decoder_layer_forward.1} parent=11 // pred_check_branch
          %430 = sbr.rel (%p428) target = $region44
        $region43: #{decoder_layer_forward.1} parent=11 // pred_region
          %s432 = ssub.s32 1024, 1024
          %433 = vsyncadd [#allocation9], %s432
          %s434 = sshll.u32 [#allocation10], 4
          %s435 = int_to_ptr.vmem [resolvable:$true] %s434
          %440 = dma.hbm_to_vmem [thread:$0]  %s9, 1024, %s435, [#allocation9], 64, 64, 4
        $region44: #{decoder_layer_forward.1} parent=11 // pred_fallthru
          _
        // Predicated region
        $region45: #{decoder_layer_forward.1} parent=11 // pred_check
          %p441 = pneg %p270
        $region46: #{decoder_layer_forward.1} parent=11 // pred_check_branch
          %443 = sbr.rel (%p441) target = $region48
        $region47: #{decoder_layer_forward.1} parent=11 // pred_region
          _
        $region48: #{decoder_layer_forward.1} parent=11 // pred_fallthru
          _
        // Predicated region
        $region49: #{decoder_layer_forward.1} parent=11 // pred_check
          %p444 = pneg %p291
        $region50: #{decoder_layer_forward.1} parent=11 // pred_check_branch
          %446 = sbr.rel (%p444) target = $region52
        $region51: #{decoder_layer_forward.1} parent=11 // pred_region
          _
        $region52: #{decoder_layer_forward.1} parent=11 // pred_fallthru
          _
        // Predicated region
        $region53: #{decoder_layer_forward.1} parent=11 // pred_check
          %p447 = pneg %p312
        $region54: #{decoder_layer_forward.1} parent=11 // pred_check_branch
          %449 = sbr.rel (%p447) target = $region56
        $region55: #{decoder_layer_forward.1} parent=11 // pred_region
          _
        $region56: #{decoder_layer_forward.1} parent=11 // pred_fallthru
          _
      $region12: #{decoder_layer_forward.1} parent=5 // pred_fallthru
        _
      %p450 = scmp.lt.s32.totalorder %s29, 2
      // Predicated region
      $region57: #{decoder_layer_forward.1} parent=5 // pred_check
        %p451 = pneg %p450
      $region58: #{decoder_layer_forward.1} parent=5 // pred_check_branch
        %453 = sbr.rel (%p451) target = $region60
      $region59: #{decoder_layer_forward.1} parent=5 // pred_region
        // Predicated region
        $region61: #{decoder_layer_forward.1} parent=59 // pred_check
          %p454 = pneg %p49
        $region62: #{decoder_layer_forward.1} parent=59 // pred_check_branch
          %456 = sbr.rel (%p454) target = $region64
        $region63: #{decoder_layer_forward.1} parent=59 // pred_region
          %p457 = scmp.lt.s32.totalorder %s29, 1
          %s458 = scalar_select %p457, %s29, 1
          %s459 = smul.addr %s458, 2
          %s460 = smul.addr %s459, 8
          %s461 = scalar_lea.vmem %s0, %s460
        $region64: #{decoder_layer_forward.1} parent=59 // pred_fallthru
          _
        // Predicated region
        $region65: #{decoder_layer_forward.1} parent=59 // pred_check
          %p462 = pneg %p75
        $region66: #{decoder_layer_forward.1} parent=59 // pred_check_branch
          %464 = sbr.rel (%p462) target = $region68
        $region67: #{decoder_layer_forward.1} parent=59 // pred_region
          %s465 = sand.u32 %s65, 1
          %s466 = scalar_lea.sflag [#allocation3], %s465
          %s467 = sand.u32 %s65, 1
          %s468 = smul.addr %s467, 8
          %s469 = scalar_lea.vmem [#allocation2], %s468
          %s471 = ssub.s32 128, 128
          %472 = vsyncadd %s466, %s471
          %s473 = smul.addr %s29, 128
          %s474 = scalar_lea.hbm %s1, %s473
          %s476 = sshll.u32 %s469, 4
          %s477 = int_to_ptr.vmem [resolvable:$true] %s476
          %479 = dma.hbm_to_vmem [thread:$0]  %s474, 128, %s477, %s466
        $region68: #{decoder_layer_forward.1} parent=59 // pred_fallthru
          _
      $region60: #{decoder_layer_forward.1} parent=5 // pred_fallthru
        _
      %p480 = scmp.le.s32.totalorder 1, %s29
      %p481 = scmp.lt.s32.totalorder %s29, 3
      %p482 = pnand %p480, %p481
      %p483 = pneg %p482
      // Predicated region
      $region69: #{decoder_layer_forward.1} parent=5 // pred_check
        _
      $region70: #{decoder_layer_forward.1} parent=5 // pred_check_branch
        %485 = sbr.rel (%p482) target = $region72
      $region71: #{decoder_layer_forward.1} parent=5 // pred_region
        %s486 = ssub.s32 %s29, 1
        %s487 = sand.u32 %s68, 1
        %s488 = scalar_lea.sflag [#allocation3], %s487
        %s489 = sand.u32 %s68, 1
        %s490 = smul.addr %s489, 8
        %s491 = scalar_lea.vmem [#allocation2], %s490
        // Predicated region
        $region73: #{decoder_layer_forward.1} parent=71 // pred_check
          %p492 = pneg %p81
        $region74: #{decoder_layer_forward.1} parent=71 // pred_check_branch
          %494 = sbr.rel (%p492) target = $region76
        $region75: #{decoder_layer_forward.1} parent=71 // pred_region
          %495 = dma.done %s488, 128
        $region76: #{decoder_layer_forward.1} parent=71 // pred_fallthru
          _
        // Predicated region
        $region77: #{decoder_layer_forward.1} parent=71 // pred_check
          %p496 = pneg %p144
        $region78: #{decoder_layer_forward.1} parent=71 // pred_check_branch
          %498 = sbr.rel (%p496) target = $region80
        $region79: #{decoder_layer_forward.1} parent=71 // pred_region
          %499 = dma.done [#allocation6], 32
        $region80: #{decoder_layer_forward.1} parent=71 // pred_fallthru
          _
        // Predicated region
        $region81: #{decoder_layer_forward.1} parent=71 // pred_check
          %p500 = pneg %p186
        $region82: #{decoder_layer_forward.1} parent=71 // pred_check_branch
          %502 = sbr.rel (%p500) target = $region84
        $region83: #{decoder_layer_forward.1} parent=71 // pred_region
          %503 = dma.done [#allocation6], 1024
        $region84: #{decoder_layer_forward.1} parent=71 // pred_fallthru
          _
        // Predicated region
        $region85: #{decoder_layer_forward.1} parent=71 // pred_check
          %p504 = pneg %p207
        $region86: #{decoder_layer_forward.1} parent=71 // pred_check_branch
          %506 = sbr.rel (%p504) target = $region88
        $region87: #{decoder_layer_forward.1} parent=71 // pred_region
          %507 = dma.done [#allocation9], 1024
        $region88: #{decoder_layer_forward.1} parent=71 // pred_fallthru
          _
        // Predicated region
        $region89: #{decoder_layer_forward.1} parent=71 // pred_check
          %p508 = pneg %p249
        $region90: #{decoder_layer_forward.1} parent=71 // pred_check_branch
          %510 = sbr.rel (%p508) target = $region92
        $region91: #{decoder_layer_forward.1} parent=71 // pred_region
          %511 = dma.done [#allocation9], 1024
        $region92: #{decoder_layer_forward.1} parent=71 // pred_fallthru
          _
        %p512 = scmp.lt.s32.totalorder %s34, 1
        %s513 = scalar_select %p512, %s34, 1
        %s514 = smul.addr %s513, 2
        %s515 = smul.addr %s514, 8
        %s516 = scalar_lea.vmem %s0, %s515
        %p517 = pneg %p55
        %p518 = pneg %p52
        %s519 = sand.u32 %s68, 1
        %s520 = scalar_lea.sflag [#allocation3], %s519
        %s521 = sand.u32 %s68, 1
        %s522 = smul.addr %s521, 8
        %s523 = scalar_lea.vmem [#allocation2], %s522
        %p524 = pneg %p81
        %p525 = pneg %p78
        %p526 = pneg %p102
        %p527 = pneg %p99
        %p528 = pneg %p123
        %p529 = pneg %p120
        %p530 = pneg %p144
        %p531 = pneg %p141
        %p532 = pneg %p165
        %p533 = pneg %p162
        %p534 = pneg %p186
        %p535 = pneg %p183
        %p536 = pneg %p207
        %p537 = pneg %p204
        %p538 = pneg %p228
        %p539 = pneg %p225
        %p540 = pneg %p249
        %p541 = pneg %p246
        %p542 = pneg %p270
        %p543 = pneg %p267
        %p544 = pneg %p291
        %p545 = pneg %p288
        %p546 = pneg %p312
        %p547 = pneg %p309
        %p548 = pneg %p338
        %p549 = pneg %p335
        %s550 = sand.u32 %s325, 1
        %s551 = scalar_lea.sflag [#allocation4], %s550
        %s552 = sand.u32 %s325, 1
        %s553 = smul.addr %s552, 16
        %s554 = scalar_lea.vmem [#allocation11], %s553
        %p555 = pneg %p364
        %p556 = pneg %p361
        %p557 = scmp.lt.s32.totalorder %s34, 1
        %s558 = scalar_select %p557, %s34, 1
        %s559 = smul.addr %s558, 2
        %s560 = smul.addr %s559, 8
        %s561 = scalar_lea.vmem %s14, %s560
        %p562 = scmp.lt.s32.totalorder %s34, 1
        %s563 = scalar_select %p562, %s34, 1
        %s564 = smul.addr %s563, 2
        %s565 = smul.addr %s564, 8
        %s566 = scalar_lea.vmem %s0, %s565
        %p567 = scmp.lt.s32.totalorder %s34, 1
        %s568 = scalar_select %p567, %s34, 1
        %s569 = smul.addr %s568, 2
        %s570 = smul.addr %s569, 8
        %s571 = scalar_lea.vmem %s14, %s570
        %v573 = vld [vmem:[%s566] sm:$0xff]
        %v574 = vld [vmem:[%s566 + $0x8] sm:$0xf]
        %v575 = vld [vmem:[%s491] sm:$0xff]
        %v576 = vld [vmem:[#allocation5] sm:$0x3]
        %v577 = vpack.c.bf16 %v574, %v573
        %vm578 = vcmask 31744
        %v580 = vsel %vm578, %v577, 0
        %vm582 = vcmask 1041408
        %v584 = vsel %vm582, %v576, 0
        %586 = vmatprep.subr.bf16.mxu0 0
        %587 = vmatpush1.bf16.msra.mxu0 0
        %588 = vmatprep.subr.bf16.mxu0 0
        %589 = vmatpush1.bf16.msra.mxu0 0
        %590 = vmatprep.subr.bf16.mxu0 0
        %591 = vmatpush1.bf16.msra.mxu0 0
        %592 = vmatprep.subr.bf16.mxu0 0
        %593 = vmatpush1.bf16.msra.mxu0 0
        %594 = vmatprep.subr.bf16.mxu0 0
        %595 = vmatpush1.bf16.msra.mxu0 0
        %596 = vmatprep.subr.bf16.mxu0 0
        %597 = vmatpush1.bf16.msra.mxu0 0
        %598 = vmatprep.subr.bf16.mxu0 0
        %599 = vmatpush1.bf16.msra.mxu0 0
        %600 = vmatprep.subr.bf16.mxu0 0
        %601 = vmatpush1.bf16.msra.mxu0 %v584
        %602 = vmatprep.subr.bf16.mxu0 0
        %603 = vmatpush2.bf16.msra.mxu0 0
        %604 = vmatprep.subr.bf16.mxu0 0
        %605 = vmatpush2.bf16.msra.mxu0 0
        %606 = vmatprep.subr.bf16.mxu0 0
        %607 = vmatpush2.bf16.msra.mxu0 0
        %608 = vmatprep.subr.bf16.mxu0 0
        %609 = vmatpush2.bf16.msra.mxu0 0
        %610 = vmatprep.subr.bf16.mxu0 0
        %611 = vmatpush2.bf16.msra.mxu0 0
        %612 = vmatprep.subr.bf16.mxu0 0
        %613 = vmatpush2.bf16.msra.mxu0 0
        %614 = vmatprep.subr.bf16.mxu0 0
        %615 = vmatpush2.bf16.msra.mxu0 0
        %616 = vmatprep.subr.bf16.mxu0 0
        %617 = vmatpush2.bf16.msra.mxu0 0
        %618 = vmatprep.mubr.bf16.mxu0 0
        %619 = vmatmul.mubr.bf16.gmra.mxu0 %v580
        %v620 = vpop.f32.mrf.mxu0
        %v621 = vadd.f32 0.0, %v620
        %v622 = vpop.f32.mrf.mxu0
        %v623 = vpop.f32.mrf.mxu0
        %v624 = vadd.f32 0.0, %v623
        %v625 = vpop.f32.mrf.mxu0
        %626 = vdwg.mxu0
        %v627 = vld [vmem:[%s2] sm:$0xff]
        %v628 = vld [vmem:[%s2 + $0x8] sm:$0xff]
        %vm629 = vcmask 97280
        %v631 = vsel %vm629, %v627, 0
        %v634 = vsel %vm629, %v628, 0
        %vm636 = vcmask 1043456
        %v638 = vsel %vm636, %v624, 0
        %640 = vmatprep.subr.mxu0 0.0
        %641 = vmatpush1.msra.mxu0 0.0
        %642 = vmatprep.subr.mxu0 0.0
        %643 = vmatpush1.msra.mxu0 0.0
        %644 = vmatprep.subr.mxu0 0.0
        %645 = vmatpush1.msra.mxu0 0.0
        %646 = vmatprep.subr.mxu0 0.0
        %647 = vmatpush1.msra.mxu0 0.0
        %648 = vmatprep.subr.mxu0 0.0
        %649 = vmatpush1.msra.mxu0 0.0
        %650 = vmatprep.subr.mxu0 0.0
        %651 = vmatpush1.msra.mxu0 0.0
        %652 = vmatprep.subr.mxu0 0.0
        %653 = vmatpush1.msra.mxu0 0.0
        %654 = vmatprep.subr.mxu0 0.0
        %655 = vmatpush1.msra.mxu0 0.0
        %656 = vmatprep.subr.mxu0 0.0
        %657 = vmatpush1.msra.mxu0 0.0
        %658 = vmatprep.subr.mxu0 0.0
        %659 = vmatpush1.msra.mxu0 0.0
        %660 = vmatprep.subr.mxu0 0.0
        %661 = vmatpush1.msra.mxu0 0.0
        %662 = vmatprep.subr.mxu0 0.0
        %663 = vmatpush1.msra.mxu0 0.0
        %664 = vmatprep.subr.mxu0 0.0
        %665 = vmatpush1.msra.mxu0 0.0
        %666 = vmatprep.subr.mxu0 0.0
        %667 = vmatpush1.msra.mxu0 0.0
        %668 = vmatprep.subr.mxu0 0.0
        %669 = vmatpush1.msra.mxu0 %v638
        %670 = vmatprep.subr.mxu0 0.0
        %671 = vmatpush1.msra.mxu0 %v621
        %672 = vmatprep.subr.mxu0 0.0
        %673 = vmatpush2.msra.mxu0 0.0
        %674 = vmatprep.subr.mxu0 0.0
        %675 = vmatpush2.msra.mxu0 0.0
        %676 = vmatprep.subr.mxu0 0.0
        %677 = vmatpush2.msra.mxu0 0.0
        %678 = vmatprep.subr.mxu0 0.0
        %679 = vmatpush2.msra.mxu0 0.0
        %680 = vmatprep.subr.mxu0 0.0
        %681 = vmatpush2.msra.mxu0 0.0
        %682 = vmatprep.subr.mxu0 0.0
        %683 = vmatpush2.msra.mxu0 0.0
        %684 = vmatprep.subr.mxu0 0.0
        %685 = vmatpush2.msra.mxu0 0.0
        %686 = vmatprep.subr.mxu0 0.0
        %687 = vmatpush2.msra.mxu0 0.0
        %688 = vmatprep.subr.mxu0 0.0
        %689 = vmatpush2.msra.mxu0 0.0
        %690 = vmatprep.subr.mxu0 0.0
        %691 = vmatpush2.msra.mxu0 0.0
        %692 = vmatprep.subr.mxu0 0.0
        %693 = vmatpush2.msra.mxu0 0.0
        %694 = vmatprep.subr.mxu0 0.0
        %695 = vmatpush2.msra.mxu0 0.0
        %696 = vmatprep.subr.mxu0 0.0
        %697 = vmatpush2.msra.mxu0 0.0
        %698 = vmatprep.subr.mxu0 0.0
        %699 = vmatpush2.msra.mxu0 0.0
        %700 = vmatprep.subr.mxu0 0.0
        %701 = vmatpush2.msra.mxu0 0.0
        %702 = vmatprep.subr.mxu0 0.0
        %703 = vmatpush2.msra.mxu0 0.0
        %704 = vmatprep.mubr.f32.mxu0 0.0
        %705 = vmatmul.mubr.f32.gmra.mxu0 %v631
        %v706 = vpop.f32.mrf.mxu0
        %v707 = vadd.f32 0.0, %v706
        %v708 = vpop.f32.mrf.mxu0
        %709 = vmatprep.mubr.f32.mxu0 0.0
        %710 = vmatmul.mubr.f32.gmra.mxu0 %v634
        %v711 = vpop.f32.mrf.mxu0
        %v712 = vadd.f32 0.0, %v711
        %v713 = vpop.f32.mrf.mxu0
        %714 = vdwg.mxu0
        %s715 = scalar_lea.vmem %s2, 16
        %v716 = vld [vmem:[%s715] sm:$0xff]
        %v717 = vld [vmem:[%s715 + $0x8] sm:$0xff]
        %v719 = vsel %vm629, %v716, 0
        %v722 = vsel %vm629, %v717, 0
        %v725 = vsel %vm636, %v574, 0
        %727 = vmatprep.subr.mxu0 0.0
        %728 = vmatpush1.msra.mxu0 0.0
        %729 = vmatprep.subr.mxu0 0.0
        %730 = vmatpush1.msra.mxu0 0.0
        %731 = vmatprep.subr.mxu0 0.0
        %732 = vmatpush1.msra.mxu0 0.0
        %733 = vmatprep.subr.mxu0 0.0
        %734 = vmatpush1.msra.mxu0 0.0
        %735 = vmatprep.subr.mxu0 0.0
        %736 = vmatpush1.msra.mxu0 0.0
        %737 = vmatprep.subr.mxu0 0.0
        %738 = vmatpush1.msra.mxu0 0.0
        %739 = vmatprep.subr.mxu0 0.0
        %740 = vmatpush1.msra.mxu0 0.0
        %741 = vmatprep.subr.mxu0 0.0
        %742 = vmatpush1.msra.mxu0 0.0
        %743 = vmatprep.subr.mxu0 0.0
        %744 = vmatpush1.msra.mxu0 0.0
        %745 = vmatprep.subr.mxu0 0.0
        %746 = vmatpush1.msra.mxu0 0.0
        %747 = vmatprep.subr.mxu0 0.0
        %748 = vmatpush1.msra.mxu0 0.0
        %749 = vmatprep.subr.mxu0 0.0
        %750 = vmatpush1.msra.mxu0 0.0
        %751 = vmatprep.subr.mxu0 0.0
        %752 = vmatpush1.msra.mxu0 0.0
        %753 = vmatprep.subr.mxu0 0.0
        %754 = vmatpush1.msra.mxu0 0.0
        %755 = vmatprep.subr.mxu0 0.0
        %756 = vmatpush1.msra.mxu0 %v725
        %757 = vmatprep.subr.mxu0 0.0
        %758 = vmatpush1.msra.mxu0 %v573
        %759 = vmatprep.subr.mxu0 0.0
        %760 = vmatpush2.msra.mxu0 0.0
        %761 = vmatprep.subr.mxu0 0.0
        %762 = vmatpush2.msra.mxu0 0.0
        %763 = vmatprep.subr.mxu0 0.0
        %764 = vmatpush2.msra.mxu0 0.0
        %765 = vmatprep.subr.mxu0 0.0
        %766 = vmatpush2.msra.mxu0 0.0
        %767 = vmatprep.subr.mxu0 0.0
        %768 = vmatpush2.msra.mxu0 0.0
        %769 = vmatprep.subr.mxu0 0.0
        %770 = vmatpush2.msra.mxu0 0.0
        %771 = vmatprep.subr.mxu0 0.0
        %772 = vmatpush2.msra.mxu0 0.0
        %773 = vmatprep.subr.mxu0 0.0
        %774 = vmatpush2.msra.mxu0 0.0
        %775 = vmatprep.subr.mxu0 0.0
        %776 = vmatpush2.msra.mxu0 0.0
        %777 = vmatprep.subr.mxu0 0.0
        %778 = vmatpush2.msra.mxu0 0.0
        %779 = vmatprep.subr.mxu0 0.0
        %780 = vmatpush2.msra.mxu0 0.0
        %781 = vmatprep.subr.mxu0 0.0
        %782 = vmatpush2.msra.mxu0 0.0
        %783 = vmatprep.subr.mxu0 0.0
        %784 = vmatpush2.msra.mxu0 0.0
        %785 = vmatprep.subr.mxu0 0.0
        %786 = vmatpush2.msra.mxu0 0.0
        %787 = vmatprep.subr.mxu0 0.0
        %788 = vmatpush2.msra.mxu0 0.0
        %789 = vmatprep.subr.mxu0 0.0
        %790 = vmatpush2.msra.mxu0 0.0
        %791 = vmatprep.mubr.f32.mxu0 0.0
        %792 = vmatmul.mubr.f32.gmra.mxu0 %v719
        %v793 = vpop.f32.mrf.mxu0
        %v794 = vadd.f32 0.0, %v793
        %v795 = vpop.f32.mrf.mxu0
        %796 = vmatprep.mubr.f32.mxu0 0.0
        %797 = vmatmul.mubr.f32.gmra.mxu0 %v722
        %v798 = vpop.f32.mrf.mxu0
        %v799 = vadd.f32 0.0, %v798
        %v800 = vpop.f32.mrf.mxu0
        %801 = vdwg.mxu0
        %v802 = vld [vmem:[%s5] sm:$0xff]
        %v803 = vld [vmem:[%s5 + $0x8] sm:$0xf]
        %v804 = vld [vmem:[%s5 + $0xc] sm:$0xff]
        %v805 = vld [vmem:[%s5 + $0x14] sm:$0xf]
        %v806 = vld [vmem:[%s5 + $0x18] sm:$0xff]
        %v807 = vld [vmem:[%s5 + $0x20] sm:$0xf]
        %v808 = vld [vmem:[%s5 + $0x24] sm:$0xff]
        %v809 = vld [vmem:[%s5 + $0x2c] sm:$0xf]
        %v810 = vld [vmem:[%s5 + $0x30] sm:$0xff]
        %v811 = vld [vmem:[%s5 + $0x38] sm:$0xf]
        %v812 = vld [vmem:[%s5 + $0x3c] sm:$0xff]
        %v813 = vld [vmem:[%s5 + $0x44] sm:$0xf]
        %v814 = vld [vmem:[%s5 + $0x48] sm:$0xff]
        %v815 = vld [vmem:[%s5 + $0x50] sm:$0xf]
        %v816 = vld [vmem:[%s5 + $0x54] sm:$0xff]
        %v817 = vld [vmem:[%s5 + $0x5c] sm:$0xf]
        %v818 = vld [vmem:[%s5 + $0x60] sm:$0xff]
        %v819 = vld [vmem:[%s5 + $0x68] sm:$0xf]
        %v820 = vld [vmem:[%s5 + $0x6c] sm:$0xff]
        %v821 = vld [vmem:[%s5 + $0x74] sm:$0xf]
        %v822 = vld [vmem:[%s5 + $0x78] sm:$0xff]
        %v823 = vld [vmem:[%s5 + $0x80] sm:$0xf]
        %v824 = vld [vmem:[%s5 + $0x84] sm:$0xff]
        %v825 = vld [vmem:[%s5 + $0x8c] sm:$0xf]
        %v826 = vld [vmem:[%s5 + $0x90] sm:$0xff]
        %v827 = vld [vmem:[%s5 + $0x98] sm:$0xf]
        %v828 = vld [vmem:[%s5 + $0x9c] sm:$0xff]
        %v829 = vld [vmem:[%s5 + $0xa4] sm:$0xf]
        %v830 = vld [vmem:[%s5 + $0xa8] sm:$0xff]
        %v831 = vld [vmem:[%s5 + $0xb0] sm:$0xf]
        %v832 = vld [vmem:[%s5 + $0xb4] sm:$0xff]
        %v833 = vld [vmem:[%s5 + $0xbc] sm:$0xf]
        %v834 = vpack.c.bf16 %v712, %v707
        %v867 = vunpack.c.l.b16 %v802
        %v868 = vunpack.c.h.b16 %v802
        %v869 = vunpack.c.l.b16 %v803
        %v870 = vunpack.c.l.b16 %v804
        %v871 = vunpack.c.h.b16 %v804
        %v872 = vunpack.c.l.b16 %v805
        %v873 = vunpack.c.l.b16 %v806
        %v874 = vunpack.c.h.b16 %v806
        %v875 = vunpack.c.l.b16 %v807
        %v876 = vunpack.c.l.b16 %v808
        %v877 = vunpack.c.h.b16 %v808
        %v878 = vunpack.c.l.b16 %v809
        %v879 = vunpack.c.l.b16 %v810
        %v880 = vunpack.c.h.b16 %v810
        %v881 = vunpack.c.l.b16 %v811
        %v882 = vunpack.c.l.b16 %v812
        %v883 = vunpack.c.h.b16 %v812
        %v884 = vunpack.c.l.b16 %v813
        %v885 = vunpack.c.l.b16 %v814
        %v886 = vunpack.c.h.b16 %v814
        %v887 = vunpack.c.l.b16 %v815
        %v888 = vunpack.c.l.b16 %v816
        %v889 = vunpack.c.h.b16 %v816
        %v890 = vunpack.c.l.b16 %v817
        %v891 = vunpack.c.l.b16 %v818
        %v892 = vunpack.c.h.b16 %v818
        %v893 = vunpack.c.l.b16 %v819
        %v894 = vunpack.c.l.b16 %v820
        %v895 = vunpack.c.h.b16 %v820
        %v896 = vunpack.c.l.b16 %v821
        %v897 = vunpack.c.l.b16 %v822
        %v898 = vunpack.c.h.b16 %v822
        %v899 = vunpack.c.l.b16 %v823
        %v900 = vunpack.c.l.b16 %v824
        %v901 = vunpack.c.h.b16 %v824
        %v902 = vunpack.c.l.b16 %v825
        %v903 = vunpack.c.l.b16 %v826
        %v904 = vunpack.c.h.b16 %v826
        %v905 = vunpack.c.l.b16 %v827
        %v906 = vunpack.c.l.b16 %v828
        %v907 = vunpack.c.h.b16 %v828
        %v908 = vunpack.c.l.b16 %v829
        %v909 = vunpack.c.l.b16 %v830
        %v910 = vunpack.c.h.b16 %v830
        %v911 = vunpack.c.l.b16 %v831
        %v912 = vunpack.c.l.b16 %v832
        %v913 = vunpack.c.h.b16 %v832
        %v914 = vunpack.c.l.b16 %v833
        %v915 = vpack.c.b16 %v870, %v867
        %v916 = vpack.c.b16 %v871, %v868
        %v917 = vpack.c.b16 %v872, %v869
        %v918 = vpack.c.b16 %v876, %v873
        %v919 = vpack.c.b16 %v877, %v874
        %v920 = vpack.c.b16 %v878, %v875
        %v921 = vpack.c.b16 %v882, %v879
        %v922 = vpack.c.b16 %v883, %v880
        %v923 = vpack.c.b16 %v884, %v881
        %v924 = vpack.c.b16 %v888, %v885
        %v925 = vpack.c.b16 %v889, %v886
        %v926 = vpack.c.b16 %v890, %v887
        %v927 = vpack.c.b16 %v894, %v891
        %v928 = vpack.c.b16 %v895, %v892
        %v929 = vpack.c.b16 %v896, %v893
        %v930 = vpack.c.b16 %v900, %v897
        %v931 = vpack.c.b16 %v901, %v898
        %v932 = vpack.c.b16 %v902, %v899
        %v933 = vpack.c.b16 %v906, %v903
        %v934 = vpack.c.b16 %v907, %v904
        %v935 = vpack.c.b16 %v908, %v905
        %v936 = vpack.c.b16 %v912, %v909
        %v937 = vpack.c.b16 %v913, %v910
        %v938 = vpack.c.b16 %v914, %v911
        %963 = vmatprep.subr.bf16.mxu0 %v937
        %964 = vmatpush1.bf16.msra.mxu0 %v936
        %965 = vmatprep.subr.bf16.mxu0 %v934
        %966 = vmatpush1.bf16.msra.mxu0 %v933
        %967 = vmatprep.subr.bf16.mxu0 %v931
        %968 = vmatpush1.bf16.msra.mxu0 %v930
        %969 = vmatprep.subr.bf16.mxu0 %v928
        %970 = vmatpush1.bf16.msra.mxu0 %v927
        %971 = vmatprep.subr.bf16.mxu0 %v925
        %972 = vmatpush1.bf16.msra.mxu0 %v924
        %973 = vmatprep.subr.bf16.mxu0 %v922
        %974 = vmatpush1.bf16.msra.mxu0 %v921
        %975 = vmatprep.subr.bf16.mxu0 %v919
        %976 = vmatpush1.bf16.msra.mxu0 %v918
        %977 = vmatprep.subr.bf16.mxu0 %v916
        %978 = vmatpush1.bf16.msra.mxu0 %v915
        %979 = vmatprep.subr.bf16.mxu0 0
        %980 = vmatpush2.bf16.msra.mxu0 0
        %981 = vmatprep.subr.bf16.mxu0 0
        %982 = vmatpush2.bf16.msra.mxu0 0
        %983 = vmatprep.subr.bf16.mxu0 0
        %984 = vmatpush2.bf16.msra.mxu0 0
        %985 = vmatprep.subr.bf16.mxu0 0
        %986 = vmatpush2.bf16.msra.mxu0 0
        %987 = vmatprep.subr.bf16.mxu0 0
        %988 = vmatpush2.bf16.msra.mxu0 0
        %989 = vmatprep.subr.bf16.mxu0 0
        %990 = vmatpush2.bf16.msra.mxu0 0
        %991 = vmatprep.subr.bf16.mxu0 0
        %992 = vmatpush2.bf16.msra.mxu0 0
        %993 = vmatprep.subr.bf16.mxu0 0
        %994 = vmatpush2.bf16.msra.mxu0 0
        %995 = vmatprep.mubr.bf16.mxu0 0
        %996 = vmatmul.mubr.bf16.gmra.mxu0 %v834
        %v997 = vpop.f32.mrf.mxu0
        %v998 = vadd.f32 0.0, %v997
        %v999 = vpop.f32.mrf.mxu0
        %v1000 = vadd.f32 0.0, %v999
        %v1001 = vpop.f32.mrf.mxu0
        %v1002 = vadd.f32 0.0, %v1001
        %v1003 = vpop.f32.mrf.mxu0
        %v1004 = vadd.f32 0.0, %v1003
        %1005 = vdwg.mxu0
        %1006 = vmatprep.subr.bf16.mxu0 0
        %1007 = vmatpush1.bf16.msra.mxu0 %v938
        %1008 = vmatprep.subr.bf16.mxu0 0
        %1009 = vmatpush1.bf16.msra.mxu0 %v935
        %1010 = vmatprep.subr.bf16.mxu0 0
        %1011 = vmatpush1.bf16.msra.mxu0 %v932
        %1012 = vmatprep.subr.bf16.mxu0 0
        %1013 = vmatpush1.bf16.msra.mxu0 %v929
        %1014 = vmatprep.subr.bf16.mxu0 0
        %1015 = vmatpush1.bf16.msra.mxu0 %v926
        %1016 = vmatprep.subr.bf16.mxu0 0
        %1017 = vmatpush1.bf16.msra.mxu0 %v923
        %1018 = vmatprep.subr.bf16.mxu0 0
        %1019 = vmatpush1.bf16.msra.mxu0 %v920
        %1020 = vmatprep.subr.bf16.mxu0 0
        %1021 = vmatpush1.bf16.msra.mxu0 %v917
        %1022 = vmatprep.subr.bf16.mxu0 0
        %1023 = vmatpush2.bf16.msra.mxu0 0
        %1024 = vmatprep.subr.bf16.mxu0 0
        %1025 = vmatpush2.bf16.msra.mxu0 0
        %1026 = vmatprep.subr.bf16.mxu0 0
        %1027 = vmatpush2.bf16.msra.mxu0 0
        %1028 = vmatprep.subr.bf16.mxu0 0
        %1029 = vmatpush2.bf16.msra.mxu0 0
        %1030 = vmatprep.subr.bf16.mxu0 0
        %1031 = vmatpush2.bf16.msra.mxu0 0
        %1032 = vmatprep.subr.bf16.mxu0 0
        %1033 = vmatpush2.bf16.msra.mxu0 0
        %1034 = vmatprep.subr.bf16.mxu0 0
        %1035 = vmatpush2.bf16.msra.mxu0 0
        %1036 = vmatprep.subr.bf16.mxu0 0
        %1037 = vmatpush2.bf16.msra.mxu0 0
        %1038 = vmatprep.mubr.bf16.mxu0 0
        %1039 = vmatmul.mubr.bf16.gmra.mxu0 %v834
        %v1040 = vpop.f32.mrf.mxu0
        %v1041 = vadd.f32 0.0, %v1040
        %v1042 = vpop.f32.mrf.mxu0
        %v1043 = vpop.f32.mrf.mxu0
        %v1044 = vadd.f32 0.0, %v1043
        %v1045 = vpop.f32.mrf.mxu0
        %1046 = vdwg.mxu0
        %v1047 = vmul.f32 %v998, 0.088388346
        %v1048 = vmul.f32 %v1002, 0.088388346
        %v1049 = vpack.c.bf16 %v1048, %v1047
        %v1050 = vpack.c.bf16 %v1004, %v1000
        %1051 = vmatprep.subr.bf16.mxu0 0
        %1052 = vmatpush1.bf16.xpose.msra.mxu0 0
        %1053 = vmatprep.subr.bf16.mxu0 0
        %1054 = vmatpush1.bf16.xpose.msra.mxu0 0
        %1055 = vmatprep.subr.bf16.mxu0 0
        %1056 = vmatpush1.bf16.xpose.msra.mxu0 0
        %1057 = vmatprep.subr.bf16.mxu0 0
        %1058 = vmatpush1.bf16.xpose.msra.mxu0 0
        %1059 = vmatprep.subr.bf16.mxu0 0
        %1060 = vmatpush1.bf16.xpose.msra.mxu0 0
        %1061 = vmatprep.subr.bf16.mxu0 0
        %1062 = vmatpush1.bf16.xpose.msra.mxu0 0
        %1063 = vmatprep.subr.bf16.mxu0 0
        %1064 = vmatpush1.bf16.xpose.msra.mxu0 0
        %1065 = vmatprep.subr.bf16.mxu0 0
        %1066 = vmatpush1.bf16.xpose.msra.mxu0 %v1050
        %1067 = vmatprep.subr.bf16.mxu0 0
        %1068 = vmatpush2.bf16.xpose.msra.mxu0 0
        %1069 = vmatprep.subr.bf16.mxu0 0
        %1070 = vmatpush2.bf16.xpose.msra.mxu0 0
        %1071 = vmatprep.subr.bf16.mxu0 0
        %1072 = vmatpush2.bf16.xpose.msra.mxu0 0
        %1073 = vmatprep.subr.bf16.mxu0 0
        %1074 = vmatpush2.bf16.xpose.msra.mxu0 0
        %1075 = vmatprep.subr.bf16.mxu0 0
        %1076 = vmatpush2.bf16.xpose.msra.mxu0 0
        %1077 = vmatprep.subr.bf16.mxu0 0
        %1078 = vmatpush2.bf16.xpose.msra.mxu0 0
        %1079 = vmatprep.subr.bf16.mxu0 0
        %1080 = vmatpush2.bf16.xpose.msra.mxu0 0
        %1081 = vmatprep.subr.bf16.mxu0 0
        %1082 = vmatpush2.bf16.xpose.msra.mxu0 0
        %1083 = vmatprep.mubr.bf16.mxu0 0
        %1084 = vmatmul.mubr.bf16.gmra.mxu0 %v1049
        %v1085 = vpop.f32.mrf.mxu0
        %v1086 = vadd.f32 0.0, %v1085
        %v1087 = vpop.f32.mrf.mxu0
        %v1088 = vpop.f32.mrf.mxu0
        %v1089 = vadd.f32 0.0, %v1088
        %v1090 = vpop.f32.mrf.mxu0
        %1091 = vdwg.mxu0
        %vm1092 = vcmask 130048
        %v1093 = vsel %vm1092, %v1086, -inf
        %1094 = vmax.xlane.f32.xlu0 %v1093
        %v1095 = vpop.xlane.xlu0 %1094
        %v1096 = vsel %vm1092, %v1089, -inf
        %1097 = vmax.xlane.f32.xlu0 %v1096
        %v1098 = vpop.xlane.xlu0 %1097
        %v1099 = vsub.f32 %v1086, %v1095
        %v1100 = vsub.f32 %v1089, %v1098
        %v1101 = vmul.f32 %v1099, 1.442695
        %v1102 = vpow.pop %v1101
        %v1103 = vmul.f32 %v1100, 1.442695
        %v1104 = vpow.pop %v1103
        %v1105 = vsel %vm1092, %v1102, 0.0
        %1106 = vadd.xlane.f32.xlu0 %v1105
        %v1107 = vpop.xlane.xlu0 %1106
        %v1108 = vsel %vm1092, %v1104, 0.0
        %1109 = vadd.xlane.f32.xlu0 %v1108
        %v1110 = vpop.xlane.xlu0 %1109
        %v1111 = vrcp.pop %v1107
        %v1112 = vrcp.pop %v1110
        %v1113 = vmul.f32 %v1102, %v1111
        %v1114 = vmul.f32 %v1104, %v1112
        %v1115 = vpack.c.bf16 %v1114, %v1113
        %v1116 = vpack.c.bf16 %v1044, %v1041
        %v1118 = vsel %vm1092, %v1115, 0
        %1120 = vmatprep.subr.bf16.mxu0 0
        %1121 = vmatpush1.bf16.msra.mxu0 0
        %1122 = vmatprep.subr.bf16.mxu0 0
        %1123 = vmatpush1.bf16.msra.mxu0 0
        %1124 = vmatprep.subr.bf16.mxu0 0
        %1125 = vmatpush1.bf16.msra.mxu0 0
        %1126 = vmatprep.subr.bf16.mxu0 0
        %1127 = vmatpush1.bf16.msra.mxu0 0
        %1128 = vmatprep.subr.bf16.mxu0 0
        %1129 = vmatpush1.bf16.msra.mxu0 0
        %1130 = vmatprep.subr.bf16.mxu0 0
        %1131 = vmatpush1.bf16.msra.mxu0 0
        %1132 = vmatprep.subr.bf16.mxu0 0
        %1133 = vmatpush1.bf16.msra.mxu0 0
        %1134 = vmatprep.subr.bf16.mxu0 0
        %1135 = vmatpush1.bf16.msra.mxu0 %v1116
        %1136 = vmatprep.subr.bf16.mxu0 0
        %1137 = vmatpush2.bf16.msra.mxu0 0
        %1138 = vmatprep.subr.bf16.mxu0 0
        %1139 = vmatpush2.bf16.msra.mxu0 0
        %1140 = vmatprep.subr.bf16.mxu0 0
        %1141 = vmatpush2.bf16.msra.mxu0 0
        %1142 = vmatprep.subr.bf16.mxu0 0
        %1143 = vmatpush2.bf16.msra.mxu0 0
        %1144 = vmatprep.subr.bf16.mxu0 0
        %1145 = vmatpush2.bf16.msra.mxu0 0
        %1146 = vmatprep.subr.bf16.mxu0 0
        %1147 = vmatpush2.bf16.msra.mxu0 0
        %1148 = vmatprep.subr.bf16.mxu0 0
        %1149 = vmatpush2.bf16.msra.mxu0 0
        %1150 = vmatprep.subr.bf16.mxu0 0
        %1151 = vmatpush2.bf16.msra.mxu0 0
        %1152 = vmatprep.mubr.bf16.mxu0 0
        %1153 = vmatmul.mubr.bf16.gmra.mxu0 %v1118
        %v1154 = vpop.f32.mrf.mxu0
        %v1155 = vadd.f32 0.0, %v1154
        %v1156 = vpop.f32.mrf.mxu0
        %v1157 = vpop.f32.mrf.mxu0
        %v1158 = vadd.f32 0.0, %v1157
        %v1159 = vpop.f32.mrf.mxu0
        %1160 = vdwg.mxu0
        %v1161 = vld [vmem:[#allocation7] sm:$0xf]
        %v1162 = vld [vmem:[#allocation7 + $0x4] sm:$0xf]
        %v1163 = vld [vmem:[#allocation7 + $0x8] sm:$0xf]
        %v1164 = vld [vmem:[#allocation7 + $0xc] sm:$0xf]
        %v1165 = vld [vmem:[#allocation7 + $0x10] sm:$0xf]
        %v1166 = vld [vmem:[#allocation7 + $0x14] sm:$0xf]
        %v1167 = vld [vmem:[#allocation7 + $0x18] sm:$0xf]
        %v1168 = vld [vmem:[#allocation7 + $0x1c] sm:$0xf]
        %v1169 = vld [vmem:[#allocation7 + $0x20] sm:$0xf]
        %v1170 = vld [vmem:[#allocation7 + $0x24] sm:$0xf]
        %v1171 = vld [vmem:[#allocation7 + $0x28] sm:$0xf]
        %v1172 = vld [vmem:[#allocation7 + $0x2c] sm:$0xf]
        %v1173 = vld [vmem:[#allocation7 + $0x30] sm:$0xf]
        %v1174 = vld [vmem:[#allocation7 + $0x34] sm:$0xf]
        %v1175 = vld [vmem:[#allocation7 + $0x38] sm:$0xf]
        %v1176 = vld [vmem:[#allocation7 + $0x3c] sm:$0xf]
        %v1177 = vpack.c.bf16 %v1158, %v1155
        %v1194 = vunpack.c.l.b16 %v1161
        %v1195 = vunpack.c.l.b16 %v1162
        %v1196 = vunpack.c.l.b16 %v1163
        %v1197 = vunpack.c.l.b16 %v1164
        %v1198 = vunpack.c.l.b16 %v1165
        %v1199 = vunpack.c.l.b16 %v1166
        %v1200 = vunpack.c.l.b16 %v1167
        %v1201 = vunpack.c.l.b16 %v1168
        %v1202 = vunpack.c.l.b16 %v1169
        %v1203 = vunpack.c.l.b16 %v1170
        %v1204 = vunpack.c.l.b16 %v1171
        %v1205 = vunpack.c.l.b16 %v1172
        %v1206 = vunpack.c.l.b16 %v1173
        %v1207 = vunpack.c.l.b16 %v1174
        %v1208 = vunpack.c.l.b16 %v1175
        %v1209 = vunpack.c.l.b16 %v1176
        %v1210 = vpack.c.b16 %v1195, %v1194
        %v1211 = vpack.c.b16 %v1197, %v1196
        %v1212 = vpack.c.b16 %v1199, %v1198
        %v1213 = vpack.c.b16 %v1201, %v1200
        %v1214 = vpack.c.b16 %v1203, %v1202
        %v1215 = vpack.c.b16 %v1205, %v1204
        %v1216 = vpack.c.b16 %v1207, %v1206
        %v1217 = vpack.c.b16 %v1209, %v1208
        %1226 = vmatprep.subr.bf16.mxu0 0
        %1227 = vmatpush1.bf16.msra.mxu0 %v1217
        %1228 = vmatprep.subr.bf16.mxu0 0
        %1229 = vmatpush1.bf16.msra.mxu0 %v1216
        %1230 = vmatprep.subr.bf16.mxu0 0
        %1231 = vmatpush1.bf16.msra.mxu0 %v1215
        %1232 = vmatprep.subr.bf16.mxu0 0
        %1233 = vmatpush1.bf16.msra.mxu0 %v1214
        %1234 = vmatprep.subr.bf16.mxu0 0
        %1235 = vmatpush1.bf16.msra.mxu0 %v1213
        %1236 = vmatprep.subr.bf16.mxu0 0
        %1237 = vmatpush1.bf16.msra.mxu0 %v1212
        %1238 = vmatprep.subr.bf16.mxu0 0
        %1239 = vmatpush1.bf16.msra.mxu0 %v1211
        %1240 = vmatprep.subr.bf16.mxu0 0
        %1241 = vmatpush1.bf16.msra.mxu0 %v1210
        %1242 = vmatprep.subr.bf16.mxu0 0
        %1243 = vmatpush2.bf16.msra.mxu0 0
        %1244 = vmatprep.subr.bf16.mxu0 0
        %1245 = vmatpush2.bf16.msra.mxu0 0
        %1246 = vmatprep.subr.bf16.mxu0 0
        %1247 = vmatpush2.bf16.msra.mxu0 0
        %1248 = vmatprep.subr.bf16.mxu0 0
        %1249 = vmatpush2.bf16.msra.mxu0 0
        %1250 = vmatprep.subr.bf16.mxu0 0
        %1251 = vmatpush2.bf16.msra.mxu0 0
        %1252 = vmatprep.subr.bf16.mxu0 0
        %1253 = vmatpush2.bf16.msra.mxu0 0
        %1254 = vmatprep.subr.bf16.mxu0 0
        %1255 = vmatpush2.bf16.msra.mxu0 0
        %1256 = vmatprep.subr.bf16.mxu0 0
        %1257 = vmatpush2.bf16.msra.mxu0 0
        %1258 = vmatprep.mubr.bf16.mxu0 0
        %1259 = vmatmul.mubr.bf16.gmra.mxu0 %v1177
        %v1260 = vpop.f32.mrf.mxu0
        %v1261 = vadd.f32 0.0, %v1260
        %v1262 = vpop.f32.mrf.mxu0
        %v1263 = vpop.f32.mrf.mxu0
        %v1264 = vadd.f32 0.0, %v1263
        %v1265 = vpop.f32.mrf.mxu0
        %1266 = vdwg.mxu0
        %v1267 = vadd.f32 %v707, %v1261
        %v1268 = vadd.f32 %v712, %v1264
        %v1269 = vld [vmem:[%s3] sm:$0xff]
        %v1270 = vld [vmem:[%s3 + $0x8] sm:$0xff]
        %v1272 = vsel %vm1092, %v1269, 0
        %v1275 = vsel %vm1092, %v1270, 0
        %1277 = vmatprep.subr.mxu0 0.0
        %1278 = vmatpush1.msra.mxu0 0.0
        %1279 = vmatprep.subr.mxu0 0.0
        %1280 = vmatpush1.msra.mxu0 0.0
        %1281 = vmatprep.subr.mxu0 0.0
        %1282 = vmatpush1.msra.mxu0 0.0
        %1283 = vmatprep.subr.mxu0 0.0
        %1284 = vmatpush1.msra.mxu0 0.0
        %1285 = vmatprep.subr.mxu0 0.0
        %1286 = vmatpush1.msra.mxu0 0.0
        %1287 = vmatprep.subr.mxu0 0.0
        %1288 = vmatpush1.msra.mxu0 0.0
        %1289 = vmatprep.subr.mxu0 0.0
        %1290 = vmatpush1.msra.mxu0 0.0
        %1291 = vmatprep.subr.mxu0 0.0
        %1292 = vmatpush1.msra.mxu0 0.0
        %1293 = vmatprep.subr.mxu0 0.0
        %1294 = vmatpush1.msra.mxu0 0.0
        %1295 = vmatprep.subr.mxu0 0.0
        %1296 = vmatpush1.msra.mxu0 0.0
        %1297 = vmatprep.subr.mxu0 0.0
        %1298 = vmatpush1.msra.mxu0 0.0
        %1299 = vmatprep.subr.mxu0 0.0
        %1300 = vmatpush1.msra.mxu0 0.0
        %1301 = vmatprep.subr.mxu0 0.0
        %1302 = vmatpush1.msra.mxu0 0.0
        %1303 = vmatprep.subr.mxu0 0.0
        %1304 = vmatpush1.msra.mxu0 0.0
        %1305 = vmatprep.subr.mxu0 0.0
        %1306 = vmatpush1.msra.mxu0 %v1268
        %1307 = vmatprep.subr.mxu0 0.0
        %1308 = vmatpush1.msra.mxu0 %v1267
        %1309 = vmatprep.subr.mxu0 0.0
        %1310 = vmatpush2.msra.mxu0 0.0
        %1311 = vmatprep.subr.mxu0 0.0
        %1312 = vmatpush2.msra.mxu0 0.0
        %1313 = vmatprep.subr.mxu0 0.0
        %1314 = vmatpush2.msra.mxu0 0.0
        %1315 = vmatprep.subr.mxu0 0.0
        %1316 = vmatpush2.msra.mxu0 0.0
        %1317 = vmatprep.subr.mxu0 0.0
        %1318 = vmatpush2.msra.mxu0 0.0
        %1319 = vmatprep.subr.mxu0 0.0
        %1320 = vmatpush2.msra.mxu0 0.0
        %1321 = vmatprep.subr.mxu0 0.0
        %1322 = vmatpush2.msra.mxu0 0.0
        %1323 = vmatprep.subr.mxu0 0.0
        %1324 = vmatpush2.msra.mxu0 0.0
        %1325 = vmatprep.subr.mxu0 0.0
        %1326 = vmatpush2.msra.mxu0 0.0
        %1327 = vmatprep.subr.mxu0 0.0
        %1328 = vmatpush2.msra.mxu0 0.0
        %1329 = vmatprep.subr.mxu0 0.0
        %1330 = vmatpush2.msra.mxu0 0.0
        %1331 = vmatprep.subr.mxu0 0.0
        %1332 = vmatpush2.msra.mxu0 0.0
        %1333 = vmatprep.subr.mxu0 0.0
        %1334 = vmatpush2.msra.mxu0 0.0
        %1335 = vmatprep.subr.mxu0 0.0
        %1336 = vmatpush2.msra.mxu0 0.0
        %1337 = vmatprep.subr.mxu0 0.0
        %1338 = vmatpush2.msra.mxu0 0.0
        %1339 = vmatprep.subr.mxu0 0.0
        %1340 = vmatpush2.msra.mxu0 0.0
        %1341 = vmatprep.mubr.f32.mxu0 0.0
        %1342 = vmatmul.mubr.f32.gmra.mxu0 %v1272
        %v1343 = vpop.f32.mrf.mxu0
        %v1344 = vadd.f32 0.0, %v1343
        %v1345 = vpop.f32.mrf.mxu0
        %1346 = vmatprep.mubr.f32.mxu0 0.0
        %1347 = vmatmul.mubr.f32.gmra.mxu0 %v1275
        %v1348 = vpop.f32.mrf.mxu0
        %v1349 = vadd.f32 0.0, %v1348
        %v1350 = vpop.f32.mrf.mxu0
        %1351 = vdwg.mxu0
        %v1352 = vsub.f32 %v1267, %v1344
        %v1353 = vsub.f32 %v1268, %v1349
        %v1354 = vld [vmem:[#allocation8] sm:$0xf]
        %v1355 = vld [vmem:[#allocation8 + $0x4] sm:$0xf]
        %v1356 = vld [vmem:[#allocation8 + $0x8] sm:$0xf]
        %v1357 = vld [vmem:[#allocation8 + $0xc] sm:$0xf]
        %v1358 = vld [vmem:[#allocation8 + $0x10] sm:$0xf]
        %v1359 = vld [vmem:[#allocation8 + $0x14] sm:$0xf]
        %v1360 = vld [vmem:[#allocation8 + $0x18] sm:$0xf]
        %v1361 = vld [vmem:[#allocation8 + $0x1c] sm:$0xf]
        %v1362 = vld [vmem:[#allocation8 + $0x20] sm:$0xf]
        %v1363 = vld [vmem:[#allocation8 + $0x24] sm:$0xf]
        %v1364 = vld [vmem:[#allocation8 + $0x28] sm:$0xf]
        %v1365 = vld [vmem:[#allocation8 + $0x2c] sm:$0xf]
        %v1366 = vld [vmem:[#allocation8 + $0x30] sm:$0xf]
        %v1367 = vld [vmem:[#allocation8 + $0x34] sm:$0xf]
        %v1368 = vld [vmem:[#allocation8 + $0x38] sm:$0xf]
        %v1369 = vld [vmem:[#allocation8 + $0x3c] sm:$0xf]
        %v1370 = vpack.c.bf16 %v1353, %v1352
        %v1387 = vunpack.c.l.b16 %v1354
        %v1388 = vunpack.c.l.b16 %v1355
        %v1389 = vunpack.c.l.b16 %v1356
        %v1390 = vunpack.c.l.b16 %v1357
        %v1391 = vunpack.c.l.b16 %v1358
        %v1392 = vunpack.c.l.b16 %v1359
        %v1393 = vunpack.c.l.b16 %v1360
        %v1394 = vunpack.c.l.b16 %v1361
        %v1395 = vunpack.c.l.b16 %v1362
        %v1396 = vunpack.c.l.b16 %v1363
        %v1397 = vunpack.c.l.b16 %v1364
        %v1398 = vunpack.c.l.b16 %v1365
        %v1399 = vunpack.c.l.b16 %v1366
        %v1400 = vunpack.c.l.b16 %v1367
        %v1401 = vunpack.c.l.b16 %v1368
        %v1402 = vunpack.c.l.b16 %v1369
        %v1403 = vpack.c.b16 %v1388, %v1387
        %v1404 = vpack.c.b16 %v1390, %v1389
        %v1405 = vpack.c.b16 %v1392, %v1391
        %v1406 = vpack.c.b16 %v1394, %v1393
        %v1407 = vpack.c.b16 %v1396, %v1395
        %v1408 = vpack.c.b16 %v1398, %v1397
        %v1409 = vpack.c.b16 %v1400, %v1399
        %v1410 = vpack.c.b16 %v1402, %v1401
        %1419 = vmatprep.subr.bf16.mxu0 0
        %1420 = vmatpush1.bf16.msra.mxu0 %v1410
        %1421 = vmatprep.subr.bf16.mxu0 0
        %1422 = vmatpush1.bf16.msra.mxu0 %v1409
        %1423 = vmatprep.subr.bf16.mxu0 0
        %1424 = vmatpush1.bf16.msra.mxu0 %v1408
        %1425 = vmatprep.subr.bf16.mxu0 0
        %1426 = vmatpush1.bf16.msra.mxu0 %v1407
        %1427 = vmatprep.subr.bf16.mxu0 0
        %1428 = vmatpush1.bf16.msra.mxu0 %v1406
        %1429 = vmatprep.subr.bf16.mxu0 0
        %1430 = vmatpush1.bf16.msra.mxu0 %v1405
        %1431 = vmatprep.subr.bf16.mxu0 0
        %1432 = vmatpush1.bf16.msra.mxu0 %v1404
        %1433 = vmatprep.subr.bf16.mxu0 0
        %1434 = vmatpush1.bf16.msra.mxu0 %v1403
        %1435 = vmatprep.subr.bf16.mxu0 0
        %1436 = vmatpush2.bf16.msra.mxu0 0
        %1437 = vmatprep.subr.bf16.mxu0 0
        %1438 = vmatpush2.bf16.msra.mxu0 0
        %1439 = vmatprep.subr.bf16.mxu0 0
        %1440 = vmatpush2.bf16.msra.mxu0 0
        %1441 = vmatprep.subr.bf16.mxu0 0
        %1442 = vmatpush2.bf16.msra.mxu0 0
        %1443 = vmatprep.subr.bf16.mxu0 0
        %1444 = vmatpush2.bf16.msra.mxu0 0
        %1445 = vmatprep.subr.bf16.mxu0 0
        %1446 = vmatpush2.bf16.msra.mxu0 0
        %1447 = vmatprep.subr.bf16.mxu0 0
        %1448 = vmatpush2.bf16.msra.mxu0 0
        %1449 = vmatprep.subr.bf16.mxu0 0
        %1450 = vmatpush2.bf16.msra.mxu0 0
        %1451 = vmatprep.mubr.bf16.mxu0 0
        %1452 = vmatmul.mubr.bf16.gmra.mxu0 %v1370
        %v1453 = vpop.f32.mrf.mxu0
        %v1454 = vadd.f32 0.0, %v1453
        %v1455 = vpop.f32.mrf.mxu0
        %v1456 = vpop.f32.mrf.mxu0
        %v1457 = vadd.f32 0.0, %v1456
        %v1458 = vpop.f32.mrf.mxu0
        %1459 = vdwg.mxu0
        %v1460 = vmul.f32 %v1454, 0.088388346
        %v1461 = vmul.f32 %v1457, 0.088388346
        %v1462 = vld [vmem:[%s8] sm:$0xff]
        %v1463 = vld [vmem:[%s8 + $0x8] sm:$0xff]
        %v1464 = vld [vmem:[%s8 + $0x10] sm:$0xff]
        %v1465 = vld [vmem:[%s8 + $0x18] sm:$0xff]
        %v1466 = vld [vmem:[%s8 + $0x20] sm:$0xff]
        %v1467 = vld [vmem:[%s8 + $0x28] sm:$0xff]
        %v1468 = vld [vmem:[%s8 + $0x30] sm:$0xff]
        %v1469 = vld [vmem:[%s8 + $0x38] sm:$0xff]
        %v1470 = vld [vmem:[%s8 + $0x40] sm:$0xff]
        %v1471 = vld [vmem:[%s8 + $0x48] sm:$0xff]
        %v1472 = vld [vmem:[%s8 + $0x50] sm:$0xff]
        %v1473 = vld [vmem:[%s8 + $0x58] sm:$0xff]
        %v1474 = vld [vmem:[%s8 + $0x60] sm:$0xff]
        %v1475 = vld [vmem:[%s8 + $0x68] sm:$0xff]
        %v1476 = vld [vmem:[%s8 + $0x70] sm:$0xff]
        %v1477 = vld [vmem:[%s8 + $0x78] sm:$0xff]
        %v1478 = vpack.c.bf16 %v575, %v575
        %v1495 = vunpack.c.l.b16 %v1462
        %v1496 = vunpack.c.h.b16 %v1462
        %v1497 = vunpack.c.l.b16 %v1463
        %v1498 = vunpack.c.h.b16 %v1463
        %v1499 = vunpack.c.l.b16 %v1464
        %v1500 = vunpack.c.h.b16 %v1464
        %v1501 = vunpack.c.l.b16 %v1465
        %v1502 = vunpack.c.h.b16 %v1465
        %v1503 = vunpack.c.l.b16 %v1466
        %v1504 = vunpack.c.h.b16 %v1466
        %v1505 = vunpack.c.l.b16 %v1467
        %v1506 = vunpack.c.h.b16 %v1467
        %v1507 = vunpack.c.l.b16 %v1468
        %v1508 = vunpack.c.h.b16 %v1468
        %v1509 = vunpack.c.l.b16 %v1469
        %v1510 = vunpack.c.h.b16 %v1469
        %v1511 = vunpack.c.l.b16 %v1470
        %v1512 = vunpack.c.h.b16 %v1470
        %v1513 = vunpack.c.l.b16 %v1471
        %v1514 = vunpack.c.h.b16 %v1471
        %v1515 = vunpack.c.l.b16 %v1472
        %v1516 = vunpack.c.h.b16 %v1472
        %v1517 = vunpack.c.l.b16 %v1473
        %v1518 = vunpack.c.h.b16 %v1473
        %v1519 = vunpack.c.l.b16 %v1474
        %v1520 = vunpack.c.h.b16 %v1474
        %v1521 = vunpack.c.l.b16 %v1475
        %v1522 = vunpack.c.h.b16 %v1475
        %v1523 = vunpack.c.l.b16 %v1476
        %v1524 = vunpack.c.h.b16 %v1476
        %v1525 = vunpack.c.l.b16 %v1477
        %v1526 = vunpack.c.h.b16 %v1477
        %v1527 = vpack.c.b16 %v1497, %v1495
        %v1528 = vpack.c.b16 %v1498, %v1496
        %v1529 = vpack.c.b16 %v1501, %v1499
        %v1530 = vpack.c.b16 %v1502, %v1500
        %v1531 = vpack.c.b16 %v1505, %v1503
        %v1532 = vpack.c.b16 %v1506, %v1504
        %v1533 = vpack.c.b16 %v1509, %v1507
        %v1534 = vpack.c.b16 %v1510, %v1508
        %v1535 = vpack.c.b16 %v1513, %v1511
        %v1536 = vpack.c.b16 %v1514, %v1512
        %v1537 = vpack.c.b16 %v1517, %v1515
        %v1538 = vpack.c.b16 %v1518, %v1516
        %v1539 = vpack.c.b16 %v1521, %v1519
        %v1540 = vpack.c.b16 %v1522, %v1520
        %v1541 = vpack.c.b16 %v1525, %v1523
        %v1542 = vpack.c.b16 %v1526, %v1524
        %1559 = vmatprep.subr.bf16.mxu0 %v1542
        %1560 = vmatpush1.bf16.msra.mxu0 %v1541
        %1561 = vmatprep.subr.bf16.mxu0 %v1540
        %1562 = vmatpush1.bf16.msra.mxu0 %v1539
        %1563 = vmatprep.subr.bf16.mxu0 %v1538
        %1564 = vmatpush1.bf16.msra.mxu0 %v1537
        %1565 = vmatprep.subr.bf16.mxu0 %v1536
        %1566 = vmatpush1.bf16.msra.mxu0 %v1535
        %1567 = vmatprep.subr.bf16.mxu0 %v1534
        %1568 = vmatpush1.bf16.msra.mxu0 %v1533
        %1569 = vmatprep.subr.bf16.mxu0 %v1532
        %1570 = vmatpush1.bf16.msra.mxu0 %v1531
        %1571 = vmatprep.subr.bf16.mxu0 %v1530
        %1572 = vmatpush1.bf16.msra.mxu0 %v1529
        %1573 = vmatprep.subr.bf16.mxu0 %v1528
        %1574 = vmatpush1.bf16.msra.mxu0 %v1527
        %1575 = vmatprep.subr.bf16.mxu0 0
        %1576 = vmatpush2.bf16.msra.mxu0 0
        %1577 = vmatprep.subr.bf16.mxu0 0
        %1578 = vmatpush2.bf16.msra.mxu0 0
        %1579 = vmatprep.subr.bf16.mxu0 0
        %1580 = vmatpush2.bf16.msra.mxu0 0
        %1581 = vmatprep.subr.bf16.mxu0 0
        %1582 = vmatpush2.bf16.msra.mxu0 0
        %1583 = vmatprep.subr.bf16.mxu0 0
        %1584 = vmatpush2.bf16.msra.mxu0 0
        %1585 = vmatprep.subr.bf16.mxu0 0
        %1586 = vmatpush2.bf16.msra.mxu0 0
        %1587 = vmatprep.subr.bf16.mxu0 0
        %1588 = vmatpush2.bf16.msra.mxu0 0
        %1589 = vmatprep.subr.bf16.mxu0 0
        %1590 = vmatpush2.bf16.msra.mxu0 0
        %1591 = vmatprep.mubr.bf16.mxu0 0
        %1592 = vmatmul.mubr.bf16.gmra.mxu0 %v1478
        %v1593 = vpop.f32.mrf.mxu0
        %v1594 = vadd.f32 0.0, %v1593
        %v1595 = vpop.f32.mrf.mxu0
        %v1596 = vadd.f32 0.0, %v1595
        %v1597 = vpop.f32.mrf.mxu0
        %v1598 = vpop.f32.mrf.mxu0
        %1599 = vdwg.mxu0
        %v1600 = vpack.c.bf16 %v1461, %v1460
        %v1601 = vpack.c.bf16 %v1594, %v1594
        %1602 = vmatprep.subr.bf16.mxu0 0
        %1603 = vmatpush1.bf16.xpose.msra.mxu0 0
        %1604 = vmatprep.subr.bf16.mxu0 0
        %1605 = vmatpush1.bf16.xpose.msra.mxu0 0
        %1606 = vmatprep.subr.bf16.mxu0 0
        %1607 = vmatpush1.bf16.xpose.msra.mxu0 0
        %1608 = vmatprep.subr.bf16.mxu0 0
        %1609 = vmatpush1.bf16.xpose.msra.mxu0 0
        %1610 = vmatprep.subr.bf16.mxu0 0
        %1611 = vmatpush1.bf16.xpose.msra.mxu0 0
        %1612 = vmatprep.subr.bf16.mxu0 0
        %1613 = vmatpush1.bf16.xpose.msra.mxu0 0
        %1614 = vmatprep.subr.bf16.mxu0 0
        %1615 = vmatpush1.bf16.xpose.msra.mxu0 0
        %1616 = vmatprep.subr.bf16.mxu0 0
        %1617 = vmatpush1.bf16.xpose.msra.mxu0 %v1601
        %1618 = vmatprep.subr.bf16.mxu0 0
        %1619 = vmatpush2.bf16.xpose.msra.mxu0 0
        %1620 = vmatprep.subr.bf16.mxu0 0
        %1621 = vmatpush2.bf16.xpose.msra.mxu0 0
        %1622 = vmatprep.subr.bf16.mxu0 0
        %1623 = vmatpush2.bf16.xpose.msra.mxu0 0
        %1624 = vmatprep.subr.bf16.mxu0 0
        %1625 = vmatpush2.bf16.xpose.msra.mxu0 0
        %1626 = vmatprep.subr.bf16.mxu0 0
        %1627 = vmatpush2.bf16.xpose.msra.mxu0 0
        %1628 = vmatprep.subr.bf16.mxu0 0
        %1629 = vmatpush2.bf16.xpose.msra.mxu0 0
        %1630 = vmatprep.subr.bf16.mxu0 0
        %1631 = vmatpush2.bf16.xpose.msra.mxu0 0
        %1632 = vmatprep.subr.bf16.mxu0 0
        %1633 = vmatpush2.bf16.xpose.msra.mxu0 0
        %1634 = vmatprep.mubr.bf16.mxu0 0
        %1635 = vmatmul.mubr.bf16.gmra.mxu0 %v1600
        %v1636 = vpop.f32.mrf.mxu0
        %v1637 = vadd.f32 0.0, %v1636
        %v1638 = vpop.f32.mrf.mxu0
        %v1639 = vpop.f32.mrf.mxu0
        %v1640 = vadd.f32 0.0, %v1639
        %v1641 = vpop.f32.mrf.mxu0
        %1642 = vdwg.mxu0
        %vm1643 = vcmask 64512
        %v1644 = vsel %vm1643, %v1637, -inf
        %1645 = vmax.xlane.f32.xlu0 %v1644
        %v1646 = vpop.xlane.xlu0 %1645
        %v1647 = vsel %vm1643, %v1640, -inf
        %1648 = vmax.xlane.f32.xlu0 %v1647
        %v1649 = vpop.xlane.xlu0 %1648
        %v1650 = vsub.f32 %v1637, %v1646
        %v1651 = vsub.f32 %v1640, %v1649
        %v1652 = vmul.f32 %v1650, 1.442695
        %v1653 = vpow.pop %v1652
        %v1654 = vmul.f32 %v1651, 1.442695
        %v1655 = vpow.pop %v1654
        %v1656 = vsel %vm1643, %v1653, 0.0
        %1657 = vadd.xlane.f32.xlu0 %v1656
        %v1658 = vpop.xlane.xlu0 %1657
        %v1659 = vsel %vm1643, %v1655, 0.0
        %1660 = vadd.xlane.f32.xlu0 %v1659
        %v1661 = vpop.xlane.xlu0 %1660
        %v1662 = vrcp.pop %v1658
        %v1663 = vrcp.pop %v1661
        %v1664 = vmul.f32 %v1653, %v1662
        %v1665 = vmul.f32 %v1655, %v1663
        %v1666 = vpack.c.bf16 %v1665, %v1664
        %v1667 = vpack.c.bf16 %v1596, %v1596
        %v1669 = vsel %vm1643, %v1666, 0
        %v1672 = vsel %vm636, %v1667, 0
        %1674 = vmatprep.subr.bf16.mxu0 0
        %1675 = vmatpush1.bf16.msra.mxu0 0
        %1676 = vmatprep.subr.bf16.mxu0 0
        %1677 = vmatpush1.bf16.msra.mxu0 0
        %1678 = vmatprep.subr.bf16.mxu0 0
        %1679 = vmatpush1.bf16.msra.mxu0 0
        %1680 = vmatprep.subr.bf16.mxu0 0
        %1681 = vmatpush1.bf16.msra.mxu0 0
        %1682 = vmatprep.subr.bf16.mxu0 0
        %1683 = vmatpush1.bf16.msra.mxu0 0
        %1684 = vmatprep.subr.bf16.mxu0 0
        %1685 = vmatpush1.bf16.msra.mxu0 0
        %1686 = vmatprep.subr.bf16.mxu0 0
        %1687 = vmatpush1.bf16.msra.mxu0 0
        %1688 = vmatprep.subr.bf16.mxu0 0
        %1689 = vmatpush1.bf16.msra.mxu0 %v1672
        %1690 = vmatprep.subr.bf16.mxu0 0
        %1691 = vmatpush2.bf16.msra.mxu0 0
        %1692 = vmatprep.subr.bf16.mxu0 0
        %1693 = vmatpush2.bf16.msra.mxu0 0
        %1694 = vmatprep.subr.bf16.mxu0 0
        %1695 = vmatpush2.bf16.msra.mxu0 0
        %1696 = vmatprep.subr.bf16.mxu0 0
        %1697 = vmatpush2.bf16.msra.mxu0 0
        %1698 = vmatprep.subr.bf16.mxu0 0
        %1699 = vmatpush2.bf16.msra.mxu0 0
        %1700 = vmatprep.subr.bf16.mxu0 0
        %1701 = vmatpush2.bf16.msra.mxu0 0
        %1702 = vmatprep.subr.bf16.mxu0 0
        %1703 = vmatpush2.bf16.msra.mxu0 0
        %1704 = vmatprep.subr.bf16.mxu0 0
        %1705 = vmatpush2.bf16.msra.mxu0 0
        %1706 = vmatprep.mubr.bf16.mxu0 0
        %1707 = vmatmul.mubr.bf16.gmra.mxu0 %v1669
        %v1708 = vpop.f32.mrf.mxu0
        %v1709 = vadd.f32 0.0, %v1708
        %v1710 = vpop.f32.mrf.mxu0
        %v1711 = vpop.f32.mrf.mxu0
        %v1712 = vadd.f32 0.0, %v1711
        %v1713 = vpop.f32.mrf.mxu0
        %1714 = vdwg.mxu0
        %v1715 = vld [vmem:[#allocation10] sm:$0xf]
        %v1716 = vld [vmem:[#allocation10 + $0x4] sm:$0xf]
        %v1717 = vld [vmem:[#allocation10 + $0x8] sm:$0xf]
        %v1718 = vld [vmem:[#allocation10 + $0xc] sm:$0xf]
        %v1719 = vld [vmem:[#allocation10 + $0x10] sm:$0xf]
        %v1720 = vld [vmem:[#allocation10 + $0x14] sm:$0xf]
        %v1721 = vld [vmem:[#allocation10 + $0x18] sm:$0xf]
        %v1722 = vld [vmem:[#allocation10 + $0x1c] sm:$0xf]
        %v1723 = vld [vmem:[#allocation10 + $0x20] sm:$0xf]
        %v1724 = vld [vmem:[#allocation10 + $0x24] sm:$0xf]
        %v1725 = vld [vmem:[#allocation10 + $0x28] sm:$0xf]
        %v1726 = vld [vmem:[#allocation10 + $0x2c] sm:$0xf]
        %v1727 = vld [vmem:[#allocation10 + $0x30] sm:$0xf]
        %v1728 = vld [vmem:[#allocation10 + $0x34] sm:$0xf]
        %v1729 = vld [vmem:[#allocation10 + $0x38] sm:$0xf]
        %v1730 = vld [vmem:[#allocation10 + $0x3c] sm:$0xf]
        %v1731 = vpack.c.bf16 %v1712, %v1709
        %v1748 = vunpack.c.l.b16 %v1715
        %v1749 = vunpack.c.l.b16 %v1716
        %v1750 = vunpack.c.l.b16 %v1717
        %v1751 = vunpack.c.l.b16 %v1718
        %v1752 = vunpack.c.l.b16 %v1719
        %v1753 = vunpack.c.l.b16 %v1720
        %v1754 = vunpack.c.l.b16 %v1721
        %v1755 = vunpack.c.l.b16 %v1722
        %v1756 = vunpack.c.l.b16 %v1723
        %v1757 = vunpack.c.l.b16 %v1724
        %v1758 = vunpack.c.l.b16 %v1725
        %v1759 = vunpack.c.l.b16 %v1726
        %v1760 = vunpack.c.l.b16 %v1727
        %v1761 = vunpack.c.l.b16 %v1728
        %v1762 = vunpack.c.l.b16 %v1729
        %v1763 = vunpack.c.l.b16 %v1730
        %v1764 = vpack.c.b16 %v1749, %v1748
        %v1765 = vpack.c.b16 %v1751, %v1750
        %v1766 = vpack.c.b16 %v1753, %v1752
        %v1767 = vpack.c.b16 %v1755, %v1754
        %v1768 = vpack.c.b16 %v1757, %v1756
        %v1769 = vpack.c.b16 %v1759, %v1758
        %v1770 = vpack.c.b16 %v1761, %v1760
        %v1771 = vpack.c.b16 %v1763, %v1762
        %1780 = vmatprep.subr.bf16.mxu0 0
        %1781 = vmatpush1.bf16.msra.mxu0 %v1771
        %1782 = vmatprep.subr.bf16.mxu0 0
        %1783 = vmatpush1.bf16.msra.mxu0 %v1770
        %1784 = vmatprep.subr.bf16.mxu0 0
        %1785 = vmatpush1.bf16.msra.mxu0 %v1769
        %1786 = vmatprep.subr.bf16.mxu0 0
        %1787 = vmatpush1.bf16.msra.mxu0 %v1768
        %1788 = vmatprep.subr.bf16.mxu0 0
        %1789 = vmatpush1.bf16.msra.mxu0 %v1767
        %1790 = vmatprep.subr.bf16.mxu0 0
        %1791 = vmatpush1.bf16.msra.mxu0 %v1766
        %1792 = vmatprep.subr.bf16.mxu0 0
        %1793 = vmatpush1.bf16.msra.mxu0 %v1765
        %1794 = vmatprep.subr.bf16.mxu0 0
        %1795 = vmatpush1.bf16.msra.mxu0 %v1764
        %1796 = vmatprep.subr.bf16.mxu0 0
        %1797 = vmatpush2.bf16.msra.mxu0 0
        %1798 = vmatprep.subr.bf16.mxu0 0
        %1799 = vmatpush2.bf16.msra.mxu0 0
        %1800 = vmatprep.subr.bf16.mxu0 0
        %1801 = vmatpush2.bf16.msra.mxu0 0
        %1802 = vmatprep.subr.bf16.mxu0 0
        %1803 = vmatpush2.bf16.msra.mxu0 0
        %1804 = vmatprep.subr.bf16.mxu0 0
        %1805 = vmatpush2.bf16.msra.mxu0 0
        %1806 = vmatprep.subr.bf16.mxu0 0
        %1807 = vmatpush2.bf16.msra.mxu0 0
        %1808 = vmatprep.subr.bf16.mxu0 0
        %1809 = vmatpush2.bf16.msra.mxu0 0
        %1810 = vmatprep.subr.bf16.mxu0 0
        %1811 = vmatpush2.bf16.msra.mxu0 0
        %1812 = vmatprep.mubr.bf16.mxu0 0
        %1813 = vmatmul.mubr.bf16.gmra.mxu0 %v1731
        %v1814 = vpop.f32.mrf.mxu0
        %v1815 = vadd.f32 0.0, %v1814
        %v1816 = vpop.f32.mrf.mxu0
        %v1817 = vpop.f32.mrf.mxu0
        %v1818 = vadd.f32 0.0, %v1817
        %v1819 = vpop.f32.mrf.mxu0
        %1820 = vdwg.mxu0
        %v1821 = vadd.f32 %v1352, %v1815
        %v1822 = vadd.f32 %v1353, %v1818
        %1823 = vmatprep.subr.mxu0 0.0
        %1824 = vmatpush1.msra.mxu0 0.0
        %1825 = vmatprep.subr.mxu0 0.0
        %1826 = vmatpush1.msra.mxu0 0.0
        %1827 = vmatprep.subr.mxu0 0.0
        %1828 = vmatpush1.msra.mxu0 0.0
        %1829 = vmatprep.subr.mxu0 0.0
        %1830 = vmatpush1.msra.mxu0 0.0
        %1831 = vmatprep.subr.mxu0 0.0
        %1832 = vmatpush1.msra.mxu0 0.0
        %1833 = vmatprep.subr.mxu0 0.0
        %1834 = vmatpush1.msra.mxu0 0.0
        %1835 = vmatprep.subr.mxu0 0.0
        %1836 = vmatpush1.msra.mxu0 0.0
        %1837 = vmatprep.subr.mxu0 0.0
        %1838 = vmatpush1.msra.mxu0 0.0
        %1839 = vmatprep.subr.mxu0 0.0
        %1840 = vmatpush1.msra.mxu0 0.0
        %1841 = vmatprep.subr.mxu0 0.0
        %1842 = vmatpush1.msra.mxu0 0.0
        %1843 = vmatprep.subr.mxu0 0.0
        %1844 = vmatpush1.msra.mxu0 0.0
        %1845 = vmatprep.subr.mxu0 0.0
        %1846 = vmatpush1.msra.mxu0 0.0
        %1847 = vmatprep.subr.mxu0 0.0
        %1848 = vmatpush1.msra.mxu0 0.0
        %1849 = vmatprep.subr.mxu0 0.0
        %1850 = vmatpush1.msra.mxu0 0.0
        %1851 = vmatprep.subr.mxu0 0.0
        %1852 = vmatpush1.msra.mxu0 %v1822
        %1853 = vmatprep.subr.mxu0 0.0
        %1854 = vmatpush1.msra.mxu0 %v1821
        %1855 = vmatprep.subr.mxu0 0.0
        %1856 = vmatpush2.msra.mxu0 0.0
        %1857 = vmatprep.subr.mxu0 0.0
        %1858 = vmatpush2.msra.mxu0 0.0
        %1859 = vmatprep.subr.mxu0 0.0
        %1860 = vmatpush2.msra.mxu0 0.0
        %1861 = vmatprep.subr.mxu0 0.0
        %1862 = vmatpush2.msra.mxu0 0.0
        %1863 = vmatprep.subr.mxu0 0.0
        %1864 = vmatpush2.msra.mxu0 0.0
        %1865 = vmatprep.subr.mxu0 0.0
        %1866 = vmatpush2.msra.mxu0 0.0
        %1867 = vmatprep.subr.mxu0 0.0
        %1868 = vmatpush2.msra.mxu0 0.0
        %1869 = vmatprep.subr.mxu0 0.0
        %1870 = vmatpush2.msra.mxu0 0.0
        %1871 = vmatprep.subr.mxu0 0.0
        %1872 = vmatpush2.msra.mxu0 0.0
        %1873 = vmatprep.subr.mxu0 0.0
        %1874 = vmatpush2.msra.mxu0 0.0
        %1875 = vmatprep.subr.mxu0 0.0
        %1876 = vmatpush2.msra.mxu0 0.0
        %1877 = vmatprep.subr.mxu0 0.0
        %1878 = vmatpush2.msra.mxu0 0.0
        %1879 = vmatprep.subr.mxu0 0.0
        %1880 = vmatpush2.msra.mxu0 0.0
        %1881 = vmatprep.subr.mxu0 0.0
        %1882 = vmatpush2.msra.mxu0 0.0
        %1883 = vmatprep.subr.mxu0 0.0
        %1884 = vmatpush2.msra.mxu0 0.0
        %1885 = vmatprep.subr.mxu0 0.0
        %1886 = vmatpush2.msra.mxu0 0.0
        %1887 = vmatprep.mubr.f32.mxu0 0.0
        %1888 = vmatmul.mubr.f32.gmra.mxu0 %v1272
        %v1889 = vpop.f32.mrf.mxu0
        %v1890 = vadd.f32 0.0, %v1889
        %v1891 = vpop.f32.mrf.mxu0
        %1892 = vmatprep.mubr.f32.mxu0 0.0
        %1893 = vmatmul.mubr.f32.gmra.mxu0 %v1275
        %v1894 = vpop.f32.mrf.mxu0
        %v1895 = vadd.f32 0.0, %v1894
        %v1896 = vpop.f32.mrf.mxu0
        %1897 = vdwg.mxu0
        %v1898 = vsub.f32 %v1821, %v1890
        %v1899 = vsub.f32 %v1822, %v1895
        %v1900 = vadd.f32 %v1344, %v1890
        %v1901 = vadd.f32 %v1349, %v1895
        %v1902 = vld [vmem:[%s10] sm:$0xff]
        %v1903 = vld [vmem:[%s10 + $0x8] sm:$0xff]
        %v1904 = vld [vmem:[%s10 + $0x10] sm:$0xff]
        %v1905 = vld [vmem:[%s10 + $0x18] sm:$0xff]
        %v1906 = vld [vmem:[%s10 + $0x20] sm:$0xff]
        %v1907 = vld [vmem:[%s10 + $0x28] sm:$0xff]
        %v1908 = vld [vmem:[%s10 + $0x30] sm:$0xff]
        %v1909 = vld [vmem:[%s10 + $0x38] sm:$0xff]
        %v1910 = vld [vmem:[%s10 + $0x40] sm:$0xff]
        %v1911 = vld [vmem:[%s10 + $0x48] sm:$0xff]
        %v1912 = vld [vmem:[%s10 + $0x50] sm:$0xff]
        %v1913 = vld [vmem:[%s10 + $0x58] sm:$0xff]
        %v1914 = vld [vmem:[%s10 + $0x60] sm:$0xff]
        %v1915 = vld [vmem:[%s10 + $0x68] sm:$0xff]
        %v1916 = vld [vmem:[%s10 + $0x70] sm:$0xff]
        %v1917 = vld [vmem:[%s10 + $0x78] sm:$0xff]
        %v1918 = vld [vmem:[%s10 + $0x80] sm:$0xff]
        %v1919 = vld [vmem:[%s10 + $0x88] sm:$0xff]
        %v1920 = vld [vmem:[%s10 + $0x90] sm:$0xff]
        %v1921 = vld [vmem:[%s10 + $0x98] sm:$0xff]
        %v1922 = vld [vmem:[%s10 + $0xa0] sm:$0xff]
        %v1923 = vld [vmem:[%s10 + $0xa8] sm:$0xff]
        %v1924 = vld [vmem:[%s10 + $0xb0] sm:$0xff]
        %v1925 = vld [vmem:[%s10 + $0xb8] sm:$0xff]
        %v1926 = vld [vmem:[%s10 + $0xc0] sm:$0xff]
        %v1927 = vld [vmem:[%s10 + $0xc8] sm:$0xff]
        %v1928 = vld [vmem:[%s10 + $0xd0] sm:$0xff]
        %v1929 = vld [vmem:[%s10 + $0xd8] sm:$0xff]
        %v1930 = vld [vmem:[%s10 + $0xe0] sm:$0xff]
        %v1931 = vld [vmem:[%s10 + $0xe8] sm:$0xff]
        %v1932 = vld [vmem:[%s10 + $0xf0] sm:$0xff]
        %v1933 = vld [vmem:[%s10 + $0xf8] sm:$0xff]
        %v1934 = vpack.c.bf16 %v1899, %v1898
        %v1967 = vunpack.c.l.b16 %v1902
        %v1968 = vunpack.c.h.b16 %v1902
        %v1969 = vunpack.c.l.b16 %v1903
        %v1970 = vunpack.c.h.b16 %v1903
        %v1971 = vunpack.c.l.b16 %v1904
        %v1972 = vunpack.c.h.b16 %v1904
        %v1973 = vunpack.c.l.b16 %v1905
        %v1974 = vunpack.c.h.b16 %v1905
        %v1975 = vunpack.c.l.b16 %v1906
        %v1976 = vunpack.c.h.b16 %v1906
        %v1977 = vunpack.c.l.b16 %v1907
        %v1978 = vunpack.c.h.b16 %v1907
        %v1979 = vunpack.c.l.b16 %v1908
        %v1980 = vunpack.c.h.b16 %v1908
        %v1981 = vunpack.c.l.b16 %v1909
        %v1982 = vunpack.c.h.b16 %v1909
        %v1983 = vunpack.c.l.b16 %v1910
        %v1984 = vunpack.c.h.b16 %v1910
        %v1985 = vunpack.c.l.b16 %v1911
        %v1986 = vunpack.c.h.b16 %v1911
        %v1987 = vunpack.c.l.b16 %v1912
        %v1988 = vunpack.c.h.b16 %v1912
        %v1989 = vunpack.c.l.b16 %v1913
        %v1990 = vunpack.c.h.b16 %v1913
        %v1991 = vunpack.c.l.b16 %v1914
        %v1992 = vunpack.c.h.b16 %v1914
        %v1993 = vunpack.c.l.b16 %v1915
        %v1994 = vunpack.c.h.b16 %v1915
        %v1995 = vunpack.c.l.b16 %v1916
        %v1996 = vunpack.c.h.b16 %v1916
        %v1997 = vunpack.c.l.b16 %v1917
        %v1998 = vunpack.c.h.b16 %v1917
        %v1999 = vunpack.c.l.b16 %v1918
        %v2000 = vunpack.c.h.b16 %v1918
        %v2001 = vunpack.c.l.b16 %v1919
        %v2002 = vunpack.c.h.b16 %v1919
        %v2003 = vunpack.c.l.b16 %v1920
        %v2004 = vunpack.c.h.b16 %v1920
        %v2005 = vunpack.c.l.b16 %v1921
        %v2006 = vunpack.c.h.b16 %v1921
        %v2007 = vunpack.c.l.b16 %v1922
        %v2008 = vunpack.c.h.b16 %v1922
        %v2009 = vunpack.c.l.b16 %v1923
        %v2010 = vunpack.c.h.b16 %v1923
        %v2011 = vunpack.c.l.b16 %v1924
        %v2012 = vunpack.c.h.b16 %v1924
        %v2013 = vunpack.c.l.b16 %v1925
        %v2014 = vunpack.c.h.b16 %v1925
        %v2015 = vunpack.c.l.b16 %v1926
        %v2016 = vunpack.c.h.b16 %v1926
        %v2017 = vunpack.c.l.b16 %v1927
        %v2018 = vunpack.c.h.b16 %v1927
        %v2019 = vunpack.c.l.b16 %v1928
        %v2020 = vunpack.c.h.b16 %v1928
        %v2021 = vunpack.c.l.b16 %v1929
        %v2022 = vunpack.c.h.b16 %v1929
        %v2023 = vunpack.c.l.b16 %v1930
        %v2024 = vunpack.c.h.b16 %v1930
        %v2025 = vunpack.c.l.b16 %v1931
        %v2026 = vunpack.c.h.b16 %v1931
        %v2027 = vunpack.c.l.b16 %v1932
        %v2028 = vunpack.c.h.b16 %v1932
        %v2029 = vunpack.c.l.b16 %v1933
        %v2030 = vunpack.c.h.b16 %v1933
        %v2031 = vpack.c.b16 %v1971, %v1967
        %v2032 = vpack.c.b16 %v1972, %v1968
        %v2033 = vpack.c.b16 %v1973, %v1969
        %v2034 = vpack.c.b16 %v1974, %v1970
        %v2035 = vpack.c.b16 %v1979, %v1975
        %v2036 = vpack.c.b16 %v1980, %v1976
        %v2037 = vpack.c.b16 %v1981, %v1977
        %v2038 = vpack.c.b16 %v1982, %v1978
        %v2039 = vpack.c.b16 %v1987, %v1983
        %v2040 = vpack.c.b16 %v1988, %v1984
        %v2041 = vpack.c.b16 %v1989, %v1985
        %v2042 = vpack.c.b16 %v1990, %v1986
        %v2043 = vpack.c.b16 %v1995, %v1991
        %v2044 = vpack.c.b16 %v1996, %v1992
        %v2045 = vpack.c.b16 %v1997, %v1993
        %v2046 = vpack.c.b16 %v1998, %v1994
        %v2047 = vpack.c.b16 %v2003, %v1999
        %v2048 = vpack.c.b16 %v2004, %v2000
        %v2049 = vpack.c.b16 %v2005, %v2001
        %v2050 = vpack.c.b16 %v2006, %v2002
        %v2051 = vpack.c.b16 %v2011, %v2007
        %v2052 = vpack.c.b16 %v2012, %v2008
        %v2053 = vpack.c.b16 %v2013, %v2009
        %v2054 = vpack.c.b16 %v2014, %v2010
        %v2055 = vpack.c.b16 %v2019, %v2015
        %v2056 = vpack.c.b16 %v2020, %v2016
        %v2057 = vpack.c.b16 %v2021, %v2017
        %v2058 = vpack.c.b16 %v2022, %v2018
        %v2059 = vpack.c.b16 %v2027, %v2023
        %v2060 = vpack.c.b16 %v2028, %v2024
        %v2061 = vpack.c.b16 %v2029, %v2025
        %v2062 = vpack.c.b16 %v2030, %v2026
        %2095 = vmatprep.subr.bf16.mxu0 %v2060
        %2096 = vmatpush1.bf16.msra.mxu0 %v2059
        %2097 = vmatprep.subr.bf16.mxu0 %v2056
        %2098 = vmatpush1.bf16.msra.mxu0 %v2055
        %2099 = vmatprep.subr.bf16.mxu0 %v2052
        %2100 = vmatpush1.bf16.msra.mxu0 %v2051
        %2101 = vmatprep.subr.bf16.mxu0 %v2048
        %2102 = vmatpush1.bf16.msra.mxu0 %v2047
        %2103 = vmatprep.subr.bf16.mxu0 %v2044
        %2104 = vmatpush1.bf16.msra.mxu0 %v2043
        %2105 = vmatprep.subr.bf16.mxu0 %v2040
        %2106 = vmatpush1.bf16.msra.mxu0 %v2039
        %2107 = vmatprep.subr.bf16.mxu0 %v2036
        %2108 = vmatpush1.bf16.msra.mxu0 %v2035
        %2109 = vmatprep.subr.bf16.mxu0 %v2032
        %2110 = vmatpush1.bf16.msra.mxu0 %v2031
        %2111 = vmatprep.subr.bf16.mxu0 0
        %2112 = vmatpush2.bf16.msra.mxu0 0
        %2113 = vmatprep.subr.bf16.mxu0 0
        %2114 = vmatpush2.bf16.msra.mxu0 0
        %2115 = vmatprep.subr.bf16.mxu0 0
        %2116 = vmatpush2.bf16.msra.mxu0 0
        %2117 = vmatprep.subr.bf16.mxu0 0
        %2118 = vmatpush2.bf16.msra.mxu0 0
        %2119 = vmatprep.subr.bf16.mxu0 0
        %2120 = vmatpush2.bf16.msra.mxu0 0
        %2121 = vmatprep.subr.bf16.mxu0 0
        %2122 = vmatpush2.bf16.msra.mxu0 0
        %2123 = vmatprep.subr.bf16.mxu0 0
        %2124 = vmatpush2.bf16.msra.mxu0 0
        %2125 = vmatprep.subr.bf16.mxu0 0
        %2126 = vmatpush2.bf16.msra.mxu0 0
        %2127 = vmatprep.mubr.bf16.mxu0 0
        %2128 = vmatmul.mubr.bf16.gmra.mxu0 %v1934
        %v2129 = vpop.f32.mrf.mxu0
        %v2130 = vadd.f32 0.0, %v2129
        %v2131 = vpop.f32.mrf.mxu0
        %v2132 = vadd.f32 0.0, %v2131
        %v2133 = vpop.f32.mrf.mxu0
        %v2134 = vadd.f32 0.0, %v2133
        %v2135 = vpop.f32.mrf.mxu0
        %v2136 = vadd.f32 0.0, %v2135
        %2137 = vdwg.mxu0
        %2138 = vmatprep.subr.bf16.mxu0 %v2062
        %2139 = vmatpush1.bf16.msra.mxu0 %v2061
        %2140 = vmatprep.subr.bf16.mxu0 %v2058
        %2141 = vmatpush1.bf16.msra.mxu0 %v2057
        %2142 = vmatprep.subr.bf16.mxu0 %v2054
        %2143 = vmatpush1.bf16.msra.mxu0 %v2053
        %2144 = vmatprep.subr.bf16.mxu0 %v2050
        %2145 = vmatpush1.bf16.msra.mxu0 %v2049
        %2146 = vmatprep.subr.bf16.mxu0 %v2046
        %2147 = vmatpush1.bf16.msra.mxu0 %v2045
        %2148 = vmatprep.subr.bf16.mxu0 %v2042
        %2149 = vmatpush1.bf16.msra.mxu0 %v2041
        %2150 = vmatprep.subr.bf16.mxu0 %v2038
        %2151 = vmatpush1.bf16.msra.mxu0 %v2037
        %2152 = vmatprep.subr.bf16.mxu0 %v2034
        %2153 = vmatpush1.bf16.msra.mxu0 %v2033
        %2154 = vmatprep.subr.bf16.mxu0 0
        %2155 = vmatpush2.bf16.msra.mxu0 0
        %2156 = vmatprep.subr.bf16.mxu0 0
        %2157 = vmatpush2.bf16.msra.mxu0 0
        %2158 = vmatprep.subr.bf16.mxu0 0
        %2159 = vmatpush2.bf16.msra.mxu0 0
        %2160 = vmatprep.subr.bf16.mxu0 0
        %2161 = vmatpush2.bf16.msra.mxu0 0
        %2162 = vmatprep.subr.bf16.mxu0 0
        %2163 = vmatpush2.bf16.msra.mxu0 0
        %2164 = vmatprep.subr.bf16.mxu0 0
        %2165 = vmatpush2.bf16.msra.mxu0 0
        %2166 = vmatprep.subr.bf16.mxu0 0
        %2167 = vmatpush2.bf16.msra.mxu0 0
        %2168 = vmatprep.subr.bf16.mxu0 0
        %2169 = vmatpush2.bf16.msra.mxu0 0
        %2170 = vmatprep.mubr.bf16.mxu0 0
        %2171 = vmatmul.mubr.bf16.gmra.mxu0 %v1934
        %v2172 = vpop.f32.mrf.mxu0
        %v2173 = vadd.f32 0.0, %v2172
        %v2174 = vpop.f32.mrf.mxu0
        %v2175 = vadd.f32 0.0, %v2174
        %v2176 = vpop.f32.mrf.mxu0
        %v2177 = vadd.f32 0.0, %v2176
        %v2178 = vpop.f32.mrf.mxu0
        %v2179 = vadd.f32 0.0, %v2178
        %2180 = vdwg.mxu0
        %v2181 = vmax.f32 %v2130, 0.0
        %v2182 = vmax.f32 %v2132, 0.0
        %v2183 = vmax.f32 %v2173, 0.0
        %v2184 = vmax.f32 %v2175, 0.0
        %v2185 = vmax.f32 %v2134, 0.0
        %v2186 = vmax.f32 %v2136, 0.0
        %v2187 = vmax.f32 %v2177, 0.0
        %v2188 = vmax.f32 %v2179, 0.0
        %v2189 = vld [vmem:[%s11] sm:$0xf]
        %v2190 = vld [vmem:[%s11 + $0x4] sm:$0xf]
        %v2191 = vld [vmem:[%s11 + $0x8] sm:$0xf]
        %v2192 = vld [vmem:[%s11 + $0xc] sm:$0xf]
        %v2193 = vld [vmem:[%s11 + $0x10] sm:$0xf]
        %v2194 = vld [vmem:[%s11 + $0x14] sm:$0xf]
        %v2195 = vld [vmem:[%s11 + $0x18] sm:$0xf]
        %v2196 = vld [vmem:[%s11 + $0x1c] sm:$0xf]
        %v2197 = vld [vmem:[%s11 + $0x20] sm:$0xf]
        %v2198 = vld [vmem:[%s11 + $0x24] sm:$0xf]
        %v2199 = vld [vmem:[%s11 + $0x28] sm:$0xf]
        %v2200 = vld [vmem:[%s11 + $0x2c] sm:$0xf]
        %v2201 = vld [vmem:[%s11 + $0x30] sm:$0xf]
        %v2202 = vld [vmem:[%s11 + $0x34] sm:$0xf]
        %v2203 = vld [vmem:[%s11 + $0x38] sm:$0xf]
        %v2204 = vld [vmem:[%s11 + $0x3c] sm:$0xf]
        %v2205 = vld [vmem:[%s11 + $0x40] sm:$0xf]
        %v2206 = vld [vmem:[%s11 + $0x44] sm:$0xf]
        %v2207 = vld [vmem:[%s11 + $0x48] sm:$0xf]
        %v2208 = vld [vmem:[%s11 + $0x4c] sm:$0xf]
        %v2209 = vld [vmem:[%s11 + $0x50] sm:$0xf]
        %v2210 = vld [vmem:[%s11 + $0x54] sm:$0xf]
        %v2211 = vld [vmem:[%s11 + $0x58] sm:$0xf]
        %v2212 = vld [vmem:[%s11 + $0x5c] sm:$0xf]
        %v2213 = vld [vmem:[%s11 + $0x60] sm:$0xf]
        %v2214 = vld [vmem:[%s11 + $0x64] sm:$0xf]
        %v2215 = vld [vmem:[%s11 + $0x68] sm:$0xf]
        %v2216 = vld [vmem:[%s11 + $0x6c] sm:$0xf]
        %v2217 = vld [vmem:[%s11 + $0x70] sm:$0xf]
        %v2218 = vld [vmem:[%s11 + $0x74] sm:$0xf]
        %v2219 = vld [vmem:[%s11 + $0x78] sm:$0xf]
        %v2220 = vld [vmem:[%s11 + $0x7c] sm:$0xf]
        %v2221 = vld [vmem:[%s11 + $0x80] sm:$0xf]
        %v2222 = vld [vmem:[%s11 + $0x84] sm:$0xf]
        %v2223 = vld [vmem:[%s11 + $0x88] sm:$0xf]
        %v2224 = vld [vmem:[%s11 + $0x8c] sm:$0xf]
        %v2225 = vld [vmem:[%s11 + $0x90] sm:$0xf]
        %v2226 = vld [vmem:[%s11 + $0x94] sm:$0xf]
        %v2227 = vld [vmem:[%s11 + $0x98] sm:$0xf]
        %v2228 = vld [vmem:[%s11 + $0x9c] sm:$0xf]
        %v2229 = vld [vmem:[%s11 + $0xa0] sm:$0xf]
        %v2230 = vld [vmem:[%s11 + $0xa4] sm:$0xf]
        %v2231 = vld [vmem:[%s11 + $0xa8] sm:$0xf]
        %v2232 = vld [vmem:[%s11 + $0xac] sm:$0xf]
        %v2233 = vld [vmem:[%s11 + $0xb0] sm:$0xf]
        %v2234 = vld [vmem:[%s11 + $0xb4] sm:$0xf]
        %v2235 = vld [vmem:[%s11 + $0xb8] sm:$0xf]
        %v2236 = vld [vmem:[%s11 + $0xbc] sm:$0xf]
        %v2237 = vld [vmem:[%s11 + $0xc0] sm:$0xf]
        %v2238 = vld [vmem:[%s11 + $0xc4] sm:$0xf]
        %v2239 = vld [vmem:[%s11 + $0xc8] sm:$0xf]
        %v2240 = vld [vmem:[%s11 + $0xcc] sm:$0xf]
        %v2241 = vld [vmem:[%s11 + $0xd0] sm:$0xf]
        %v2242 = vld [vmem:[%s11 + $0xd4] sm:$0xf]
        %v2243 = vld [vmem:[%s11 + $0xd8] sm:$0xf]
        %v2244 = vld [vmem:[%s11 + $0xdc] sm:$0xf]
        %v2245 = vld [vmem:[%s11 + $0xe0] sm:$0xf]
        %v2246 = vld [vmem:[%s11 + $0xe4] sm:$0xf]
        %v2247 = vld [vmem:[%s11 + $0xe8] sm:$0xf]
        %v2248 = vld [vmem:[%s11 + $0xec] sm:$0xf]
        %v2249 = vld [vmem:[%s11 + $0xf0] sm:$0xf]
        %v2250 = vld [vmem:[%s11 + $0xf4] sm:$0xf]
        %v2251 = vld [vmem:[%s11 + $0xf8] sm:$0xf]
        %v2252 = vld [vmem:[%s11 + $0xfc] sm:$0xf]
        %v2253 = vpack.c.bf16 %v2185, %v2181
        %v2254 = vpack.c.bf16 %v2186, %v2182
        %v2255 = vpack.c.bf16 %v2187, %v2183
        %v2256 = vpack.c.bf16 %v2188, %v2184
        %v2321 = vunpack.c.l.b16 %v2189
        %v2322 = vunpack.c.l.b16 %v2190
        %v2323 = vunpack.c.l.b16 %v2191
        %v2324 = vunpack.c.l.b16 %v2192
        %v2325 = vunpack.c.l.b16 %v2193
        %v2326 = vunpack.c.l.b16 %v2194
        %v2327 = vunpack.c.l.b16 %v2195
        %v2328 = vunpack.c.l.b16 %v2196
        %v2329 = vunpack.c.l.b16 %v2197
        %v2330 = vunpack.c.l.b16 %v2198
        %v2331 = vunpack.c.l.b16 %v2199
        %v2332 = vunpack.c.l.b16 %v2200
        %v2333 = vunpack.c.l.b16 %v2201
        %v2334 = vunpack.c.l.b16 %v2202
        %v2335 = vunpack.c.l.b16 %v2203
        %v2336 = vunpack.c.l.b16 %v2204
        %v2337 = vunpack.c.l.b16 %v2205
        %v2338 = vunpack.c.l.b16 %v2206
        %v2339 = vunpack.c.l.b16 %v2207
        %v2340 = vunpack.c.l.b16 %v2208
        %v2341 = vunpack.c.l.b16 %v2209
        %v2342 = vunpack.c.l.b16 %v2210
        %v2343 = vunpack.c.l.b16 %v2211
        %v2344 = vunpack.c.l.b16 %v2212
        %v2345 = vunpack.c.l.b16 %v2213
        %v2346 = vunpack.c.l.b16 %v2214
        %v2347 = vunpack.c.l.b16 %v2215
        %v2348 = vunpack.c.l.b16 %v2216
        %v2349 = vunpack.c.l.b16 %v2217
        %v2350 = vunpack.c.l.b16 %v2218
        %v2351 = vunpack.c.l.b16 %v2219
        %v2352 = vunpack.c.l.b16 %v2220
        %v2353 = vunpack.c.l.b16 %v2221
        %v2354 = vunpack.c.l.b16 %v2222
        %v2355 = vunpack.c.l.b16 %v2223
        %v2356 = vunpack.c.l.b16 %v2224
        %v2357 = vunpack.c.l.b16 %v2225
        %v2358 = vunpack.c.l.b16 %v2226
        %v2359 = vunpack.c.l.b16 %v2227
        %v2360 = vunpack.c.l.b16 %v2228
        %v2361 = vunpack.c.l.b16 %v2229
        %v2362 = vunpack.c.l.b16 %v2230
        %v2363 = vunpack.c.l.b16 %v2231
        %v2364 = vunpack.c.l.b16 %v2232
        %v2365 = vunpack.c.l.b16 %v2233
        %v2366 = vunpack.c.l.b16 %v2234
        %v2367 = vunpack.c.l.b16 %v2235
        %v2368 = vunpack.c.l.b16 %v2236
        %v2369 = vunpack.c.l.b16 %v2237
        %v2370 = vunpack.c.l.b16 %v2238
        %v2371 = vunpack.c.l.b16 %v2239
        %v2372 = vunpack.c.l.b16 %v2240
        %v2373 = vunpack.c.l.b16 %v2241
        %v2374 = vunpack.c.l.b16 %v2242
        %v2375 = vunpack.c.l.b16 %v2243
        %v2376 = vunpack.c.l.b16 %v2244
        %v2377 = vunpack.c.l.b16 %v2245
        %v2378 = vunpack.c.l.b16 %v2246
        %v2379 = vunpack.c.l.b16 %v2247
        %v2380 = vunpack.c.l.b16 %v2248
        %v2381 = vunpack.c.l.b16 %v2249
        %v2382 = vunpack.c.l.b16 %v2250
        %v2383 = vunpack.c.l.b16 %v2251
        %v2384 = vunpack.c.l.b16 %v2252
        %v2385 = vpack.c.b16 %v2322, %v2321
        %v2386 = vpack.c.b16 %v2324, %v2323
        %v2387 = vpack.c.b16 %v2326, %v2325
        %v2388 = vpack.c.b16 %v2328, %v2327
        %v2389 = vpack.c.b16 %v2330, %v2329
        %v2390 = vpack.c.b16 %v2332, %v2331
        %v2391 = vpack.c.b16 %v2334, %v2333
        %v2392 = vpack.c.b16 %v2336, %v2335
        %v2393 = vpack.c.b16 %v2338, %v2337
        %v2394 = vpack.c.b16 %v2340, %v2339
        %v2395 = vpack.c.b16 %v2342, %v2341
        %v2396 = vpack.c.b16 %v2344, %v2343
        %v2397 = vpack.c.b16 %v2346, %v2345
        %v2398 = vpack.c.b16 %v2348, %v2347
        %v2399 = vpack.c.b16 %v2350, %v2349
        %v2400 = vpack.c.b16 %v2352, %v2351
        %v2401 = vpack.c.b16 %v2354, %v2353
        %v2402 = vpack.c.b16 %v2356, %v2355
        %v2403 = vpack.c.b16 %v2358, %v2357
        %v2404 = vpack.c.b16 %v2360, %v2359
        %v2405 = vpack.c.b16 %v2362, %v2361
        %v2406 = vpack.c.b16 %v2364, %v2363
        %v2407 = vpack.c.b16 %v2366, %v2365
        %v2408 = vpack.c.b16 %v2368, %v2367
        %v2409 = vpack.c.b16 %v2370, %v2369
        %v2410 = vpack.c.b16 %v2372, %v2371
        %v2411 = vpack.c.b16 %v2374, %v2373
        %v2412 = vpack.c.b16 %v2376, %v2375
        %v2413 = vpack.c.b16 %v2378, %v2377
        %v2414 = vpack.c.b16 %v2380, %v2379
        %v2415 = vpack.c.b16 %v2382, %v2381
        %v2416 = vpack.c.b16 %v2384, %v2383
        %2449 = vmatprep.subr.bf16.mxu0 0
        %2450 = vmatpush1.bf16.msra.mxu0 %v2392
        %2451 = vmatprep.subr.bf16.mxu0 0
        %2452 = vmatpush1.bf16.msra.mxu0 %v2391
        %2453 = vmatprep.subr.bf16.mxu0 0
        %2454 = vmatpush1.bf16.msra.mxu0 %v2390
        %2455 = vmatprep.subr.bf16.mxu0 0
        %2456 = vmatpush1.bf16.msra.mxu0 %v2389
        %2457 = vmatprep.subr.bf16.mxu0 0
        %2458 = vmatpush1.bf16.msra.mxu0 %v2388
        %2459 = vmatprep.subr.bf16.mxu0 0
        %2460 = vmatpush1.bf16.msra.mxu0 %v2387
        %2461 = vmatprep.subr.bf16.mxu0 0
        %2462 = vmatpush1.bf16.msra.mxu0 %v2386
        %2463 = vmatprep.subr.bf16.mxu0 0
        %2464 = vmatpush1.bf16.msra.mxu0 %v2385
        %2465 = vmatprep.subr.bf16.mxu0 0
        %2466 = vmatpush2.bf16.msra.mxu0 %v2400
        %2467 = vmatprep.subr.bf16.mxu0 0
        %2468 = vmatpush2.bf16.msra.mxu0 %v2399
        %2469 = vmatprep.subr.bf16.mxu0 0
        %2470 = vmatpush2.bf16.msra.mxu0 %v2398
        %2471 = vmatprep.subr.bf16.mxu0 0
        %2472 = vmatpush2.bf16.msra.mxu0 %v2397
        %2473 = vmatprep.subr.bf16.mxu0 0
        %2474 = vmatpush2.bf16.msra.mxu0 %v2396
        %2475 = vmatprep.subr.bf16.mxu0 0
        %2476 = vmatpush2.bf16.msra.mxu0 %v2395
        %2477 = vmatprep.subr.bf16.mxu0 0
        %2478 = vmatpush2.bf16.msra.mxu0 %v2394
        %2479 = vmatprep.subr.bf16.mxu0 0
        %2480 = vmatpush2.bf16.msra.mxu0 %v2393
        %2481 = vmatprep.mubr.bf16.mxu0 %v2254
        %2482 = vmatmul.mubr.bf16.gmra.mxu0 %v2253
        %v2483 = vpop.f32.mrf.mxu0
        %v2484 = vadd.f32 0.0, %v2483
        %v2485 = vpop.f32.mrf.mxu0
        %v2486 = vpop.f32.mrf.mxu0
        %v2487 = vadd.f32 0.0, %v2486
        %v2488 = vpop.f32.mrf.mxu0
        %2489 = vdwg.mxu0
        %2490 = vmatprep.subr.bf16.mxu0 0
        %2491 = vmatpush1.bf16.msra.mxu0 %v2408
        %2492 = vmatprep.subr.bf16.mxu0 0
        %2493 = vmatpush1.bf16.msra.mxu0 %v2407
        %2494 = vmatprep.subr.bf16.mxu0 0
        %2495 = vmatpush1.bf16.msra.mxu0 %v2406
        %2496 = vmatprep.subr.bf16.mxu0 0
        %2497 = vmatpush1.bf16.msra.mxu0 %v2405
        %2498 = vmatprep.subr.bf16.mxu0 0
        %2499 = vmatpush1.bf16.msra.mxu0 %v2404
        %2500 = vmatprep.subr.bf16.mxu0 0
        %2501 = vmatpush1.bf16.msra.mxu0 %v2403
        %2502 = vmatprep.subr.bf16.mxu0 0
        %2503 = vmatpush1.bf16.msra.mxu0 %v2402
        %2504 = vmatprep.subr.bf16.mxu0 0
        %2505 = vmatpush1.bf16.msra.mxu0 %v2401
        %2506 = vmatprep.subr.bf16.mxu0 0
        %2507 = vmatpush2.bf16.msra.mxu0 %v2416
        %2508 = vmatprep.subr.bf16.mxu0 0
        %2509 = vmatpush2.bf16.msra.mxu0 %v2415
        %2510 = vmatprep.subr.bf16.mxu0 0
        %2511 = vmatpush2.bf16.msra.mxu0 %v2414
        %2512 = vmatprep.subr.bf16.mxu0 0
        %2513 = vmatpush2.bf16.msra.mxu0 %v2413
        %2514 = vmatprep.subr.bf16.mxu0 0
        %2515 = vmatpush2.bf16.msra.mxu0 %v2412
        %2516 = vmatprep.subr.bf16.mxu0 0
        %2517 = vmatpush2.bf16.msra.mxu0 %v2411
        %2518 = vmatprep.subr.bf16.mxu0 0
        %2519 = vmatpush2.bf16.msra.mxu0 %v2410
        %2520 = vmatprep.subr.bf16.mxu0 0
        %2521 = vmatpush2.bf16.msra.mxu0 %v2409
        %2522 = vmatprep.mubr.bf16.mxu0 %v2256
        %2523 = vmatmul.mubr.bf16.gmra.mxu0 %v2255
        %v2524 = vpop.f32.mrf.mxu0
        %v2525 = vadd.f32 %v2484, %v2524
        %v2526 = vpop.f32.mrf.mxu0
        %v2527 = vpop.f32.mrf.mxu0
        %v2528 = vadd.f32 %v2487, %v2527
        %v2529 = vpop.f32.mrf.mxu0
        %2530 = vdwg.mxu0
        %v2531 = vadd.f32 %v1898, %v2525
        %v2532 = vadd.f32 %v1899, %v2528
        %2533 = vmatprep.subr.mxu0 0.0
        %2534 = vmatpush1.msra.mxu0 0.0
        %2535 = vmatprep.subr.mxu0 0.0
        %2536 = vmatpush1.msra.mxu0 0.0
        %2537 = vmatprep.subr.mxu0 0.0
        %2538 = vmatpush1.msra.mxu0 0.0
        %2539 = vmatprep.subr.mxu0 0.0
        %2540 = vmatpush1.msra.mxu0 0.0
        %2541 = vmatprep.subr.mxu0 0.0
        %2542 = vmatpush1.msra.mxu0 0.0
        %2543 = vmatprep.subr.mxu0 0.0
        %2544 = vmatpush1.msra.mxu0 0.0
        %2545 = vmatprep.subr.mxu0 0.0
        %2546 = vmatpush1.msra.mxu0 0.0
        %2547 = vmatprep.subr.mxu0 0.0
        %2548 = vmatpush1.msra.mxu0 0.0
        %2549 = vmatprep.subr.mxu0 0.0
        %2550 = vmatpush1.msra.mxu0 0.0
        %2551 = vmatprep.subr.mxu0 0.0
        %2552 = vmatpush1.msra.mxu0 0.0
        %2553 = vmatprep.subr.mxu0 0.0
        %2554 = vmatpush1.msra.mxu0 0.0
        %2555 = vmatprep.subr.mxu0 0.0
        %2556 = vmatpush1.msra.mxu0 0.0
        %2557 = vmatprep.subr.mxu0 0.0
        %2558 = vmatpush1.msra.mxu0 0.0
        %2559 = vmatprep.subr.mxu0 0.0
        %2560 = vmatpush1.msra.mxu0 0.0
        %2561 = vmatprep.subr.mxu0 0.0
        %2562 = vmatpush1.msra.mxu0 %v2532
        %2563 = vmatprep.subr.mxu0 0.0
        %2564 = vmatpush1.msra.mxu0 %v2531
        %2565 = vmatprep.subr.mxu0 0.0
        %2566 = vmatpush2.msra.mxu0 0.0
        %2567 = vmatprep.subr.mxu0 0.0
        %2568 = vmatpush2.msra.mxu0 0.0
        %2569 = vmatprep.subr.mxu0 0.0
        %2570 = vmatpush2.msra.mxu0 0.0
        %2571 = vmatprep.subr.mxu0 0.0
        %2572 = vmatpush2.msra.mxu0 0.0
        %2573 = vmatprep.subr.mxu0 0.0
        %2574 = vmatpush2.msra.mxu0 0.0
        %2575 = vmatprep.subr.mxu0 0.0
        %2576 = vmatpush2.msra.mxu0 0.0
        %2577 = vmatprep.subr.mxu0 0.0
        %2578 = vmatpush2.msra.mxu0 0.0
        %2579 = vmatprep.subr.mxu0 0.0
        %2580 = vmatpush2.msra.mxu0 0.0
        %2581 = vmatprep.subr.mxu0 0.0
        %2582 = vmatpush2.msra.mxu0 0.0
        %2583 = vmatprep.subr.mxu0 0.0
        %2584 = vmatpush2.msra.mxu0 0.0
        %2585 = vmatprep.subr.mxu0 0.0
        %2586 = vmatpush2.msra.mxu0 0.0
        %2587 = vmatprep.subr.mxu0 0.0
        %2588 = vmatpush2.msra.mxu0 0.0
        %2589 = vmatprep.subr.mxu0 0.0
        %2590 = vmatpush2.msra.mxu0 0.0
        %2591 = vmatprep.subr.mxu0 0.0
        %2592 = vmatpush2.msra.mxu0 0.0
        %2593 = vmatprep.subr.mxu0 0.0
        %2594 = vmatpush2.msra.mxu0 0.0
        %2595 = vmatprep.subr.mxu0 0.0
        %2596 = vmatpush2.msra.mxu0 0.0
        %2597 = vmatprep.mubr.f32.mxu0 0.0
        %2598 = vmatmul.mubr.f32.gmra.mxu0 %v1272
        %v2599 = vpop.f32.mrf.mxu0
        %v2600 = vadd.f32 0.0, %v2599
        %v2601 = vpop.f32.mrf.mxu0
        %2602 = vmatprep.mubr.f32.mxu0 0.0
        %2603 = vmatmul.mubr.f32.gmra.mxu0 %v1275
        %v2604 = vpop.f32.mrf.mxu0
        %v2605 = vadd.f32 0.0, %v2604
        %v2606 = vpop.f32.mrf.mxu0
        %2607 = vdwg.mxu0
        %v2608 = vsub.f32 %v2531, %v2600
        %v2609 = vsub.f32 %v2532, %v2605
        %v2610 = vadd.f32 %v1900, %v2600
        %v2611 = vadd.f32 %v1901, %v2605
        %v2612 = vrot.slane %v2610, 7
        %v2613 = vrot.slane %v2611, 7
        %v2614 = vlaneseq
        %v2615 = vshrl.u32 %v2614, 7
        %vm2616 = vcmp.lt.s32.totalorder %v2615, 1
        %v2617 = vsel %vm2616, %v2612, %v2613
        %v2618 = vsel %vm2616, %v2613, %v2612
        %v2619 = vrot.slane %v2610, 1
        %v2620 = vrot.slane %v2611, 1
        %vm2621 = vcmp.lt.s32.totalorder %v2615, 7
        %v2622 = vsel %vm2621, %v2619, %v2620
        %v2623 = vsel %vm2621, %v2620, %v2619
        %v2624 = vld [vmem:[%s12] sm:$0xf]
        %v2625 = vld [vmem:[%s12 + $0x4] sm:$0xf]
        %v2626 = vld [vmem:[%s12 + $0x8] sm:$0xf]
        %v2627 = vld [vmem:[%s12 + $0xc] sm:$0xf]
        %v2628 = vld [vmem:[%s12 + $0x10] sm:$0xf]
        %v2629 = vld [vmem:[%s12 + $0x14] sm:$0xf]
        %v2630 = vld [vmem:[%s12 + $0x18] sm:$0xf]
        %v2631 = vld [vmem:[%s12 + $0x1c] sm:$0xf]
        %v2632 = vld [vmem:[%s12 + $0x20] sm:$0xf]
        %v2633 = vld [vmem:[%s12 + $0x24] sm:$0xf]
        %v2634 = vld [vmem:[%s12 + $0x28] sm:$0xf]
        %v2635 = vld [vmem:[%s12 + $0x2c] sm:$0xf]
        %v2636 = vld [vmem:[%s12 + $0x30] sm:$0xf]
        %v2637 = vld [vmem:[%s12 + $0x34] sm:$0xf]
        %v2638 = vld [vmem:[%s12 + $0x38] sm:$0xf]
        %v2639 = vld [vmem:[%s12 + $0x3c] sm:$0xf]
        %v2640 = vld [vmem:[%s12 + $0x40] sm:$0xf]
        %v2641 = vld [vmem:[%s12 + $0x44] sm:$0xf]
        %v2642 = vld [vmem:[%s12 + $0x48] sm:$0xf]
        %v2643 = vld [vmem:[%s12 + $0x4c] sm:$0xf]
        %v2644 = vld [vmem:[%s12 + $0x50] sm:$0xf]
        %v2645 = vld [vmem:[%s12 + $0x54] sm:$0xf]
        %v2646 = vld [vmem:[%s12 + $0x58] sm:$0xf]
        %v2647 = vld [vmem:[%s12 + $0x5c] sm:$0xf]
        %v2648 = vld [vmem:[%s12 + $0x60] sm:$0xf]
        %v2649 = vld [vmem:[%s12 + $0x64] sm:$0xf]
        %v2650 = vld [vmem:[%s12 + $0x68] sm:$0xf]
        %v2651 = vld [vmem:[%s12 + $0x6c] sm:$0xf]
        %v2652 = vld [vmem:[%s12 + $0x70] sm:$0xf]
        %v2653 = vld [vmem:[%s12 + $0x74] sm:$0xf]
        %v2654 = vld [vmem:[%s12 + $0x78] sm:$0xf]
        %v2655 = vld [vmem:[%s12 + $0x7c] sm:$0xf]
        %v2656 = vld [vmem:[%s12 + $0x80] sm:$0xf]
        %v2657 = vld [vmem:[%s12 + $0x84] sm:$0xf]
        %v2658 = vld [vmem:[%s12 + $0x88] sm:$0xf]
        %v2659 = vld [vmem:[%s12 + $0x8c] sm:$0xf]
        %v2660 = vld [vmem:[%s12 + $0x90] sm:$0xf]
        %v2661 = vld [vmem:[%s12 + $0x94] sm:$0xf]
        %v2662 = vld [vmem:[%s12 + $0x98] sm:$0xf]
        %v2663 = vld [vmem:[%s12 + $0x9c] sm:$0xf]
        %v2664 = vld [vmem:[%s12 + $0xa0] sm:$0xf]
        %v2665 = vld [vmem:[%s12 + $0xa4] sm:$0xf]
        %v2666 = vld [vmem:[%s12 + $0xa8] sm:$0xf]
        %v2667 = vld [vmem:[%s12 + $0xac] sm:$0xf]
        %v2668 = vld [vmem:[%s12 + $0xb0] sm:$0xf]
        %v2669 = vld [vmem:[%s12 + $0xb4] sm:$0xf]
        %v2670 = vld [vmem:[%s12 + $0xb8] sm:$0xf]
        %v2671 = vld [vmem:[%s12 + $0xbc] sm:$0xf]
        %v2672 = vpack.c.bf16 %v2617, %v2618
        %v2673 = vpack.c.bf16 %v2611, %v2610
        %v2674 = vpack.c.bf16 %v2623, %v2622
        %2675 = vst [vmem:[%s554] sm:$0xff] %v2608
        %2676 = vst [vmem:[%s554 + $0x8] sm:$0xff] %v2609
        %2678 = vset.pattern.permute.xlu0 0
        %2679 = vperm.xlu0 %2678, %v794
        %v2680 = vpop.permute.xlu0 %2679
        %2683 = vset.pattern.permute.xlu0 0
        %2684 = vperm.xlu0 %2683, %v799
        %v2685 = vpop.permute.xlu0 %2684
        %v2735 = vunpack.c.l.b16 %v2624
        %v2736 = vunpack.c.l.b16 %v2625
        %v2737 = vunpack.c.l.b16 %v2626
        %v2738 = vunpack.c.l.b16 %v2627
        %v2739 = vunpack.c.l.b16 %v2628
        %v2740 = vunpack.c.l.b16 %v2629
        %v2741 = vunpack.c.l.b16 %v2630
        %v2742 = vunpack.c.l.b16 %v2631
        %v2743 = vunpack.c.l.b16 %v2632
        %v2744 = vunpack.c.l.b16 %v2633
        %v2745 = vunpack.c.l.b16 %v2634
        %v2746 = vunpack.c.l.b16 %v2635
        %v2747 = vunpack.c.l.b16 %v2636
        %v2748 = vunpack.c.l.b16 %v2637
        %v2749 = vunpack.c.l.b16 %v2638
        %v2750 = vunpack.c.l.b16 %v2639
        %v2751 = vunpack.c.l.b16 %v2640
        %v2752 = vunpack.c.l.b16 %v2641
        %v2753 = vunpack.c.l.b16 %v2642
        %v2754 = vunpack.c.l.b16 %v2643
        %v2755 = vunpack.c.l.b16 %v2644
        %v2756 = vunpack.c.l.b16 %v2645
        %v2757 = vunpack.c.l.b16 %v2646
        %v2758 = vunpack.c.l.b16 %v2647
        %v2759 = vunpack.c.l.b16 %v2648
        %v2760 = vunpack.c.l.b16 %v2649
        %v2761 = vunpack.c.l.b16 %v2650
        %v2762 = vunpack.c.l.b16 %v2651
        %v2763 = vunpack.c.l.b16 %v2652
        %v2764 = vunpack.c.l.b16 %v2653
        %v2765 = vunpack.c.l.b16 %v2654
        %v2766 = vunpack.c.l.b16 %v2655
        %v2767 = vunpack.c.l.b16 %v2656
        %v2768 = vunpack.c.l.b16 %v2657
        %v2769 = vunpack.c.l.b16 %v2658
        %v2770 = vunpack.c.l.b16 %v2659
        %v2771 = vunpack.c.l.b16 %v2660
        %v2772 = vunpack.c.l.b16 %v2661
        %v2773 = vunpack.c.l.b16 %v2662
        %v2774 = vunpack.c.l.b16 %v2663
        %v2775 = vunpack.c.l.b16 %v2664
        %v2776 = vunpack.c.l.b16 %v2665
        %v2777 = vunpack.c.l.b16 %v2666
        %v2778 = vunpack.c.l.b16 %v2667
        %v2779 = vunpack.c.l.b16 %v2668
        %v2780 = vunpack.c.l.b16 %v2669
        %v2781 = vunpack.c.l.b16 %v2670
        %v2782 = vunpack.c.l.b16 %v2671
        %v2783 = vpack.c.b16 %v2736, %v2735
        %v2784 = vpack.c.b16 %v2738, %v2737
        %v2785 = vpack.c.b16 %v2740, %v2739
        %v2786 = vpack.c.b16 %v2742, %v2741
        %v2787 = vpack.c.b16 %v2744, %v2743
        %v2788 = vpack.c.b16 %v2746, %v2745
        %v2789 = vpack.c.b16 %v2748, %v2747
        %v2790 = vpack.c.b16 %v2750, %v2749
        %v2791 = vpack.c.b16 %v2752, %v2751
        %v2792 = vpack.c.b16 %v2754, %v2753
        %v2793 = vpack.c.b16 %v2756, %v2755
        %v2794 = vpack.c.b16 %v2758, %v2757
        %v2795 = vpack.c.b16 %v2760, %v2759
        %v2796 = vpack.c.b16 %v2762, %v2761
        %v2797 = vpack.c.b16 %v2764, %v2763
        %v2798 = vpack.c.b16 %v2766, %v2765
        %v2799 = vpack.c.b16 %v2768, %v2767
        %v2800 = vpack.c.b16 %v2770, %v2769
        %v2801 = vpack.c.b16 %v2772, %v2771
        %v2802 = vpack.c.b16 %v2774, %v2773
        %v2803 = vpack.c.b16 %v2776, %v2775
        %v2804 = vpack.c.b16 %v2778, %v2777
        %v2805 = vpack.c.b16 %v2780, %v2779
        %v2806 = vpack.c.b16 %v2782, %v2781
        %2831 = vmatprep.subr.bf16.mxu0 0
        %2832 = vmatpush1.bf16.msra.mxu0 %v2790
        %2833 = vmatprep.subr.bf16.mxu0 0
        %2834 = vmatpush1.bf16.msra.mxu0 %v2789
        %2835 = vmatprep.subr.bf16.mxu0 0
        %2836 = vmatpush1.bf16.msra.mxu0 %v2788
        %2837 = vmatprep.subr.bf16.mxu0 0
        %2838 = vmatpush1.bf16.msra.mxu0 %v2787
        %2839 = vmatprep.subr.bf16.mxu0 0
        %2840 = vmatpush1.bf16.msra.mxu0 %v2786
        %2841 = vmatprep.subr.bf16.mxu0 0
        %2842 = vmatpush1.bf16.msra.mxu0 %v2785
        %2843 = vmatprep.subr.bf16.mxu0 0
        %2844 = vmatpush1.bf16.msra.mxu0 %v2784
        %2845 = vmatprep.subr.bf16.mxu0 0
        %2846 = vmatpush1.bf16.msra.mxu0 %v2783
        %2847 = vmatprep.subr.bf16.mxu0 0
        %2848 = vmatpush2.bf16.msra.mxu0 %v2798
        %2849 = vmatprep.subr.bf16.mxu0 0
        %2850 = vmatpush2.bf16.msra.mxu0 %v2797
        %2851 = vmatprep.subr.bf16.mxu0 0
        %2852 = vmatpush2.bf16.msra.mxu0 %v2796
        %2853 = vmatprep.subr.bf16.mxu0 0
        %2854 = vmatpush2.bf16.msra.mxu0 %v2795
        %2855 = vmatprep.subr.bf16.mxu0 0
        %2856 = vmatpush2.bf16.msra.mxu0 %v2794
        %2857 = vmatprep.subr.bf16.mxu0 0
        %2858 = vmatpush2.bf16.msra.mxu0 %v2793
        %2859 = vmatprep.subr.bf16.mxu0 0
        %2860 = vmatpush2.bf16.msra.mxu0 %v2792
        %2861 = vmatprep.subr.bf16.mxu0 0
        %2862 = vmatpush2.bf16.msra.mxu0 %v2791
        %2863 = vmatprep.mubr.bf16.mxu0 %v2673
        %2864 = vmatmul.mubr.bf16.gmra.mxu0 %v2672
        %v2865 = vpop.f32.mrf.mxu0
        %v2866 = vadd.f32 %v2680, %v2865
        %v2867 = vpop.f32.mrf.mxu0
        %v2868 = vpop.f32.mrf.mxu0
        %v2869 = vadd.f32 %v2685, %v2868
        %v2870 = vpop.f32.mrf.mxu0
        %2871 = vdwg.mxu0
        %2872 = vmatprep.subr.bf16.mxu0 0
        %2873 = vmatpush1.bf16.msra.mxu0 %v2806
        %2874 = vmatprep.subr.bf16.mxu0 0
        %2875 = vmatpush1.bf16.msra.mxu0 %v2805
        %2876 = vmatprep.subr.bf16.mxu0 0
        %2877 = vmatpush1.bf16.msra.mxu0 %v2804
        %2878 = vmatprep.subr.bf16.mxu0 0
        %2879 = vmatpush1.bf16.msra.mxu0 %v2803
        %2880 = vmatprep.subr.bf16.mxu0 0
        %2881 = vmatpush1.bf16.msra.mxu0 %v2802
        %2882 = vmatprep.subr.bf16.mxu0 0
        %2883 = vmatpush1.bf16.msra.mxu0 %v2801
        %2884 = vmatprep.subr.bf16.mxu0 0
        %2885 = vmatpush1.bf16.msra.mxu0 %v2800
        %2886 = vmatprep.subr.bf16.mxu0 0
        %2887 = vmatpush1.bf16.msra.mxu0 %v2799
        %2888 = vmatprep.subr.bf16.mxu0 0
        %2889 = vmatpush2.bf16.msra.mxu0 0
        %2890 = vmatprep.subr.bf16.mxu0 0
        %2891 = vmatpush2.bf16.msra.mxu0 0
        %2892 = vmatprep.subr.bf16.mxu0 0
        %2893 = vmatpush2.bf16.msra.mxu0 0
        %2894 = vmatprep.subr.bf16.mxu0 0
        %2895 = vmatpush2.bf16.msra.mxu0 0
        %2896 = vmatprep.subr.bf16.mxu0 0
        %2897 = vmatpush2.bf16.msra.mxu0 0
        %2898 = vmatprep.subr.bf16.mxu0 0
        %2899 = vmatpush2.bf16.msra.mxu0 0
        %2900 = vmatprep.subr.bf16.mxu0 0
        %2901 = vmatpush2.bf16.msra.mxu0 0
        %2902 = vmatprep.subr.bf16.mxu0 0
        %2903 = vmatpush2.bf16.msra.mxu0 0
        %2904 = vmatprep.mubr.bf16.mxu0 0
        %2905 = vmatmul.mubr.bf16.gmra.mxu0 %v2674
        %v2906 = vpop.f32.mrf.mxu0
        %v2907 = vadd.f32 %v2866, %v2906
        %v2908 = vpop.f32.mrf.mxu0
        %v2909 = vpop.f32.mrf.mxu0
        %v2910 = vadd.f32 %v2869, %v2909
        %v2911 = vpop.f32.mrf.mxu0
        %2912 = vdwg.mxu0
        %2913 = vst [vmem:[%s571] sm:$0xff] %v2907
        %2914 = vst [vmem:[%s571 + $0x8] sm:$0xff] %v2910
        %s2915 = sand.u32 %s325, 1
        %s2916 = scalar_lea.sflag [#allocation4], %s2915
        %s2917 = sand.u32 %s325, 1
        %s2918 = smul.addr %s2917, 16
        %s2919 = scalar_lea.vmem [#allocation11], %s2918
        %p2920 = scmp.lt.s32.totalorder %s34, 1
        %s2921 = scalar_select %p2920, %s34, 1
        %s2922 = smul.addr %s2921, 2
        %s2923 = smul.addr %s2922, 8
        %s2924 = scalar_lea.vmem %s14, %s2923
        // Predicated region
        $region93: #{decoder_layer_forward.1} parent=71 // pred_check
          %p2925 = pneg %p335
        $region94: #{decoder_layer_forward.1} parent=71 // pred_check_branch
          %2927 = sbr.rel (%p2925) target = $region96
        $region95: #{decoder_layer_forward.1} parent=71 // pred_region
          %s2929 = ssub.s32 256, 256
          %2930 = vsyncadd %s2916, %s2929
          %s2931 = smul.addr %s34, 2
          %s2932 = smul.addr %s2931, 128
          %s2933 = scalar_lea.hbm %s13, %s2932
          %s2934 = sshll.u32 %s2919, 4
          %s2935 = int_to_ptr.vmem [resolvable:$true] %s2934
          %2940 = dma.vmem_to_hbm [thread:$0]  %s2935, 256, %s2933, %s2916, 128, 128, 8
        $region96: #{decoder_layer_forward.1} parent=71 // pred_fallthru
          _
        // Predicated region
        $region97: #{decoder_layer_forward.1} parent=71 // pred_check
          %p2941 = pneg %p361
        $region98: #{decoder_layer_forward.1} parent=71 // pred_check_branch
          %2943 = sbr.rel (%p2941) target = $region100
        $region99: #{decoder_layer_forward.1} parent=71 // pred_region
          _
        $region100: #{decoder_layer_forward.1} parent=71 // pred_fallthru
          _
      $region72: #{decoder_layer_forward.1} parent=5 // pred_fallthru
        _
      %p2944 = scmp.le.s32.totalorder 2, %s29
      // Predicated region
      $region101: #{decoder_layer_forward.1} parent=5 // pred_check
        %p2945 = pneg %p2944
      $region102: #{decoder_layer_forward.1} parent=5 // pred_check_branch
        %2947 = sbr.rel (%p2945) target = $region104
      $region103: #{decoder_layer_forward.1} parent=5 // pred_region
        %s2948 = ssub.s32 %s29, 2
        // Predicated region
        $region105: #{decoder_layer_forward.1} parent=103 // pred_check
          %p2949 = pneg %p341
        $region106: #{decoder_layer_forward.1} parent=103 // pred_check_branch
          %2951 = sbr.rel (%p2949) target = $region108
        $region107: #{decoder_layer_forward.1} parent=103 // pred_region
          %s2952 = sand.u32 %s326, 1
          %s2953 = scalar_lea.sflag [#allocation4], %s2952
          %s2954 = sand.u32 %s326, 1
          %s2955 = smul.addr %s2954, 16
          %s2956 = scalar_lea.vmem [#allocation11], %s2955
          %2957 = dma.done %s2953, 256
        $region108: #{decoder_layer_forward.1} parent=103 // pred_fallthru
          _
        // Predicated region
        $region109: #{decoder_layer_forward.1} parent=103 // pred_check
          %p2958 = pneg %p367
        $region110: #{decoder_layer_forward.1} parent=103 // pred_check_branch
          %2960 = sbr.rel (%p2958) target = $region112
        $region111: #{decoder_layer_forward.1} parent=103 // pred_region
          %p2961 = scmp.lt.s32.totalorder %s35, 1
          %s2962 = scalar_select %p2961, %s35, 1
          %s2963 = smul.addr %s2962, 2
          %s2964 = smul.addr %s2963, 8
          %s2965 = scalar_lea.vmem %s14, %s2964
        $region112: #{decoder_layer_forward.1} parent=103 // pred_fallthru
          _
      $region104: #{decoder_layer_forward.1} parent=5 // pred_fallthru
        _
    $region6: #{decoder_layer_forward.1} parent=1 // loop_footer
      %s33 = sadd.s32 1, %s29
    $region7: #{decoder_layer_forward.1} parent=1 // loop_footer_branch
      %28 = sbr.rel target = $region3
    $region8: #{decoder_layer_forward.1} parent=1 // loop_exit
      _
    %2966 = vsyncpa [#allocation3], 1
    %s2967 = scalar_lea.sflag [#allocation3], 1
    %2968 = vsyncpa %s2967, 1
    %2969 = vsyncpa [#allocation6], 1
    %2970 = vsyncpa [#allocation9], 1
    %2971 = vsyncpa [#allocation4], 1
    %s2972 = scalar_lea.sflag [#allocation4], 1
    %2973 = vsyncpa %s2972, 1

</llo_original>
